<compile_context>
chip_gen: v5e
topology: v5e:2x2
jax: 0.10.0
libtpu: 0.0.40
codegen_flags: <defaults>
</compile_context>

<pallas_src>
import math

import jax
import jax.numpy as jnp
from jax import lax
from jax.experimental import pallas as pl
from jax.experimental.pallas import tpu as pltpu

D_STATE = 2
EXPAND = 1
D_CONV = 4

_MAMBA_KEYS = ("in_x_w", "in_z_w", "conv_w", "conv_b",
               "xp_dt_w", "xp_B_w", "xp_C_w",
               "dt_w", "dt_b", "A_neg", "D", "out_w")


# ----------------------------------------------------------------------------
# in-kernel helpers (channel-major: every activation slab is (channels, L))
# ----------------------------------------------------------------------------
def _silu(x):
    # x * sigmoid(x) = x / (1 + exp(-x));  exp + divide live on the EUP slot
    return x / (1.0 + jnp.exp(-x))


def _softplus(x):
    return jnp.where(x > 20.0, x, jnp.log1p(jnp.exp(jnp.minimum(x, 20.0))))


def _mamba(x, refs):
    """Mamba block on one batch element, channel-major. x: (d_model, L) -> (out_c, L)."""
    (in_x_w, in_z_w, conv_w, conv_b, xp_dt_w, xp_B_w, xp_C_w,
     dt_w, dt_b, a_neg, d_skip, out_w) = [r[...] for r in refs]

    L = x.shape[1]
    d_inner = in_x_w.shape[0]
    n = xp_B_w.shape[0]
    dconv = conv_w.shape[1]

    lane = lax.broadcasted_iota(jnp.int32, (d_inner, L), 1)   # hoisted, reused below

    # ---- in_proj (no bias); weight pre-split so xin / res need no row slicing ----
    xin = jnp.dot(in_x_w, x, preferred_element_type=jnp.float32)   # (d_inner, L)
    res = jnp.dot(in_z_w, x, preferred_element_type=jnp.float32)   # (d_inner, L)

    # ---- depthwise causal conv1d + SiLU: lane-axis roll + mask per tap ----------
    acc = conv_b + conv_w[:, dconv - 1:dconv] * xin                # tap k = K-1 (shift 0)
    for k in range(dconv - 1):                                     # taps k = 0 .. K-2
        s = dconv - 1 - k
        shifted = pltpu.roll(xin, shift=s, axis=1)                 # xin[:, t-s] at lane t
        shifted = jnp.where(lane >= s, shifted, 0.0)               # causal zero-fill
        acc = acc + conv_w[:, k:k + 1] * shifted
    u = _silu(acc)                                                 # (d_inner, L)

    # ---- x_proj / dt_proj (weights pre-split into dt / B / C parts) --------------
    dt = jnp.dot(xp_dt_w, u, preferred_element_type=jnp.float32)   # (r, L)
    Bm = jnp.dot(xp_B_w, u, preferred_element_type=jnp.float32)    # (n, L)
    Cm = jnp.dot(xp_C_w, u, preferred_element_type=jnp.float32)    # (n, L)
    delta = _softplus(jnp.dot(dt_w, dt, preferred_element_type=jnp.float32) + dt_b)

    # ---- selective scan: log-depth associative scan over the lane (L) axis -------
    # recurrence h_t = a_t * h_{t-1} + b_t ; combine (a,b)o(c,d) = (a*c, a*d + b)
    du = delta * u
    y = d_skip * u
    npass = max(1, (L - 1).bit_length())                           # ceil(log2(L))
    for j in range(n):
        a = jnp.exp(delta * a_neg[:, j:j + 1])                     # (d_inner, L)
        b = du * Bm[j:j + 1, :]                                    # (d_inner, L)
        for p in range(npass):
            s = 1 << p
            keep = lane >= s
            a_sh = jnp.where(keep, pltpu.roll(a, shift=s, axis=1), 1.0)
            b_sh = jnp.where(keep, pltpu.roll(b, shift=s, axis=1), 0.0)
            b = a * b_sh + b                                       # uses old `a`
            a = a * a_sh
        y = y + Cm[j:j + 1, :] * b                                 # b == inclusive scan h

    # ---- SiLU gate + out_proj (no bias) ------------------------------------------
    y = y * _silu(res)
    return jnp.dot(out_w, y, preferred_element_type=jnp.float32)   # (out_c, L)


# ----------------------------------------------------------------------------
# single fused kernel: one grid step = one batch element, everything in vregs
# ----------------------------------------------------------------------------
def _branch12_kernel(x_ref, lin1_w_ref, lin1_b_ref, *rest):
    m1_refs = rest[0:12]
    lin2_w_ref, lin2_b_ref = rest[12:14]
    m2_refs = rest[14:26]
    out_ref = rest[26]

    x = x_ref[...]                                                 # (c_in, L)

    # branch 1: plain token Linear
    x1 = jnp.dot(lin1_w_ref[...], x, preferred_element_type=jnp.float32) + lin1_b_ref[...]

    # branch 2: Mamba -> Linear -> Mamba (x1, mid stay in VMEM/vregs)
    h1 = _mamba(x, m1_refs)                                        # (out_c, L)
    mid = jnp.dot(lin2_w_ref[...], h1, preferred_element_type=jnp.float32) + lin2_b_ref[...]
    h2 = _mamba(mid, m2_refs)                                      # (out_c, L)

    out_ref[...] = x1 + h2


# ----------------------------------------------------------------------------
# pallas_call wrapper
# ----------------------------------------------------------------------------
def _w_spec(a):
    zeros = (0,) * a.ndim
    return pl.BlockSpec(a.shape, lambda b, _z=zeros: _z)


def branch12_call(params, xc):
    """xc: (B, c_in, L) channel-major tokens -> (B, out_c, L)."""
    B, c_in, L = xc.shape
    out_c = params["lin1_w"].shape[0]
    pm1, pm2 = params["mamba1"], params["mamba2"]

    in_specs = ([pl.BlockSpec((None, c_in, L), lambda b: (b, 0, 0)),
                 _w_spec(params["lin1_w"]), _w_spec(params["lin1_b"])]
                + [_w_spec(pm1[k]) for k in _MAMBA_KEYS]
                + [_w_spec(params["lin2_w"]), _w_spec(params["lin2_b"])]
                + [_w_spec(pm2[k]) for k in _MAMBA_KEYS])

    return pl.pallas_call(
        _branch12_kernel,
        grid=(B,),
        out_shape=jax.ShapeDtypeStruct((B, out_c, L), jnp.float32),
        in_specs=in_specs,
        out_specs=pl.BlockSpec((None, out_c, L), lambda b: (b, 0, 0)),
        compiler_params=pltpu.CompilerParams(dimension_semantics=("parallel",)),
    )(xc, params["lin1_w"], params["lin1_b"],
      *[pm1[k] for k in _MAMBA_KEYS],
      params["lin2_w"], params["lin2_b"],
      *[pm2[k] for k in _MAMBA_KEYS])


# ----------------------------------------------------------------------------
# parameters (deterministic, synthetic) + forward
# ----------------------------------------------------------------------------
def _randn(key, shape, scale):
    return scale * jax.random.normal(key, shape, jnp.float32)


def init_linear(key, fan_in, fan_out):
    kw, kb = jax.random.split(key)
    w = _randn(kw, (fan_out, fan_in), 1.0 / math.sqrt(fan_in))     # (out, in) channel-major
    b = _randn(kb, (fan_out, 1), 0.01)
    return w, b


def init_mamba(key, d_model, out_c, d_state=D_STATE, expand=EXPAND, d_conv=D_CONV):
    d_inner = expand * d_model
    dt_rank = max(1, math.ceil(d_model / 16))
    ks = jax.random.split(key, 10)
    # A = repeat(arange(1..n), 'n -> d n'); stored as A_neg = -A, shape (d_inner, n)
    a_neg = -jnp.tile(jnp.arange(1, d_state + 1, dtype=jnp.float32)[None, :], (d_inner, 1))
    return {
        "in_x_w": _randn(ks[0], (d_inner, d_model), 1.0 / math.sqrt(d_model)),
        "in_z_w": _randn(ks[1], (d_inner, d_model), 1.0 / math.sqrt(d_model)),
        "conv_w": _randn(ks[2], (d_inner, d_conv), 1.0 / math.sqrt(d_conv)),
        "conv_b": _randn(ks[3], (d_inner, 1), 0.01),
        "xp_dt_w": _randn(ks[4], (dt_rank, d_inner), 1.0 / math.sqrt(d_inner)),
        "xp_B_w": _randn(ks[5], (d_state, d_inner), 1.0 / math.sqrt(d_inner)),
        "xp_C_w": _randn(ks[6], (d_state, d_inner), 1.0 / math.sqrt(d_inner)),
        "dt_w": _randn(ks[7], (d_inner, dt_rank), 1.0 / math.sqrt(dt_rank)),
        "dt_b": _randn(ks[8], (d_inner, 1), 0.01),
        "A_neg": a_neg,
        "D": jnp.ones((d_inner, 1), jnp.float32),
        "out_w": _randn(ks[9], (out_c, d_inner), 1.0 / math.sqrt(d_inner)),
    }


def init_branch12(key, in_channels, out_channels):
    k1, k2, k3, k4 = jax.random.split(key, 4)
    lin1_w, lin1_b = init_linear(k1, in_channels, out_channels)
    lin2_w, lin2_b = init_linear(k3, out_channels, out_channels)
    return {
        "lin1_w": lin1_w, "lin1_b": lin1_b,                        # Branch12_Last.linear
        "mamba1": init_mamba(k2, in_channels, out_channels),       # br2[0]
        "lin2_w": lin2_w, "lin2_b": lin2_b,                        # br2[1]
        "mamba2": init_mamba(k4, out_channels, out_channels),      # br2[2]
    }


@jax.jit
def branch12_forward(params, x):
    b, c, h, w = x.shape
    xc = x.reshape(b, c, h * w)              # NCHW is already channel-major: no transpose
    out = branch12_call(params, xc)          # (b, out_c, h*w), single fused pallas_call
    return out.reshape(b, -1, h, w)          # back to NCHW: plain reshape


# ----------------------------------------------------------------------------
if __name__ == "__main__":
    in_channels, out_channels = 4, 4
    b, h, w = 2, 16, 16                      # L = h*w = 256 tokens per image

    key = jax.random.PRNGKey(0)
    kp, kx = jax.random.split(key)
    params = init_branch12(kp, in_channels, out_channels)
    x = jax.random.normal(kx, (b, in_channels, h, w), jnp.float32)

    out = branch12_forward(params, x)
    out = jax.block_until_ready(out)
    assert out.shape == (b, out_channels, h, w), out.shape
    assert bool(jnp.all(jnp.isfinite(out)))
    print("KERNEL_OK")
</pallas_src>

<mosaic_0001>
module attributes {stable_mosaic.version = 11 : i64} {
  func.func @_branch12_kernel(%arg0: i32, %arg1: memref<1x4x256xf32, #tpu.memory_space<vmem>>, %arg2: memref<4x4xf32, #tpu.memory_space<vmem>>, %arg3: memref<4x1xf32, #tpu.memory_space<vmem>>, %arg4: memref<4x4xf32, #tpu.memory_space<vmem>>, %arg5: memref<4x4xf32, #tpu.memory_space<vmem>>, %arg6: memref<4x4xf32, #tpu.memory_space<vmem>>, %arg7: memref<4x1xf32, #tpu.memory_space<vmem>>, %arg8: memref<1x4xf32, #tpu.memory_space<vmem>>, %arg9: memref<2x4xf32, #tpu.memory_space<vmem>>, %arg10: memref<2x4xf32, #tpu.memory_space<vmem>>, %arg11: memref<4x1xf32, #tpu.memory_space<vmem>>, %arg12: memref<4x1xf32, #tpu.memory_space<vmem>>, %arg13: memref<4x2xf32, #tpu.memory_space<vmem>>, %arg14: memref<4x1xf32, #tpu.memory_space<vmem>>, %arg15: memref<4x4xf32, #tpu.memory_space<vmem>>, %arg16: memref<4x4xf32, #tpu.memory_space<vmem>>, %arg17: memref<4x1xf32, #tpu.memory_space<vmem>>, %arg18: memref<4x4xf32, #tpu.memory_space<vmem>>, %arg19: memref<4x4xf32, #tpu.memory_space<vmem>>, %arg20: memref<4x4xf32, #tpu.memory_space<vmem>>, %arg21: memref<4x1xf32, #tpu.memory_space<vmem>>, %arg22: memref<1x4xf32, #tpu.memory_space<vmem>>, %arg23: memref<2x4xf32, #tpu.memory_space<vmem>>, %arg24: memref<2x4xf32, #tpu.memory_space<vmem>>, %arg25: memref<4x1xf32, #tpu.memory_space<vmem>>, %arg26: memref<4x1xf32, #tpu.memory_space<vmem>>, %arg27: memref<4x2xf32, #tpu.memory_space<vmem>>, %arg28: memref<4x1xf32, #tpu.memory_space<vmem>>, %arg29: memref<4x4xf32, #tpu.memory_space<vmem>>, %arg30: memref<1x4x256xf32, #tpu.memory_space<vmem>>) attributes {dimension_semantics = [#tpu.dimension_semantics<parallel>], iteration_bounds = array<i64: 2>, scalar_prefetch = 0 : i64, scratch_operands = 0 : i64, tpu.core_type = #tpu.core_type<tc>, window_params = [{transform_indices = @transform_0, window_bounds = array<i64: 1, 4, 256>}, {pipeline_mode = #tpu.pipeline_mode<synchronous>, transform_indices = @transform_1, window_bounds = array<i64: 4, 4>}, {pipeline_mode = #tpu.pipeline_mode<synchronous>, transform_indices = @transform_2, window_bounds = array<i64: 4, 1>}, {pipeline_mode = #tpu.pipeline_mode<synchronous>, transform_indices = @transform_3, window_bounds = array<i64: 4, 4>}, {pipeline_mode = #tpu.pipeline_mode<synchronous>, transform_indices = @transform_4, window_bounds = array<i64: 4, 4>}, {pipeline_mode = #tpu.pipeline_mode<synchronous>, transform_indices = @transform_5, window_bounds = array<i64: 4, 4>}, {pipeline_mode = #tpu.pipeline_mode<synchronous>, transform_indices = @transform_6, window_bounds = array<i64: 4, 1>}, {pipeline_mode = #tpu.pipeline_mode<synchronous>, transform_indices = @transform_7, window_bounds = array<i64: 1, 4>}, {pipeline_mode = #tpu.pipeline_mode<synchronous>, transform_indices = @transform_8, window_bounds = array<i64: 2, 4>}, {pipeline_mode = #tpu.pipeline_mode<synchronous>, transform_indices = @transform_9, window_bounds = array<i64: 2, 4>}, {pipeline_mode = #tpu.pipeline_mode<synchronous>, transform_indices = @transform_10, window_bounds = array<i64: 4, 1>}, {pipeline_mode = #tpu.pipeline_mode<synchronous>, transform_indices = @transform_11, window_bounds = array<i64: 4, 1>}, {pipeline_mode = #tpu.pipeline_mode<synchronous>, transform_indices = @transform_12, window_bounds = array<i64: 4, 2>}, {pipeline_mode = #tpu.pipeline_mode<synchronous>, transform_indices = @transform_13, window_bounds = array<i64: 4, 1>}, {pipeline_mode = #tpu.pipeline_mode<synchronous>, transform_indices = @transform_14, window_bounds = array<i64: 4, 4>}, {pipeline_mode = #tpu.pipeline_mode<synchronous>, transform_indices = @transform_15, window_bounds = array<i64: 4, 4>}, {pipeline_mode = #tpu.pipeline_mode<synchronous>, transform_indices = @transform_16, window_bounds = array<i64: 4, 1>}, {pipeline_mode = #tpu.pipeline_mode<synchronous>, transform_indices = @transform_17, window_bounds = array<i64: 4, 4>}, {pipeline_mode = #tpu.pipeline_mode<synchronous>, transform_indices = @transform_18, window_bounds = array<i64: 4, 4>}, {pipeline_mode = #tpu.pipeline_mode<synchronous>, transform_indices = @transform_19, window_bounds = array<i64: 4, 4>}, {pipeline_mode = #tpu.pipeline_mode<synchronous>, transform_indices = @transform_20, window_bounds = array<i64: 4, 1>}, {pipeline_mode = #tpu.pipeline_mode<synchronous>, transform_indices = @transform_21, window_bounds = array<i64: 1, 4>}, {pipeline_mode = #tpu.pipeline_mode<synchronous>, transform_indices = @transform_22, window_bounds = array<i64: 2, 4>}, {pipeline_mode = #tpu.pipeline_mode<synchronous>, transform_indices = @transform_23, window_bounds = array<i64: 2, 4>}, {pipeline_mode = #tpu.pipeline_mode<synchronous>, transform_indices = @transform_24, window_bounds = array<i64: 4, 1>}, {pipeline_mode = #tpu.pipeline_mode<synchronous>, transform_indices = @transform_25, window_bounds = array<i64: 4, 1>}, {pipeline_mode = #tpu.pipeline_mode<synchronous>, transform_indices = @transform_26, window_bounds = array<i64: 4, 2>}, {pipeline_mode = #tpu.pipeline_mode<synchronous>, transform_indices = @transform_27, window_bounds = array<i64: 4, 1>}, {pipeline_mode = #tpu.pipeline_mode<synchronous>, transform_indices = @transform_28, window_bounds = array<i64: 4, 4>}, {transform_indices = @transform_29, window_bounds = array<i64: 1, 4, 256>}]} {
    %c0 = arith.constant 0 : index
    %c0_0 = arith.constant 0 : index
    %c0_1 = arith.constant 0 : index
    %0 = vector.load %arg1[%c0, %c0_0, %c0_1] : memref<1x4x256xf32, #tpu.memory_space<vmem>>, vector<1x4x256xf32>
    %1 = vector.shape_cast %0 : vector<1x4x256xf32> to vector<4x256xf32>
    %c0_2 = arith.constant 0 : index
    %c0_3 = arith.constant 0 : index
    %2 = vector.load %arg2[%c0_2, %c0_3] : memref<4x4xf32, #tpu.memory_space<vmem>>, vector<4x4xf32>
    %cst = arith.constant dense<0.000000e+00> : vector<4x256xf32>
    %3 = tpu.matmul %2, %1, %cst {dimension_numbers = #tpu.dot_dimension_numbers<[1], [0], [0], [1], [0, 0, 1, 1], [], []>} : vector<4x4xf32>, vector<4x256xf32>, vector<4x256xf32> -> vector<4x256xf32>
    %c0_4 = arith.constant 0 : index
    %c0_5 = arith.constant 0 : index
    %4 = vector.load %arg3[%c0_4, %c0_5] : memref<4x1xf32, #tpu.memory_space<vmem>>, vector<4x1xf32>
    %5 = vector.broadcast %4 : vector<4x1xf32> to vector<4x256xf32>
    %6 = arith.addf %3, %5 : vector<4x256xf32>
    %c0_6 = arith.constant 0 : index
    %c0_7 = arith.constant 0 : index
    %7 = vector.load %arg4[%c0_6, %c0_7] : memref<4x4xf32, #tpu.memory_space<vmem>>, vector<4x4xf32>
    %c0_8 = arith.constant 0 : index
    %c0_9 = arith.constant 0 : index
    %8 = vector.load %arg5[%c0_8, %c0_9] : memref<4x4xf32, #tpu.memory_space<vmem>>, vector<4x4xf32>
    %c0_10 = arith.constant 0 : index
    %c0_11 = arith.constant 0 : index
    %9 = vector.load %arg6[%c0_10, %c0_11] : memref<4x4xf32, #tpu.memory_space<vmem>>, vector<4x4xf32>
    %c0_12 = arith.constant 0 : index
    %c0_13 = arith.constant 0 : index
    %10 = vector.load %arg7[%c0_12, %c0_13] : memref<4x1xf32, #tpu.memory_space<vmem>>, vector<4x1xf32>
    %c0_14 = arith.constant 0 : index
    %c0_15 = arith.constant 0 : index
    %11 = vector.load %arg8[%c0_14, %c0_15] : memref<1x4xf32, #tpu.memory_space<vmem>>, vector<1x4xf32>
    %c0_16 = arith.constant 0 : index
    %c0_17 = arith.constant 0 : index
    %12 = vector.load %arg9[%c0_16, %c0_17] : memref<2x4xf32, #tpu.memory_space<vmem>>, vector<2x4xf32>
    %c0_18 = arith.constant 0 : index
    %c0_19 = arith.constant 0 : index
    %13 = vector.load %arg10[%c0_18, %c0_19] : memref<2x4xf32, #tpu.memory_space<vmem>>, vector<2x4xf32>
    %c0_20 = arith.constant 0 : index
    %c0_21 = arith.constant 0 : index
    %14 = vector.load %arg11[%c0_20, %c0_21] : memref<4x1xf32, #tpu.memory_space<vmem>>, vector<4x1xf32>
    %c0_22 = arith.constant 0 : index
    %c0_23 = arith.constant 0 : index
    %15 = vector.load %arg12[%c0_22, %c0_23] : memref<4x1xf32, #tpu.memory_space<vmem>>, vector<4x1xf32>
    %c0_24 = arith.constant 0 : index
    %c0_25 = arith.constant 0 : index
    %16 = vector.load %arg13[%c0_24, %c0_25] : memref<4x2xf32, #tpu.memory_space<vmem>>, vector<4x2xf32>
    %c0_26 = arith.constant 0 : index
    %c0_27 = arith.constant 0 : index
    %17 = vector.load %arg14[%c0_26, %c0_27] : memref<4x1xf32, #tpu.memory_space<vmem>>, vector<4x1xf32>
    %c0_28 = arith.constant 0 : index
    %c0_29 = arith.constant 0 : index
    %18 = vector.load %arg15[%c0_28, %c0_29] : memref<4x4xf32, #tpu.memory_space<vmem>>, vector<4x4xf32>
    %19 = tpu.iota {dimensions = array<i32: 1>} : vector<4x256xi32>
    %cst_30 = arith.constant dense<0.000000e+00> : vector<4x256xf32>
    %20 = tpu.matmul %7, %1, %cst_30 {dimension_numbers = #tpu.dot_dimension_numbers<[1], [0], [0], [1], [0, 0, 1, 1], [], []>} : vector<4x4xf32>, vector<4x256xf32>, vector<4x256xf32> -> vector<4x256xf32>
    %cst_31 = arith.constant dense<0.000000e+00> : vector<4x256xf32>
    %21 = tpu.matmul %8, %1, %cst_31 {dimension_numbers = #tpu.dot_dimension_numbers<[1], [0], [0], [1], [0, 0, 1, 1], [], []>} : vector<4x4xf32>, vector<4x256xf32>, vector<4x256xf32> -> vector<4x256xf32>
    %22 = vector.extract_strided_slice %9 {offsets = [0, 3], sizes = [4, 1], strides = [1, 1]} : vector<4x4xf32> to vector<4x1xf32>
    %23 = vector.broadcast %22 : vector<4x1xf32> to vector<4x256xf32>
    %24 = arith.mulf %23, %20 : vector<4x256xf32>
    %25 = vector.broadcast %10 : vector<4x1xf32> to vector<4x256xf32>
    %26 = arith.addf %25, %24 : vector<4x256xf32>
    %c3_i32 = arith.constant 3 : i32
    %27 = tpu.dynamic_rotate %20 by %c3_i32 dim 1 : vector<4x256xf32>, i32 -> vector<4x256xf32>
    %c3_i32_32 = arith.constant 3 : i32
    %28 = vector.broadcast %c3_i32_32 : i32 to vector<4x256xi32>
    %29 = arith.cmpi sge, %19, %28 : vector<4x256xi32>
    %cst_33 = arith.constant 0.000000e+00 : f32
    %30 = vector.broadcast %cst_33 : f32 to vector<4x256xf32>
    %31 = arith.select %29, %27, %30 : vector<4x256xi1>, vector<4x256xf32>
    %32 = vector.extract_strided_slice %9 {offsets = [0, 0], sizes = [4, 1], strides = [1, 1]} : vector<4x4xf32> to vector<4x1xf32>
    %33 = vector.broadcast %32 : vector<4x1xf32> to vector<4x256xf32>
    %34 = arith.mulf %33, %31 : vector<4x256xf32>
    %35 = arith.addf %26, %34 : vector<4x256xf32>
    %c2_i32 = arith.constant 2 : i32
    %36 = tpu.dynamic_rotate %20 by %c2_i32 dim 1 : vector<4x256xf32>, i32 -> vector<4x256xf32>
    %c2_i32_34 = arith.constant 2 : i32
    %37 = vector.broadcast %c2_i32_34 : i32 to vector<4x256xi32>
    %38 = arith.cmpi sge, %19, %37 : vector<4x256xi32>
    %cst_35 = arith.constant 0.000000e+00 : f32
    %39 = vector.broadcast %cst_35 : f32 to vector<4x256xf32>
    %40 = arith.select %38, %36, %39 : vector<4x256xi1>, vector<4x256xf32>
    %41 = vector.extract_strided_slice %9 {offsets = [0, 1], sizes = [4, 1], strides = [1, 1]} : vector<4x4xf32> to vector<4x1xf32>
    %42 = vector.broadcast %41 : vector<4x1xf32> to vector<4x256xf32>
    %43 = arith.mulf %42, %40 : vector<4x256xf32>
    %44 = arith.addf %35, %43 : vector<4x256xf32>
    %c1_i32 = arith.constant 1 : i32
    %45 = tpu.dynamic_rotate %20 by %c1_i32 dim 1 : vector<4x256xf32>, i32 -> vector<4x256xf32>
    %c1_i32_36 = arith.constant 1 : i32
    %46 = vector.broadcast %c1_i32_36 : i32 to vector<4x256xi32>
    %47 = arith.cmpi sge, %19, %46 : vector<4x256xi32>
    %cst_37 = arith.constant 0.000000e+00 : f32
    %48 = vector.broadcast %cst_37 : f32 to vector<4x256xf32>
    %49 = arith.select %47, %45, %48 : vector<4x256xi1>, vector<4x256xf32>
    %50 = vector.extract_strided_slice %9 {offsets = [0, 2], sizes = [4, 1], strides = [1, 1]} : vector<4x4xf32> to vector<4x1xf32>
    %51 = vector.broadcast %50 : vector<4x1xf32> to vector<4x256xf32>
    %52 = arith.mulf %51, %49 : vector<4x256xf32>
    %53 = arith.addf %44, %52 : vector<4x256xf32>
    %cst_38 = arith.constant 0.000000e+00 : f32
    %54 = vector.broadcast %cst_38 : f32 to vector<4x256xf32>
    %55 = arith.subf %54, %53 : vector<4x256xf32>
    %56 = math.exp %55 : vector<4x256xf32>
    %cst_39 = arith.constant 1.000000e+00 : f32
    %57 = vector.broadcast %cst_39 : f32 to vector<4x256xf32>
    %58 = arith.addf %57, %56 : vector<4x256xf32>
    %59 = arith.divf %53, %58 : vector<4x256xf32>
    %cst_40 = arith.constant dense<0.000000e+00> : vector<1x256xf32>
    %60 = tpu.matmul %11, %59, %cst_40 {dimension_numbers = #tpu.dot_dimension_numbers<[1], [0], [0], [1], [0, 0, 1, 1], [], []>} : vector<1x4xf32>, vector<4x256xf32>, vector<1x256xf32> -> vector<1x256xf32>
    %cst_41 = arith.constant dense<0.000000e+00> : vector<2x256xf32>
    %61 = tpu.matmul %12, %59, %cst_41 {dimension_numbers = #tpu.dot_dimension_numbers<[1], [0], [0], [1], [0, 0, 1, 1], [], []>} : vector<2x4xf32>, vector<4x256xf32>, vector<2x256xf32> -> vector<2x256xf32>
    %cst_42 = arith.constant dense<0.000000e+00> : vector<2x256xf32>
    %62 = tpu.matmul %13, %59, %cst_42 {dimension_numbers = #tpu.dot_dimension_numbers<[1], [0], [0], [1], [0, 0, 1, 1], [], []>} : vector<2x4xf32>, vector<4x256xf32>, vector<2x256xf32> -> vector<2x256xf32>
    %cst_43 = arith.constant dense<0.000000e+00> : vector<4x256xf32>
    %63 = tpu.matmul %14, %60, %cst_43 {dimension_numbers = #tpu.dot_dimension_numbers<[1], [0], [0], [1], [0, 0, 1, 1], [], []>} : vector<4x1xf32>, vector<1x256xf32>, vector<4x256xf32> -> vector<4x256xf32>
    %64 = vector.broadcast %15 : vector<4x1xf32> to vector<4x256xf32>
    %65 = arith.addf %63, %64 : vector<4x256xf32>
    %cst_44 = arith.constant 2.000000e+01 : f32
    %66 = vector.broadcast %cst_44 : f32 to vector<4x256xf32>
    %67 = arith.cmpf ogt, %65, %66 : vector<4x256xf32>
    %cst_45 = arith.constant 2.000000e+01 : f32
    %68 = vector.broadcast %cst_45 : f32 to vector<4x256xf32>
    %69 = arith.minimumf %65, %68 : vector<4x256xf32>
    %70 = math.exp %69 : vector<4x256xf32>
    %71 = math.log1p %70 : vector<4x256xf32>
    %72 = arith.select %67, %65, %71 : vector<4x256xi1>, vector<4x256xf32>
    %73 = arith.mulf %72, %59 : vector<4x256xf32>
    %74 = vector.broadcast %17 : vector<4x1xf32> to vector<4x256xf32>
    %75 = arith.mulf %74, %59 : vector<4x256xf32>
    %76 = vector.extract_strided_slice %16 {offsets = [0, 0], sizes = [4, 1], strides = [1, 1]} : vector<4x2xf32> to vector<4x1xf32>
    %77 = vector.broadcast %76 : vector<4x1xf32> to vector<4x256xf32>
    %78 = arith.mulf %72, %77 : vector<4x256xf32>
    %79 = math.exp %78 : vector<4x256xf32>
    %80 = vector.extract_strided_slice %61 {offsets = [0, 0], sizes = [1, 256], strides = [1, 1]} : vector<2x256xf32> to vector<1x256xf32>
    %81 = vector.broadcast %80 : vector<1x256xf32> to vector<4x256xf32>
    %82 = arith.mulf %73, %81 : vector<4x256xf32>
    %c1_i32_46 = arith.constant 1 : i32
    %83 = vector.broadcast %c1_i32_46 : i32 to vector<4x256xi32>
    %84 = arith.cmpi sge, %19, %83 : vector<4x256xi32>
    %c1_i32_47 = arith.constant 1 : i32
    %85 = tpu.dynamic_rotate %79 by %c1_i32_47 dim 1 : vector<4x256xf32>, i32 -> vector<4x256xf32>
    %cst_48 = arith.constant 1.000000e+00 : f32
    %86 = vector.broadcast %cst_48 : f32 to vector<4x256xf32>
    %87 = arith.select %84, %85, %86 : vector<4x256xi1>, vector<4x256xf32>
    %c1_i32_49 = arith.constant 1 : i32
    %88 = tpu.dynamic_rotate %82 by %c1_i32_49 dim 1 : vector<4x256xf32>, i32 -> vector<4x256xf32>
    %cst_50 = arith.constant 0.000000e+00 : f32
    %89 = vector.broadcast %cst_50 : f32 to vector<4x256xf32>
    %90 = arith.select %84, %88, %89 : vector<4x256xi1>, vector<4x256xf32>
    %91 = arith.mulf %79, %90 : vector<4x256xf32>
    %92 = arith.addf %91, %82 : vector<4x256xf32>
    %93 = arith.mulf %79, %87 : vector<4x256xf32>
    %c2_i32_51 = arith.constant 2 : i32
    %94 = vector.broadcast %c2_i32_51 : i32 to vector<4x256xi32>
    %95 = arith.cmpi sge, %19, %94 : vector<4x256xi32>
    %c2_i32_52 = arith.constant 2 : i32
    %96 = tpu.dynamic_rotate %93 by %c2_i32_52 dim 1 : vector<4x256xf32>, i32 -> vector<4x256xf32>
    %cst_53 = arith.constant 1.000000e+00 : f32
    %97 = vector.broadcast %cst_53 : f32 to vector<4x256xf32>
    %98 = arith.select %95, %96, %97 : vector<4x256xi1>, vector<4x256xf32>
    %c2_i32_54 = arith.constant 2 : i32
    %99 = tpu.dynamic_rotate %92 by %c2_i32_54 dim 1 : vector<4x256xf32>, i32 -> vector<4x256xf32>
    %cst_55 = arith.constant 0.000000e+00 : f32
    %100 = vector.broadcast %cst_55 : f32 to vector<4x256xf32>
    %101 = arith.select %95, %99, %100 : vector<4x256xi1>, vector<4x256xf32>
    %102 = arith.mulf %93, %101 : vector<4x256xf32>
    %103 = arith.addf %102, %92 : vector<4x256xf32>
    %104 = arith.mulf %93, %98 : vector<4x256xf32>
    %c4_i32 = arith.constant 4 : i32
    %105 = vector.broadcast %c4_i32 : i32 to vector<4x256xi32>
    %106 = arith.cmpi sge, %19, %105 : vector<4x256xi32>
    %c4_i32_56 = arith.constant 4 : i32
    %107 = tpu.dynamic_rotate %104 by %c4_i32_56 dim 1 : vector<4x256xf32>, i32 -> vector<4x256xf32>
    %cst_57 = arith.constant 1.000000e+00 : f32
    %108 = vector.broadcast %cst_57 : f32 to vector<4x256xf32>
    %109 = arith.select %106, %107, %108 : vector<4x256xi1>, vector<4x256xf32>
    %c4_i32_58 = arith.constant 4 : i32
    %110 = tpu.dynamic_rotate %103 by %c4_i32_58 dim 1 : vector<4x256xf32>, i32 -> vector<4x256xf32>
    %cst_59 = arith.constant 0.000000e+00 : f32
    %111 = vector.broadcast %cst_59 : f32 to vector<4x256xf32>
    %112 = arith.select %106, %110, %111 : vector<4x256xi1>, vector<4x256xf32>
    %113 = arith.mulf %104, %112 : vector<4x256xf32>
    %114 = arith.addf %113, %103 : vector<4x256xf32>
    %115 = arith.mulf %104, %109 : vector<4x256xf32>
    %c8_i32 = arith.constant 8 : i32
    %116 = vector.broadcast %c8_i32 : i32 to vector<4x256xi32>
    %117 = arith.cmpi sge, %19, %116 : vector<4x256xi32>
    %c8_i32_60 = arith.constant 8 : i32
    %118 = tpu.dynamic_rotate %115 by %c8_i32_60 dim 1 : vector<4x256xf32>, i32 -> vector<4x256xf32>
    %cst_61 = arith.constant 1.000000e+00 : f32
    %119 = vector.broadcast %cst_61 : f32 to vector<4x256xf32>
    %120 = arith.select %117, %118, %119 : vector<4x256xi1>, vector<4x256xf32>
    %c8_i32_62 = arith.constant 8 : i32
    %121 = tpu.dynamic_rotate %114 by %c8_i32_62 dim 1 : vector<4x256xf32>, i32 -> vector<4x256xf32>
    %cst_63 = arith.constant 0.000000e+00 : f32
    %122 = vector.broadcast %cst_63 : f32 to vector<4x256xf32>
    %123 = arith.select %117, %121, %122 : vector<4x256xi1>, vector<4x256xf32>
    %124 = arith.mulf %115, %123 : vector<4x256xf32>
    %125 = arith.addf %124, %114 : vector<4x256xf32>
    %126 = arith.mulf %115, %120 : vector<4x256xf32>
    %c16_i32 = arith.constant 16 : i32
    %127 = vector.broadcast %c16_i32 : i32 to vector<4x256xi32>
    %128 = arith.cmpi sge, %19, %127 : vector<4x256xi32>
    %c16_i32_64 = arith.constant 16 : i32
    %129 = tpu.dynamic_rotate %126 by %c16_i32_64 dim 1 : vector<4x256xf32>, i32 -> vector<4x256xf32>
    %cst_65 = arith.constant 1.000000e+00 : f32
    %130 = vector.broadcast %cst_65 : f32 to vector<4x256xf32>
    %131 = arith.select %128, %129, %130 : vector<4x256xi1>, vector<4x256xf32>
    %c16_i32_66 = arith.constant 16 : i32
    %132 = tpu.dynamic_rotate %125 by %c16_i32_66 dim 1 : vector<4x256xf32>, i32 -> vector<4x256xf32>
    %cst_67 = arith.constant 0.000000e+00 : f32
    %133 = vector.broadcast %cst_67 : f32 to vector<4x256xf32>
    %134 = arith.select %128, %132, %133 : vector<4x256xi1>, vector<4x256xf32>
    %135 = arith.mulf %126, %134 : vector<4x256xf32>
    %136 = arith.addf %135, %125 : vector<4x256xf32>
    %137 = arith.mulf %126, %131 : vector<4x256xf32>
    %c32_i32 = arith.constant 32 : i32
    %138 = vector.broadcast %c32_i32 : i32 to vector<4x256xi32>
    %139 = arith.cmpi sge, %19, %138 : vector<4x256xi32>
    %c32_i32_68 = arith.constant 32 : i32
    %140 = tpu.dynamic_rotate %137 by %c32_i32_68 dim 1 : vector<4x256xf32>, i32 -> vector<4x256xf32>
    %cst_69 = arith.constant 1.000000e+00 : f32
    %141 = vector.broadcast %cst_69 : f32 to vector<4x256xf32>
    %142 = arith.select %139, %140, %141 : vector<4x256xi1>, vector<4x256xf32>
    %c32_i32_70 = arith.constant 32 : i32
    %143 = tpu.dynamic_rotate %136 by %c32_i32_70 dim 1 : vector<4x256xf32>, i32 -> vector<4x256xf32>
    %cst_71 = arith.constant 0.000000e+00 : f32
    %144 = vector.broadcast %cst_71 : f32 to vector<4x256xf32>
    %145 = arith.select %139, %143, %144 : vector<4x256xi1>, vector<4x256xf32>
    %146 = arith.mulf %137, %145 : vector<4x256xf32>
    %147 = arith.addf %146, %136 : vector<4x256xf32>
    %148 = arith.mulf %137, %142 : vector<4x256xf32>
    %c64_i32 = arith.constant 64 : i32
    %149 = vector.broadcast %c64_i32 : i32 to vector<4x256xi32>
    %150 = arith.cmpi sge, %19, %149 : vector<4x256xi32>
    %c64_i32_72 = arith.constant 64 : i32
    %151 = tpu.dynamic_rotate %148 by %c64_i32_72 dim 1 : vector<4x256xf32>, i32 -> vector<4x256xf32>
    %cst_73 = arith.constant 1.000000e+00 : f32
    %152 = vector.broadcast %cst_73 : f32 to vector<4x256xf32>
    %153 = arith.select %150, %151, %152 : vector<4x256xi1>, vector<4x256xf32>
    %c64_i32_74 = arith.constant 64 : i32
    %154 = tpu.dynamic_rotate %147 by %c64_i32_74 dim 1 : vector<4x256xf32>, i32 -> vector<4x256xf32>
    %cst_75 = arith.constant 0.000000e+00 : f32
    %155 = vector.broadcast %cst_75 : f32 to vector<4x256xf32>
    %156 = arith.select %150, %154, %155 : vector<4x256xi1>, vector<4x256xf32>
    %157 = arith.mulf %148, %156 : vector<4x256xf32>
    %158 = arith.addf %157, %147 : vector<4x256xf32>
    %159 = arith.mulf %148, %153 : vector<4x256xf32>
    %c128_i32 = arith.constant 128 : i32
    %160 = vector.broadcast %c128_i32 : i32 to vector<4x256xi32>
    %161 = arith.cmpi sge, %19, %160 : vector<4x256xi32>
    %c128_i32_76 = arith.constant 128 : i32
    %162 = tpu.dynamic_rotate %158 by %c128_i32_76 dim 1 : vector<4x256xf32>, i32 -> vector<4x256xf32>
    %cst_77 = arith.constant 0.000000e+00 : f32
    %163 = vector.broadcast %cst_77 : f32 to vector<4x256xf32>
    %164 = arith.select %161, %162, %163 : vector<4x256xi1>, vector<4x256xf32>
    %165 = arith.mulf %159, %164 : vector<4x256xf32>
    %166 = arith.addf %165, %158 : vector<4x256xf32>
    %167 = vector.extract_strided_slice %62 {offsets = [0, 0], sizes = [1, 256], strides = [1, 1]} : vector<2x256xf32> to vector<1x256xf32>
    %168 = vector.broadcast %167 : vector<1x256xf32> to vector<4x256xf32>
    %169 = arith.mulf %168, %166 : vector<4x256xf32>
    %170 = arith.addf %75, %169 : vector<4x256xf32>
    %171 = vector.extract_strided_slice %16 {offsets = [0, 1], sizes = [4, 1], strides = [1, 1]} : vector<4x2xf32> to vector<4x1xf32>
    %172 = vector.broadcast %171 : vector<4x1xf32> to vector<4x256xf32>
    %173 = arith.mulf %72, %172 : vector<4x256xf32>
    %174 = math.exp %173 : vector<4x256xf32>
    %175 = vector.extract_strided_slice %61 {offsets = [1, 0], sizes = [1, 256], strides = [1, 1]} : vector<2x256xf32> to vector<1x256xf32>
    %176 = vector.broadcast %175 : vector<1x256xf32> to vector<4x256xf32>
    %177 = arith.mulf %73, %176 : vector<4x256xf32>
    %c1_i32_78 = arith.constant 1 : i32
    %178 = vector.broadcast %c1_i32_78 : i32 to vector<4x256xi32>
    %179 = arith.cmpi sge, %19, %178 : vector<4x256xi32>
    %c1_i32_79 = arith.constant 1 : i32
    %180 = tpu.dynamic_rotate %174 by %c1_i32_79 dim 1 : vector<4x256xf32>, i32 -> vector<4x256xf32>
    %cst_80 = arith.constant 1.000000e+00 : f32
    %181 = vector.broadcast %cst_80 : f32 to vector<4x256xf32>
    %182 = arith.select %179, %180, %181 : vector<4x256xi1>, vector<4x256xf32>
    %c1_i32_81 = arith.constant 1 : i32
    %183 = tpu.dynamic_rotate %177 by %c1_i32_81 dim 1 : vector<4x256xf32>, i32 -> vector<4x256xf32>
    %cst_82 = arith.constant 0.000000e+00 : f32
    %184 = vector.broadcast %cst_82 : f32 to vector<4x256xf32>
    %185 = arith.select %179, %183, %184 : vector<4x256xi1>, vector<4x256xf32>
    %186 = arith.mulf %174, %185 : vector<4x256xf32>
    %187 = arith.addf %186, %177 : vector<4x256xf32>
    %188 = arith.mulf %174, %182 : vector<4x256xf32>
    %c2_i32_83 = arith.constant 2 : i32
    %189 = vector.broadcast %c2_i32_83 : i32 to vector<4x256xi32>
    %190 = arith.cmpi sge, %19, %189 : vector<4x256xi32>
    %c2_i32_84 = arith.constant 2 : i32
    %191 = tpu.dynamic_rotate %188 by %c2_i32_84 dim 1 : vector<4x256xf32>, i32 -> vector<4x256xf32>
    %cst_85 = arith.constant 1.000000e+00 : f32
    %192 = vector.broadcast %cst_85 : f32 to vector<4x256xf32>
    %193 = arith.select %190, %191, %192 : vector<4x256xi1>, vector<4x256xf32>
    %c2_i32_86 = arith.constant 2 : i32
    %194 = tpu.dynamic_rotate %187 by %c2_i32_86 dim 1 : vector<4x256xf32>, i32 -> vector<4x256xf32>
    %cst_87 = arith.constant 0.000000e+00 : f32
    %195 = vector.broadcast %cst_87 : f32 to vector<4x256xf32>
    %196 = arith.select %190, %194, %195 : vector<4x256xi1>, vector<4x256xf32>
    %197 = arith.mulf %188, %196 : vector<4x256xf32>
    %198 = arith.addf %197, %187 : vector<4x256xf32>
    %199 = arith.mulf %188, %193 : vector<4x256xf32>
    %c4_i32_88 = arith.constant 4 : i32
    %200 = vector.broadcast %c4_i32_88 : i32 to vector<4x256xi32>
    %201 = arith.cmpi sge, %19, %200 : vector<4x256xi32>
    %c4_i32_89 = arith.constant 4 : i32
    %202 = tpu.dynamic_rotate %199 by %c4_i32_89 dim 1 : vector<4x256xf32>, i32 -> vector<4x256xf32>
    %cst_90 = arith.constant 1.000000e+00 : f32
    %203 = vector.broadcast %cst_90 : f32 to vector<4x256xf32>
    %204 = arith.select %201, %202, %203 : vector<4x256xi1>, vector<4x256xf32>
    %c4_i32_91 = arith.constant 4 : i32
    %205 = tpu.dynamic_rotate %198 by %c4_i32_91 dim 1 : vector<4x256xf32>, i32 -> vector<4x256xf32>
    %cst_92 = arith.constant 0.000000e+00 : f32
    %206 = vector.broadcast %cst_92 : f32 to vector<4x256xf32>
    %207 = arith.select %201, %205, %206 : vector<4x256xi1>, vector<4x256xf32>
    %208 = arith.mulf %199, %207 : vector<4x256xf32>
    %209 = arith.addf %208, %198 : vector<4x256xf32>
    %210 = arith.mulf %199, %204 : vector<4x256xf32>
    %c8_i32_93 = arith.constant 8 : i32
    %211 = vector.broadcast %c8_i32_93 : i32 to vector<4x256xi32>
    %212 = arith.cmpi sge, %19, %211 : vector<4x256xi32>
    %c8_i32_94 = arith.constant 8 : i32
    %213 = tpu.dynamic_rotate %210 by %c8_i32_94 dim 1 : vector<4x256xf32>, i32 -> vector<4x256xf32>
    %cst_95 = arith.constant 1.000000e+00 : f32
    %214 = vector.broadcast %cst_95 : f32 to vector<4x256xf32>
    %215 = arith.select %212, %213, %214 : vector<4x256xi1>, vector<4x256xf32>
    %c8_i32_96 = arith.constant 8 : i32
    %216 = tpu.dynamic_rotate %209 by %c8_i32_96 dim 1 : vector<4x256xf32>, i32 -> vector<4x256xf32>
    %cst_97 = arith.constant 0.000000e+00 : f32
    %217 = vector.broadcast %cst_97 : f32 to vector<4x256xf32>
    %218 = arith.select %212, %216, %217 : vector<4x256xi1>, vector<4x256xf32>
    %219 = arith.mulf %210, %218 : vector<4x256xf32>
    %220 = arith.addf %219, %209 : vector<4x256xf32>
    %221 = arith.mulf %210, %215 : vector<4x256xf32>
    %c16_i32_98 = arith.constant 16 : i32
    %222 = vector.broadcast %c16_i32_98 : i32 to vector<4x256xi32>
    %223 = arith.cmpi sge, %19, %222 : vector<4x256xi32>
    %c16_i32_99 = arith.constant 16 : i32
    %224 = tpu.dynamic_rotate %221 by %c16_i32_99 dim 1 : vector<4x256xf32>, i32 -> vector<4x256xf32>
    %cst_100 = arith.constant 1.000000e+00 : f32
    %225 = vector.broadcast %cst_100 : f32 to vector<4x256xf32>
    %226 = arith.select %223, %224, %225 : vector<4x256xi1>, vector<4x256xf32>
    %c16_i32_101 = arith.constant 16 : i32
    %227 = tpu.dynamic_rotate %220 by %c16_i32_101 dim 1 : vector<4x256xf32>, i32 -> vector<4x256xf32>
    %cst_102 = arith.constant 0.000000e+00 : f32
    %228 = vector.broadcast %cst_102 : f32 to vector<4x256xf32>
    %229 = arith.select %223, %227, %228 : vector<4x256xi1>, vector<4x256xf32>
    %230 = arith.mulf %221, %229 : vector<4x256xf32>
    %231 = arith.addf %230, %220 : vector<4x256xf32>
    %232 = arith.mulf %221, %226 : vector<4x256xf32>
    %c32_i32_103 = arith.constant 32 : i32
    %233 = vector.broadcast %c32_i32_103 : i32 to vector<4x256xi32>
    %234 = arith.cmpi sge, %19, %233 : vector<4x256xi32>
    %c32_i32_104 = arith.constant 32 : i32
    %235 = tpu.dynamic_rotate %232 by %c32_i32_104 dim 1 : vector<4x256xf32>, i32 -> vector<4x256xf32>
    %cst_105 = arith.constant 1.000000e+00 : f32
    %236 = vector.broadcast %cst_105 : f32 to vector<4x256xf32>
    %237 = arith.select %234, %235, %236 : vector<4x256xi1>, vector<4x256xf32>
    %c32_i32_106 = arith.constant 32 : i32
    %238 = tpu.dynamic_rotate %231 by %c32_i32_106 dim 1 : vector<4x256xf32>, i32 -> vector<4x256xf32>
    %cst_107 = arith.constant 0.000000e+00 : f32
    %239 = vector.broadcast %cst_107 : f32 to vector<4x256xf32>
    %240 = arith.select %234, %238, %239 : vector<4x256xi1>, vector<4x256xf32>
    %241 = arith.mulf %232, %240 : vector<4x256xf32>
    %242 = arith.addf %241, %231 : vector<4x256xf32>
    %243 = arith.mulf %232, %237 : vector<4x256xf32>
    %c64_i32_108 = arith.constant 64 : i32
    %244 = vector.broadcast %c64_i32_108 : i32 to vector<4x256xi32>
    %245 = arith.cmpi sge, %19, %244 : vector<4x256xi32>
    %c64_i32_109 = arith.constant 64 : i32
    %246 = tpu.dynamic_rotate %243 by %c64_i32_109 dim 1 : vector<4x256xf32>, i32 -> vector<4x256xf32>
    %cst_110 = arith.constant 1.000000e+00 : f32
    %247 = vector.broadcast %cst_110 : f32 to vector<4x256xf32>
    %248 = arith.select %245, %246, %247 : vector<4x256xi1>, vector<4x256xf32>
    %c64_i32_111 = arith.constant 64 : i32
    %249 = tpu.dynamic_rotate %242 by %c64_i32_111 dim 1 : vector<4x256xf32>, i32 -> vector<4x256xf32>
    %cst_112 = arith.constant 0.000000e+00 : f32
    %250 = vector.broadcast %cst_112 : f32 to vector<4x256xf32>
    %251 = arith.select %245, %249, %250 : vector<4x256xi1>, vector<4x256xf32>
    %252 = arith.mulf %243, %251 : vector<4x256xf32>
    %253 = arith.addf %252, %242 : vector<4x256xf32>
    %254 = arith.mulf %243, %248 : vector<4x256xf32>
    %c128_i32_113 = arith.constant 128 : i32
    %255 = vector.broadcast %c128_i32_113 : i32 to vector<4x256xi32>
    %256 = arith.cmpi sge, %19, %255 : vector<4x256xi32>
    %c128_i32_114 = arith.constant 128 : i32
    %257 = tpu.dynamic_rotate %253 by %c128_i32_114 dim 1 : vector<4x256xf32>, i32 -> vector<4x256xf32>
    %cst_115 = arith.constant 0.000000e+00 : f32
    %258 = vector.broadcast %cst_115 : f32 to vector<4x256xf32>
    %259 = arith.select %256, %257, %258 : vector<4x256xi1>, vector<4x256xf32>
    %260 = arith.mulf %254, %259 : vector<4x256xf32>
    %261 = arith.addf %260, %253 : vector<4x256xf32>
    %262 = vector.extract_strided_slice %62 {offsets = [1, 0], sizes = [1, 256], strides = [1, 1]} : vector<2x256xf32> to vector<1x256xf32>
    %263 = vector.broadcast %262 : vector<1x256xf32> to vector<4x256xf32>
    %264 = arith.mulf %263, %261 : vector<4x256xf32>
    %265 = arith.addf %170, %264 : vector<4x256xf32>
    %cst_116 = arith.constant 0.000000e+00 : f32
    %266 = vector.broadcast %cst_116 : f32 to vector<4x256xf32>
    %267 = arith.subf %266, %21 : vector<4x256xf32>
    %268 = math.exp %267 : vector<4x256xf32>
    %cst_117 = arith.constant 1.000000e+00 : f32
    %269 = vector.broadcast %cst_117 : f32 to vector<4x256xf32>
    %270 = arith.addf %269, %268 : vector<4x256xf32>
    %271 = arith.divf %21, %270 : vector<4x256xf32>
    %272 = arith.mulf %265, %271 : vector<4x256xf32>
    %cst_118 = arith.constant dense<0.000000e+00> : vector<4x256xf32>
    %273 = tpu.matmul %18, %272, %cst_118 {dimension_numbers = #tpu.dot_dimension_numbers<[1], [0], [0], [1], [0, 0, 1, 1], [], []>} : vector<4x4xf32>, vector<4x256xf32>, vector<4x256xf32> -> vector<4x256xf32>
    %c0_119 = arith.constant 0 : index
    %c0_120 = arith.constant 0 : index
    %274 = vector.load %arg16[%c0_119, %c0_120] : memref<4x4xf32, #tpu.memory_space<vmem>>, vector<4x4xf32>
    %cst_121 = arith.constant dense<0.000000e+00> : vector<4x256xf32>
    %275 = tpu.matmul %274, %273, %cst_121 {dimension_numbers = #tpu.dot_dimension_numbers<[1], [0], [0], [1], [0, 0, 1, 1], [], []>} : vector<4x4xf32>, vector<4x256xf32>, vector<4x256xf32> -> vector<4x256xf32>
    %c0_122 = arith.constant 0 : index
    %c0_123 = arith.constant 0 : index
    %276 = vector.load %arg17[%c0_122, %c0_123] : memref<4x1xf32, #tpu.memory_space<vmem>>, vector<4x1xf32>
    %277 = vector.broadcast %276 : vector<4x1xf32> to vector<4x256xf32>
    %278 = arith.addf %275, %277 : vector<4x256xf32>
    %c0_124 = arith.constant 0 : index
    %c0_125 = arith.constant 0 : index
    %279 = vector.load %arg18[%c0_124, %c0_125] : memref<4x4xf32, #tpu.memory_space<vmem>>, vector<4x4xf32>
    %c0_126 = arith.constant 0 : index
    %c0_127 = arith.constant 0 : index
    %280 = vector.load %arg19[%c0_126, %c0_127] : memref<4x4xf32, #tpu.memory_space<vmem>>, vector<4x4xf32>
    %c0_128 = arith.constant 0 : index
    %c0_129 = arith.constant 0 : index
    %281 = vector.load %arg20[%c0_128, %c0_129] : memref<4x4xf32, #tpu.memory_space<vmem>>, vector<4x4xf32>
    %c0_130 = arith.constant 0 : index
    %c0_131 = arith.constant 0 : index
    %282 = vector.load %arg21[%c0_130, %c0_131] : memref<4x1xf32, #tpu.memory_space<vmem>>, vector<4x1xf32>
    %c0_132 = arith.constant 0 : index
    %c0_133 = arith.constant 0 : index
    %283 = vector.load %arg22[%c0_132, %c0_133] : memref<1x4xf32, #tpu.memory_space<vmem>>, vector<1x4xf32>
    %c0_134 = arith.constant 0 : index
    %c0_135 = arith.constant 0 : index
    %284 = vector.load %arg23[%c0_134, %c0_135] : memref<2x4xf32, #tpu.memory_space<vmem>>, vector<2x4xf32>
    %c0_136 = arith.constant 0 : index
    %c0_137 = arith.constant 0 : index
    %285 = vector.load %arg24[%c0_136, %c0_137] : memref<2x4xf32, #tpu.memory_space<vmem>>, vector<2x4xf32>
    %c0_138 = arith.constant 0 : index
    %c0_139 = arith.constant 0 : index
    %286 = vector.load %arg25[%c0_138, %c0_139] : memref<4x1xf32, #tpu.memory_space<vmem>>, vector<4x1xf32>
    %c0_140 = arith.constant 0 : index
    %c0_141 = arith.constant 0 : index
    %287 = vector.load %arg26[%c0_140, %c0_141] : memref<4x1xf32, #tpu.memory_space<vmem>>, vector<4x1xf32>
    %c0_142 = arith.constant 0 : index
    %c0_143 = arith.constant 0 : index
    %288 = vector.load %arg27[%c0_142, %c0_143] : memref<4x2xf32, #tpu.memory_space<vmem>>, vector<4x2xf32>
    %c0_144 = arith.constant 0 : index
    %c0_145 = arith.constant 0 : index
    %289 = vector.load %arg28[%c0_144, %c0_145] : memref<4x1xf32, #tpu.memory_space<vmem>>, vector<4x1xf32>
    %c0_146 = arith.constant 0 : index
    %c0_147 = arith.constant 0 : index
    %290 = vector.load %arg29[%c0_146, %c0_147] : memref<4x4xf32, #tpu.memory_space<vmem>>, vector<4x4xf32>
    %291 = tpu.iota {dimensions = array<i32: 1>} : vector<4x256xi32>
    %cst_148 = arith.constant dense<0.000000e+00> : vector<4x256xf32>
    %292 = tpu.matmul %279, %278, %cst_148 {dimension_numbers = #tpu.dot_dimension_numbers<[1], [0], [0], [1], [0, 0, 1, 1], [], []>} : vector<4x4xf32>, vector<4x256xf32>, vector<4x256xf32> -> vector<4x256xf32>
    %cst_149 = arith.constant dense<0.000000e+00> : vector<4x256xf32>
    %293 = tpu.matmul %280, %278, %cst_149 {dimension_numbers = #tpu.dot_dimension_numbers<[1], [0], [0], [1], [0, 0, 1, 1], [], []>} : vector<4x4xf32>, vector<4x256xf32>, vector<4x256xf32> -> vector<4x256xf32>
    %294 = vector.extract_strided_slice %281 {offsets = [0, 3], sizes = [4, 1], strides = [1, 1]} : vector<4x4xf32> to vector<4x1xf32>
    %295 = vector.broadcast %294 : vector<4x1xf32> to vector<4x256xf32>
    %296 = arith.mulf %295, %292 : vector<4x256xf32>
    %297 = vector.broadcast %282 : vector<4x1xf32> to vector<4x256xf32>
    %298 = arith.addf %297, %296 : vector<4x256xf32>
    %c3_i32_150 = arith.constant 3 : i32
    %299 = tpu.dynamic_rotate %292 by %c3_i32_150 dim 1 : vector<4x256xf32>, i32 -> vector<4x256xf32>
    %c3_i32_151 = arith.constant 3 : i32
    %300 = vector.broadcast %c3_i32_151 : i32 to vector<4x256xi32>
    %301 = arith.cmpi sge, %291, %300 : vector<4x256xi32>
    %cst_152 = arith.constant 0.000000e+00 : f32
    %302 = vector.broadcast %cst_152 : f32 to vector<4x256xf32>
    %303 = arith.select %301, %299, %302 : vector<4x256xi1>, vector<4x256xf32>
    %304 = vector.extract_strided_slice %281 {offsets = [0, 0], sizes = [4, 1], strides = [1, 1]} : vector<4x4xf32> to vector<4x1xf32>
    %305 = vector.broadcast %304 : vector<4x1xf32> to vector<4x256xf32>
    %306 = arith.mulf %305, %303 : vector<4x256xf32>
    %307 = arith.addf %298, %306 : vector<4x256xf32>
    %c2_i32_153 = arith.constant 2 : i32
    %308 = tpu.dynamic_rotate %292 by %c2_i32_153 dim 1 : vector<4x256xf32>, i32 -> vector<4x256xf32>
    %c2_i32_154 = arith.constant 2 : i32
    %309 = vector.broadcast %c2_i32_154 : i32 to vector<4x256xi32>
    %310 = arith.cmpi sge, %291, %309 : vector<4x256xi32>
    %cst_155 = arith.constant 0.000000e+00 : f32
    %311 = vector.broadcast %cst_155 : f32 to vector<4x256xf32>
    %312 = arith.select %310, %308, %311 : vector<4x256xi1>, vector<4x256xf32>
    %313 = vector.extract_strided_slice %281 {offsets = [0, 1], sizes = [4, 1], strides = [1, 1]} : vector<4x4xf32> to vector<4x1xf32>
    %314 = vector.broadcast %313 : vector<4x1xf32> to vector<4x256xf32>
    %315 = arith.mulf %314, %312 : vector<4x256xf32>
    %316 = arith.addf %307, %315 : vector<4x256xf32>
    %c1_i32_156 = arith.constant 1 : i32
    %317 = tpu.dynamic_rotate %292 by %c1_i32_156 dim 1 : vector<4x256xf32>, i32 -> vector<4x256xf32>
    %c1_i32_157 = arith.constant 1 : i32
    %318 = vector.broadcast %c1_i32_157 : i32 to vector<4x256xi32>
    %319 = arith.cmpi sge, %291, %318 : vector<4x256xi32>
    %cst_158 = arith.constant 0.000000e+00 : f32
    %320 = vector.broadcast %cst_158 : f32 to vector<4x256xf32>
    %321 = arith.select %319, %317, %320 : vector<4x256xi1>, vector<4x256xf32>
    %322 = vector.extract_strided_slice %281 {offsets = [0, 2], sizes = [4, 1], strides = [1, 1]} : vector<4x4xf32> to vector<4x1xf32>
    %323 = vector.broadcast %322 : vector<4x1xf32> to vector<4x256xf32>
    %324 = arith.mulf %323, %321 : vector<4x256xf32>
    %325 = arith.addf %316, %324 : vector<4x256xf32>
    %cst_159 = arith.constant 0.000000e+00 : f32
    %326 = vector.broadcast %cst_159 : f32 to vector<4x256xf32>
    %327 = arith.subf %326, %325 : vector<4x256xf32>
    %328 = math.exp %327 : vector<4x256xf32>
    %cst_160 = arith.constant 1.000000e+00 : f32
    %329 = vector.broadcast %cst_160 : f32 to vector<4x256xf32>
    %330 = arith.addf %329, %328 : vector<4x256xf32>
    %331 = arith.divf %325, %330 : vector<4x256xf32>
    %cst_161 = arith.constant dense<0.000000e+00> : vector<1x256xf32>
    %332 = tpu.matmul %283, %331, %cst_161 {dimension_numbers = #tpu.dot_dimension_numbers<[1], [0], [0], [1], [0, 0, 1, 1], [], []>} : vector<1x4xf32>, vector<4x256xf32>, vector<1x256xf32> -> vector<1x256xf32>
    %cst_162 = arith.constant dense<0.000000e+00> : vector<2x256xf32>
    %333 = tpu.matmul %284, %331, %cst_162 {dimension_numbers = #tpu.dot_dimension_numbers<[1], [0], [0], [1], [0, 0, 1, 1], [], []>} : vector<2x4xf32>, vector<4x256xf32>, vector<2x256xf32> -> vector<2x256xf32>
    %cst_163 = arith.constant dense<0.000000e+00> : vector<2x256xf32>
    %334 = tpu.matmul %285, %331, %cst_163 {dimension_numbers = #tpu.dot_dimension_numbers<[1], [0], [0], [1], [0, 0, 1, 1], [], []>} : vector<2x4xf32>, vector<4x256xf32>, vector<2x256xf32> -> vector<2x256xf32>
    %cst_164 = arith.constant dense<0.000000e+00> : vector<4x256xf32>
    %335 = tpu.matmul %286, %332, %cst_164 {dimension_numbers = #tpu.dot_dimension_numbers<[1], [0], [0], [1], [0, 0, 1, 1], [], []>} : vector<4x1xf32>, vector<1x256xf32>, vector<4x256xf32> -> vector<4x256xf32>
    %336 = vector.broadcast %287 : vector<4x1xf32> to vector<4x256xf32>
    %337 = arith.addf %335, %336 : vector<4x256xf32>
    %cst_165 = arith.constant 2.000000e+01 : f32
    %338 = vector.broadcast %cst_165 : f32 to vector<4x256xf32>
    %339 = arith.cmpf ogt, %337, %338 : vector<4x256xf32>
    %cst_166 = arith.constant 2.000000e+01 : f32
    %340 = vector.broadcast %cst_166 : f32 to vector<4x256xf32>
    %341 = arith.minimumf %337, %340 : vector<4x256xf32>
    %342 = math.exp %341 : vector<4x256xf32>
    %343 = math.log1p %342 : vector<4x256xf32>
    %344 = arith.select %339, %337, %343 : vector<4x256xi1>, vector<4x256xf32>
    %345 = arith.mulf %344, %331 : vector<4x256xf32>
    %346 = vector.broadcast %289 : vector<4x1xf32> to vector<4x256xf32>
    %347 = arith.mulf %346, %331 : vector<4x256xf32>
    %348 = vector.extract_strided_slice %288 {offsets = [0, 0], sizes = [4, 1], strides = [1, 1]} : vector<4x2xf32> to vector<4x1xf32>
    %349 = vector.broadcast %348 : vector<4x1xf32> to vector<4x256xf32>
    %350 = arith.mulf %344, %349 : vector<4x256xf32>
    %351 = math.exp %350 : vector<4x256xf32>
    %352 = vector.extract_strided_slice %333 {offsets = [0, 0], sizes = [1, 256], strides = [1, 1]} : vector<2x256xf32> to vector<1x256xf32>
    %353 = vector.broadcast %352 : vector<1x256xf32> to vector<4x256xf32>
    %354 = arith.mulf %345, %353 : vector<4x256xf32>
    %c1_i32_167 = arith.constant 1 : i32
    %355 = vector.broadcast %c1_i32_167 : i32 to vector<4x256xi32>
    %356 = arith.cmpi sge, %291, %355 : vector<4x256xi32>
    %c1_i32_168 = arith.constant 1 : i32
    %357 = tpu.dynamic_rotate %351 by %c1_i32_168 dim 1 : vector<4x256xf32>, i32 -> vector<4x256xf32>
    %cst_169 = arith.constant 1.000000e+00 : f32
    %358 = vector.broadcast %cst_169 : f32 to vector<4x256xf32>
    %359 = arith.select %356, %357, %358 : vector<4x256xi1>, vector<4x256xf32>
    %c1_i32_170 = arith.constant 1 : i32
    %360 = tpu.dynamic_rotate %354 by %c1_i32_170 dim 1 : vector<4x256xf32>, i32 -> vector<4x256xf32>
    %cst_171 = arith.constant 0.000000e+00 : f32
    %361 = vector.broadcast %cst_171 : f32 to vector<4x256xf32>
    %362 = arith.select %356, %360, %361 : vector<4x256xi1>, vector<4x256xf32>
    %363 = arith.mulf %351, %362 : vector<4x256xf32>
    %364 = arith.addf %363, %354 : vector<4x256xf32>
    %365 = arith.mulf %351, %359 : vector<4x256xf32>
    %c2_i32_172 = arith.constant 2 : i32
    %366 = vector.broadcast %c2_i32_172 : i32 to vector<4x256xi32>
    %367 = arith.cmpi sge, %291, %366 : vector<4x256xi32>
    %c2_i32_173 = arith.constant 2 : i32
    %368 = tpu.dynamic_rotate %365 by %c2_i32_173 dim 1 : vector<4x256xf32>, i32 -> vector<4x256xf32>
    %cst_174 = arith.constant 1.000000e+00 : f32
    %369 = vector.broadcast %cst_174 : f32 to vector<4x256xf32>
    %370 = arith.select %367, %368, %369 : vector<4x256xi1>, vector<4x256xf32>
    %c2_i32_175 = arith.constant 2 : i32
    %371 = tpu.dynamic_rotate %364 by %c2_i32_175 dim 1 : vector<4x256xf32>, i32 -> vector<4x256xf32>
    %cst_176 = arith.constant 0.000000e+00 : f32
    %372 = vector.broadcast %cst_176 : f32 to vector<4x256xf32>
    %373 = arith.select %367, %371, %372 : vector<4x256xi1>, vector<4x256xf32>
    %374 = arith.mulf %365, %373 : vector<4x256xf32>
    %375 = arith.addf %374, %364 : vector<4x256xf32>
    %376 = arith.mulf %365, %370 : vector<4x256xf32>
    %c4_i32_177 = arith.constant 4 : i32
    %377 = vector.broadcast %c4_i32_177 : i32 to vector<4x256xi32>
    %378 = arith.cmpi sge, %291, %377 : vector<4x256xi32>
    %c4_i32_178 = arith.constant 4 : i32
    %379 = tpu.dynamic_rotate %376 by %c4_i32_178 dim 1 : vector<4x256xf32>, i32 -> vector<4x256xf32>
    %cst_179 = arith.constant 1.000000e+00 : f32
    %380 = vector.broadcast %cst_179 : f32 to vector<4x256xf32>
    %381 = arith.select %378, %379, %380 : vector<4x256xi1>, vector<4x256xf32>
    %c4_i32_180 = arith.constant 4 : i32
    %382 = tpu.dynamic_rotate %375 by %c4_i32_180 dim 1 : vector<4x256xf32>, i32 -> vector<4x256xf32>
    %cst_181 = arith.constant 0.000000e+00 : f32
    %383 = vector.broadcast %cst_181 : f32 to vector<4x256xf32>
    %384 = arith.select %378, %382, %383 : vector<4x256xi1>, vector<4x256xf32>
    %385 = arith.mulf %376, %384 : vector<4x256xf32>
    %386 = arith.addf %385, %375 : vector<4x256xf32>
    %387 = arith.mulf %376, %381 : vector<4x256xf32>
    %c8_i32_182 = arith.constant 8 : i32
    %388 = vector.broadcast %c8_i32_182 : i32 to vector<4x256xi32>
    %389 = arith.cmpi sge, %291, %388 : vector<4x256xi32>
    %c8_i32_183 = arith.constant 8 : i32
    %390 = tpu.dynamic_rotate %387 by %c8_i32_183 dim 1 : vector<4x256xf32>, i32 -> vector<4x256xf32>
    %cst_184 = arith.constant 1.000000e+00 : f32
    %391 = vector.broadcast %cst_184 : f32 to vector<4x256xf32>
    %392 = arith.select %389, %390, %391 : vector<4x256xi1>, vector<4x256xf32>
    %c8_i32_185 = arith.constant 8 : i32
    %393 = tpu.dynamic_rotate %386 by %c8_i32_185 dim 1 : vector<4x256xf32>, i32 -> vector<4x256xf32>
    %cst_186 = arith.constant 0.000000e+00 : f32
    %394 = vector.broadcast %cst_186 : f32 to vector<4x256xf32>
    %395 = arith.select %389, %393, %394 : vector<4x256xi1>, vector<4x256xf32>
    %396 = arith.mulf %387, %395 : vector<4x256xf32>
    %397 = arith.addf %396, %386 : vector<4x256xf32>
    %398 = arith.mulf %387, %392 : vector<4x256xf32>
    %c16_i32_187 = arith.constant 16 : i32
    %399 = vector.broadcast %c16_i32_187 : i32 to vector<4x256xi32>
    %400 = arith.cmpi sge, %291, %399 : vector<4x256xi32>
    %c16_i32_188 = arith.constant 16 : i32
    %401 = tpu.dynamic_rotate %398 by %c16_i32_188 dim 1 : vector<4x256xf32>, i32 -> vector<4x256xf32>
    %cst_189 = arith.constant 1.000000e+00 : f32
    %402 = vector.broadcast %cst_189 : f32 to vector<4x256xf32>
    %403 = arith.select %400, %401, %402 : vector<4x256xi1>, vector<4x256xf32>
    %c16_i32_190 = arith.constant 16 : i32
    %404 = tpu.dynamic_rotate %397 by %c16_i32_190 dim 1 : vector<4x256xf32>, i32 -> vector<4x256xf32>
    %cst_191 = arith.constant 0.000000e+00 : f32
    %405 = vector.broadcast %cst_191 : f32 to vector<4x256xf32>
    %406 = arith.select %400, %404, %405 : vector<4x256xi1>, vector<4x256xf32>
    %407 = arith.mulf %398, %406 : vector<4x256xf32>
    %408 = arith.addf %407, %397 : vector<4x256xf32>
    %409 = arith.mulf %398, %403 : vector<4x256xf32>
    %c32_i32_192 = arith.constant 32 : i32
    %410 = vector.broadcast %c32_i32_192 : i32 to vector<4x256xi32>
    %411 = arith.cmpi sge, %291, %410 : vector<4x256xi32>
    %c32_i32_193 = arith.constant 32 : i32
    %412 = tpu.dynamic_rotate %409 by %c32_i32_193 dim 1 : vector<4x256xf32>, i32 -> vector<4x256xf32>
    %cst_194 = arith.constant 1.000000e+00 : f32
    %413 = vector.broadcast %cst_194 : f32 to vector<4x256xf32>
    %414 = arith.select %411, %412, %413 : vector<4x256xi1>, vector<4x256xf32>
    %c32_i32_195 = arith.constant 32 : i32
    %415 = tpu.dynamic_rotate %408 by %c32_i32_195 dim 1 : vector<4x256xf32>, i32 -> vector<4x256xf32>
    %cst_196 = arith.constant 0.000000e+00 : f32
    %416 = vector.broadcast %cst_196 : f32 to vector<4x256xf32>
    %417 = arith.select %411, %415, %416 : vector<4x256xi1>, vector<4x256xf32>
    %418 = arith.mulf %409, %417 : vector<4x256xf32>
    %419 = arith.addf %418, %408 : vector<4x256xf32>
    %420 = arith.mulf %409, %414 : vector<4x256xf32>
    %c64_i32_197 = arith.constant 64 : i32
    %421 = vector.broadcast %c64_i32_197 : i32 to vector<4x256xi32>
    %422 = arith.cmpi sge, %291, %421 : vector<4x256xi32>
    %c64_i32_198 = arith.constant 64 : i32
    %423 = tpu.dynamic_rotate %420 by %c64_i32_198 dim 1 : vector<4x256xf32>, i32 -> vector<4x256xf32>
    %cst_199 = arith.constant 1.000000e+00 : f32
    %424 = vector.broadcast %cst_199 : f32 to vector<4x256xf32>
    %425 = arith.select %422, %423, %424 : vector<4x256xi1>, vector<4x256xf32>
    %c64_i32_200 = arith.constant 64 : i32
    %426 = tpu.dynamic_rotate %419 by %c64_i32_200 dim 1 : vector<4x256xf32>, i32 -> vector<4x256xf32>
    %cst_201 = arith.constant 0.000000e+00 : f32
    %427 = vector.broadcast %cst_201 : f32 to vector<4x256xf32>
    %428 = arith.select %422, %426, %427 : vector<4x256xi1>, vector<4x256xf32>
    %429 = arith.mulf %420, %428 : vector<4x256xf32>
    %430 = arith.addf %429, %419 : vector<4x256xf32>
    %431 = arith.mulf %420, %425 : vector<4x256xf32>
    %c128_i32_202 = arith.constant 128 : i32
    %432 = vector.broadcast %c128_i32_202 : i32 to vector<4x256xi32>
    %433 = arith.cmpi sge, %291, %432 : vector<4x256xi32>
    %c128_i32_203 = arith.constant 128 : i32
    %434 = tpu.dynamic_rotate %430 by %c128_i32_203 dim 1 : vector<4x256xf32>, i32 -> vector<4x256xf32>
    %cst_204 = arith.constant 0.000000e+00 : f32
    %435 = vector.broadcast %cst_204 : f32 to vector<4x256xf32>
    %436 = arith.select %433, %434, %435 : vector<4x256xi1>, vector<4x256xf32>
    %437 = arith.mulf %431, %436 : vector<4x256xf32>
    %438 = arith.addf %437, %430 : vector<4x256xf32>
    %439 = vector.extract_strided_slice %334 {offsets = [0, 0], sizes = [1, 256], strides = [1, 1]} : vector<2x256xf32> to vector<1x256xf32>
    %440 = vector.broadcast %439 : vector<1x256xf32> to vector<4x256xf32>
    %441 = arith.mulf %440, %438 : vector<4x256xf32>
    %442 = arith.addf %347, %441 : vector<4x256xf32>
    %443 = vector.extract_strided_slice %288 {offsets = [0, 1], sizes = [4, 1], strides = [1, 1]} : vector<4x2xf32> to vector<4x1xf32>
    %444 = vector.broadcast %443 : vector<4x1xf32> to vector<4x256xf32>
    %445 = arith.mulf %344, %444 : vector<4x256xf32>
    %446 = math.exp %445 : vector<4x256xf32>
    %447 = vector.extract_strided_slice %333 {offsets = [1, 0], sizes = [1, 256], strides = [1, 1]} : vector<2x256xf32> to vector<1x256xf32>
    %448 = vector.broadcast %447 : vector<1x256xf32> to vector<4x256xf32>
    %449 = arith.mulf %345, %448 : vector<4x256xf32>
    %c1_i32_205 = arith.constant 1 : i32
    %450 = vector.broadcast %c1_i32_205 : i32 to vector<4x256xi32>
    %451 = arith.cmpi sge, %291, %450 : vector<4x256xi32>
    %c1_i32_206 = arith.constant 1 : i32
    %452 = tpu.dynamic_rotate %446 by %c1_i32_206 dim 1 : vector<4x256xf32>, i32 -> vector<4x256xf32>
    %cst_207 = arith.constant 1.000000e+00 : f32
    %453 = vector.broadcast %cst_207 : f32 to vector<4x256xf32>
    %454 = arith.select %451, %452, %453 : vector<4x256xi1>, vector<4x256xf32>
    %c1_i32_208 = arith.constant 1 : i32
    %455 = tpu.dynamic_rotate %449 by %c1_i32_208 dim 1 : vector<4x256xf32>, i32 -> vector<4x256xf32>
    %cst_209 = arith.constant 0.000000e+00 : f32
    %456 = vector.broadcast %cst_209 : f32 to vector<4x256xf32>
    %457 = arith.select %451, %455, %456 : vector<4x256xi1>, vector<4x256xf32>
    %458 = arith.mulf %446, %457 : vector<4x256xf32>
    %459 = arith.addf %458, %449 : vector<4x256xf32>
    %460 = arith.mulf %446, %454 : vector<4x256xf32>
    %c2_i32_210 = arith.constant 2 : i32
    %461 = vector.broadcast %c2_i32_210 : i32 to vector<4x256xi32>
    %462 = arith.cmpi sge, %291, %461 : vector<4x256xi32>
    %c2_i32_211 = arith.constant 2 : i32
    %463 = tpu.dynamic_rotate %460 by %c2_i32_211 dim 1 : vector<4x256xf32>, i32 -> vector<4x256xf32>
    %cst_212 = arith.constant 1.000000e+00 : f32
    %464 = vector.broadcast %cst_212 : f32 to vector<4x256xf32>
    %465 = arith.select %462, %463, %464 : vector<4x256xi1>, vector<4x256xf32>
    %c2_i32_213 = arith.constant 2 : i32
    %466 = tpu.dynamic_rotate %459 by %c2_i32_213 dim 1 : vector<4x256xf32>, i32 -> vector<4x256xf32>
    %cst_214 = arith.constant 0.000000e+00 : f32
    %467 = vector.broadcast %cst_214 : f32 to vector<4x256xf32>
    %468 = arith.select %462, %466, %467 : vector<4x256xi1>, vector<4x256xf32>
    %469 = arith.mulf %460, %468 : vector<4x256xf32>
    %470 = arith.addf %469, %459 : vector<4x256xf32>
    %471 = arith.mulf %460, %465 : vector<4x256xf32>
    %c4_i32_215 = arith.constant 4 : i32
    %472 = vector.broadcast %c4_i32_215 : i32 to vector<4x256xi32>
    %473 = arith.cmpi sge, %291, %472 : vector<4x256xi32>
    %c4_i32_216 = arith.constant 4 : i32
    %474 = tpu.dynamic_rotate %471 by %c4_i32_216 dim 1 : vector<4x256xf32>, i32 -> vector<4x256xf32>
    %cst_217 = arith.constant 1.000000e+00 : f32
    %475 = vector.broadcast %cst_217 : f32 to vector<4x256xf32>
    %476 = arith.select %473, %474, %475 : vector<4x256xi1>, vector<4x256xf32>
    %c4_i32_218 = arith.constant 4 : i32
    %477 = tpu.dynamic_rotate %470 by %c4_i32_218 dim 1 : vector<4x256xf32>, i32 -> vector<4x256xf32>
    %cst_219 = arith.constant 0.000000e+00 : f32
    %478 = vector.broadcast %cst_219 : f32 to vector<4x256xf32>
    %479 = arith.select %473, %477, %478 : vector<4x256xi1>, vector<4x256xf32>
    %480 = arith.mulf %471, %479 : vector<4x256xf32>
    %481 = arith.addf %480, %470 : vector<4x256xf32>
    %482 = arith.mulf %471, %476 : vector<4x256xf32>
    %c8_i32_220 = arith.constant 8 : i32
    %483 = vector.broadcast %c8_i32_220 : i32 to vector<4x256xi32>
    %484 = arith.cmpi sge, %291, %483 : vector<4x256xi32>
    %c8_i32_221 = arith.constant 8 : i32
    %485 = tpu.dynamic_rotate %482 by %c8_i32_221 dim 1 : vector<4x256xf32>, i32 -> vector<4x256xf32>
    %cst_222 = arith.constant 1.000000e+00 : f32
    %486 = vector.broadcast %cst_222 : f32 to vector<4x256xf32>
    %487 = arith.select %484, %485, %486 : vector<4x256xi1>, vector<4x256xf32>
    %c8_i32_223 = arith.constant 8 : i32
    %488 = tpu.dynamic_rotate %481 by %c8_i32_223 dim 1 : vector<4x256xf32>, i32 -> vector<4x256xf32>
    %cst_224 = arith.constant 0.000000e+00 : f32
    %489 = vector.broadcast %cst_224 : f32 to vector<4x256xf32>
    %490 = arith.select %484, %488, %489 : vector<4x256xi1>, vector<4x256xf32>
    %491 = arith.mulf %482, %490 : vector<4x256xf32>
    %492 = arith.addf %491, %481 : vector<4x256xf32>
    %493 = arith.mulf %482, %487 : vector<4x256xf32>
    %c16_i32_225 = arith.constant 16 : i32
    %494 = vector.broadcast %c16_i32_225 : i32 to vector<4x256xi32>
    %495 = arith.cmpi sge, %291, %494 : vector<4x256xi32>
    %c16_i32_226 = arith.constant 16 : i32
    %496 = tpu.dynamic_rotate %493 by %c16_i32_226 dim 1 : vector<4x256xf32>, i32 -> vector<4x256xf32>
    %cst_227 = arith.constant 1.000000e+00 : f32
    %497 = vector.broadcast %cst_227 : f32 to vector<4x256xf32>
    %498 = arith.select %495, %496, %497 : vector<4x256xi1>, vector<4x256xf32>
    %c16_i32_228 = arith.constant 16 : i32
    %499 = tpu.dynamic_rotate %492 by %c16_i32_228 dim 1 : vector<4x256xf32>, i32 -> vector<4x256xf32>
    %cst_229 = arith.constant 0.000000e+00 : f32
    %500 = vector.broadcast %cst_229 : f32 to vector<4x256xf32>
    %501 = arith.select %495, %499, %500 : vector<4x256xi1>, vector<4x256xf32>
    %502 = arith.mulf %493, %501 : vector<4x256xf32>
    %503 = arith.addf %502, %492 : vector<4x256xf32>
    %504 = arith.mulf %493, %498 : vector<4x256xf32>
    %c32_i32_230 = arith.constant 32 : i32
    %505 = vector.broadcast %c32_i32_230 : i32 to vector<4x256xi32>
    %506 = arith.cmpi sge, %291, %505 : vector<4x256xi32>
    %c32_i32_231 = arith.constant 32 : i32
    %507 = tpu.dynamic_rotate %504 by %c32_i32_231 dim 1 : vector<4x256xf32>, i32 -> vector<4x256xf32>
    %cst_232 = arith.constant 1.000000e+00 : f32
    %508 = vector.broadcast %cst_232 : f32 to vector<4x256xf32>
    %509 = arith.select %506, %507, %508 : vector<4x256xi1>, vector<4x256xf32>
    %c32_i32_233 = arith.constant 32 : i32
    %510 = tpu.dynamic_rotate %503 by %c32_i32_233 dim 1 : vector<4x256xf32>, i32 -> vector<4x256xf32>
    %cst_234 = arith.constant 0.000000e+00 : f32
    %511 = vector.broadcast %cst_234 : f32 to vector<4x256xf32>
    %512 = arith.select %506, %510, %511 : vector<4x256xi1>, vector<4x256xf32>
    %513 = arith.mulf %504, %512 : vector<4x256xf32>
    %514 = arith.addf %513, %503 : vector<4x256xf32>
    %515 = arith.mulf %504, %509 : vector<4x256xf32>
    %c64_i32_235 = arith.constant 64 : i32
    %516 = vector.broadcast %c64_i32_235 : i32 to vector<4x256xi32>
    %517 = arith.cmpi sge, %291, %516 : vector<4x256xi32>
    %c64_i32_236 = arith.constant 64 : i32
    %518 = tpu.dynamic_rotate %515 by %c64_i32_236 dim 1 : vector<4x256xf32>, i32 -> vector<4x256xf32>
    %cst_237 = arith.constant 1.000000e+00 : f32
    %519 = vector.broadcast %cst_237 : f32 to vector<4x256xf32>
    %520 = arith.select %517, %518, %519 : vector<4x256xi1>, vector<4x256xf32>
    %c64_i32_238 = arith.constant 64 : i32
    %521 = tpu.dynamic_rotate %514 by %c64_i32_238 dim 1 : vector<4x256xf32>, i32 -> vector<4x256xf32>
    %cst_239 = arith.constant 0.000000e+00 : f32
    %522 = vector.broadcast %cst_239 : f32 to vector<4x256xf32>
    %523 = arith.select %517, %521, %522 : vector<4x256xi1>, vector<4x256xf32>
    %524 = arith.mulf %515, %523 : vector<4x256xf32>
    %525 = arith.addf %524, %514 : vector<4x256xf32>
    %526 = arith.mulf %515, %520 : vector<4x256xf32>
    %c128_i32_240 = arith.constant 128 : i32
    %527 = vector.broadcast %c128_i32_240 : i32 to vector<4x256xi32>
    %528 = arith.cmpi sge, %291, %527 : vector<4x256xi32>
    %c128_i32_241 = arith.constant 128 : i32
    %529 = tpu.dynamic_rotate %525 by %c128_i32_241 dim 1 : vector<4x256xf32>, i32 -> vector<4x256xf32>
    %cst_242 = arith.constant 0.000000e+00 : f32
    %530 = vector.broadcast %cst_242 : f32 to vector<4x256xf32>
    %531 = arith.select %528, %529, %530 : vector<4x256xi1>, vector<4x256xf32>
    %532 = arith.mulf %526, %531 : vector<4x256xf32>
    %533 = arith.addf %532, %525 : vector<4x256xf32>
    %534 = vector.extract_strided_slice %334 {offsets = [1, 0], sizes = [1, 256], strides = [1, 1]} : vector<2x256xf32> to vector<1x256xf32>
    %535 = vector.broadcast %534 : vector<1x256xf32> to vector<4x256xf32>
    %536 = arith.mulf %535, %533 : vector<4x256xf32>
    %537 = arith.addf %442, %536 : vector<4x256xf32>
    %cst_243 = arith.constant 0.000000e+00 : f32
    %538 = vector.broadcast %cst_243 : f32 to vector<4x256xf32>
    %539 = arith.subf %538, %293 : vector<4x256xf32>
    %540 = math.exp %539 : vector<4x256xf32>
    %cst_244 = arith.constant 1.000000e+00 : f32
    %541 = vector.broadcast %cst_244 : f32 to vector<4x256xf32>
    %542 = arith.addf %541, %540 : vector<4x256xf32>
    %543 = arith.divf %293, %542 : vector<4x256xf32>
    %544 = arith.mulf %537, %543 : vector<4x256xf32>
    %cst_245 = arith.constant dense<0.000000e+00> : vector<4x256xf32>
    %545 = tpu.matmul %290, %544, %cst_245 {dimension_numbers = #tpu.dot_dimension_numbers<[1], [0], [0], [1], [0, 0, 1, 1], [], []>} : vector<4x4xf32>, vector<4x256xf32>, vector<4x256xf32> -> vector<4x256xf32>
    %546 = arith.addf %6, %545 : vector<4x256xf32>
    %c0_246 = arith.constant 0 : index
    %c0_247 = arith.constant 0 : index
    %c0_248 = arith.constant 0 : index
    %547 = vector.load %arg30[%c0_246, %c0_247, %c0_248] : memref<1x4x256xf32, #tpu.memory_space<vmem>>, vector<1x4x256xf32>
    %548 = vector.shape_cast %547 : vector<1x4x256xf32> to vector<4x256xf32>
    %549 = vector.shape_cast %546 : vector<4x256xf32> to vector<1x4x256xf32>
    tpu.vector_store %arg30[%c0_246, %c0_247, %c0_248], %549 {strides = array<i32>} : memref<1x4x256xf32, #tpu.memory_space<vmem>>, vector<1x4x256xf32>,
    return
  }
  func.func @transform_0(%arg0: i32) -> (i32, i32, i32) {
    %c0_i32 = arith.constant 0 : i32
    %c0_i32_0 = arith.constant 0 : i32
    %c0_i32_1 = arith.constant 0 : i32
    return %arg0, %c0_i32, %c0_i32_0 : i32, i32, i32
  }
  func.func @transform_1(%arg0: i32) -> (i32, i32) {
    %c0_i32 = arith.constant 0 : i32
    %c0_i32_0 = arith.constant 0 : i32
    %c0_i32_1 = arith.constant 0 : i32
    return %c0_i32, %c0_i32_0 : i32, i32
  }
  func.func @transform_2(%arg0: i32) -> (i32, i32) {
    %c0_i32 = arith.constant 0 : i32
    %c0_i32_0 = arith.constant 0 : i32
    %c0_i32_1 = arith.constant 0 : i32
    return %c0_i32, %c0_i32_0 : i32, i32
  }
  func.func @transform_3(%arg0: i32) -> (i32, i32) {
    %c0_i32 = arith.constant 0 : i32
    %c0_i32_0 = arith.constant 0 : i32
    %c0_i32_1 = arith.constant 0 : i32
    return %c0_i32, %c0_i32_0 : i32, i32
  }
  func.func @transform_4(%arg0: i32) -> (i32, i32) {
    %c0_i32 = arith.constant 0 : i32
    %c0_i32_0 = arith.constant 0 : i32
    %c0_i32_1 = arith.constant 0 : i32
    return %c0_i32, %c0_i32_0 : i32, i32
  }
  func.func @transform_5(%arg0: i32) -> (i32, i32) {
    %c0_i32 = arith.constant 0 : i32
    %c0_i32_0 = arith.constant 0 : i32
    %c0_i32_1 = arith.constant 0 : i32
    return %c0_i32, %c0_i32_0 : i32, i32
  }
  func.func @transform_6(%arg0: i32) -> (i32, i32) {
    %c0_i32 = arith.constant 0 : i32
    %c0_i32_0 = arith.constant 0 : i32
    %c0_i32_1 = arith.constant 0 : i32
    return %c0_i32, %c0_i32_0 : i32, i32
  }
  func.func @transform_7(%arg0: i32) -> (i32, i32) {
    %c0_i32 = arith.constant 0 : i32
    %c0_i32_0 = arith.constant 0 : i32
    %c0_i32_1 = arith.constant 0 : i32
    return %c0_i32, %c0_i32_0 : i32, i32
  }
  func.func @transform_8(%arg0: i32) -> (i32, i32) {
    %c0_i32 = arith.constant 0 : i32
    %c0_i32_0 = arith.constant 0 : i32
    %c0_i32_1 = arith.constant 0 : i32
    return %c0_i32, %c0_i32_0 : i32, i32
  }
  func.func @transform_9(%arg0: i32) -> (i32, i32) {
    %c0_i32 = arith.constant 0 : i32
    %c0_i32_0 = arith.constant 0 : i32
    %c0_i32_1 = arith.constant 0 : i32
    return %c0_i32, %c0_i32_0 : i32, i32
  }
  func.func @transform_10(%arg0: i32) -> (i32, i32) {
    %c0_i32 = arith.constant 0 : i32
    %c0_i32_0 = arith.constant 0 : i32
    %c0_i32_1 = arith.constant 0 : i32
    return %c0_i32, %c0_i32_0 : i32, i32
  }
  func.func @transform_11(%arg0: i32) -> (i32, i32) {
    %c0_i32 = arith.constant 0 : i32
    %c0_i32_0 = arith.constant 0 : i32
    %c0_i32_1 = arith.constant 0 : i32
    return %c0_i32, %c0_i32_0 : i32, i32
  }
  func.func @transform_12(%arg0: i32) -> (i32, i32) {
    %c0_i32 = arith.constant 0 : i32
    %c0_i32_0 = arith.constant 0 : i32
    %c0_i32_1 = arith.constant 0 : i32
    return %c0_i32, %c0_i32_0 : i32, i32
  }
  func.func @transform_13(%arg0: i32) -> (i32, i32) {
    %c0_i32 = arith.constant 0 : i32
    %c0_i32_0 = arith.constant 0 : i32
    %c0_i32_1 = arith.constant 0 : i32
    return %c0_i32, %c0_i32_0 : i32, i32
  }
  func.func @transform_14(%arg0: i32) -> (i32, i32) {
    %c0_i32 = arith.constant 0 : i32
    %c0_i32_0 = arith.constant 0 : i32
    %c0_i32_1 = arith.constant 0 : i32
    return %c0_i32, %c0_i32_0 : i32, i32
  }
  func.func @transform_15(%arg0: i32) -> (i32, i32) {
    %c0_i32 = arith.constant 0 : i32
    %c0_i32_0 = arith.constant 0 : i32
    %c0_i32_1 = arith.constant 0 : i32
    return %c0_i32, %c0_i32_0 : i32, i32
  }
  func.func @transform_16(%arg0: i32) -> (i32, i32) {
    %c0_i32 = arith.constant 0 : i32
    %c0_i32_0 = arith.constant 0 : i32
    %c0_i32_1 = arith.constant 0 : i32
    return %c0_i32, %c0_i32_0 : i32, i32
  }
  func.func @transform_17(%arg0: i32) -> (i32, i32) {
    %c0_i32 = arith.constant 0 : i32
    %c0_i32_0 = arith.constant 0 : i32
    %c0_i32_1 = arith.constant 0 : i32
    return %c0_i32, %c0_i32_0 : i32, i32
  }
  func.func @transform_18(%arg0: i32) -> (i32, i32) {
    %c0_i32 = arith.constant 0 : i32
    %c0_i32_0 = arith.constant 0 : i32
    %c0_i32_1 = arith.constant 0 : i32
    return %c0_i32, %c0_i32_0 : i32, i32
  }
  func.func @transform_19(%arg0: i32) -> (i32, i32) {
    %c0_i32 = arith.constant 0 : i32
    %c0_i32_0 = arith.constant 0 : i32
    %c0_i32_1 = arith.constant 0 : i32
    return %c0_i32, %c0_i32_0 : i32, i32
  }
  func.func @transform_20(%arg0: i32) -> (i32, i32) {
    %c0_i32 = arith.constant 0 : i32
    %c0_i32_0 = arith.constant 0 : i32
    %c0_i32_1 = arith.constant 0 : i32
    return %c0_i32, %c0_i32_0 : i32, i32
  }
  func.func @transform_21(%arg0: i32) -> (i32, i32) {
    %c0_i32 = arith.constant 0 : i32
    %c0_i32_0 = arith.constant 0 : i32
    %c0_i32_1 = arith.constant 0 : i32
    return %c0_i32, %c0_i32_0 : i32, i32
  }
  func.func @transform_22(%arg0: i32) -> (i32, i32) {
    %c0_i32 = arith.constant 0 : i32
    %c0_i32_0 = arith.constant 0 : i32
    %c0_i32_1 = arith.constant 0 : i32
    return %c0_i32, %c0_i32_0 : i32, i32
  }
  func.func @transform_23(%arg0: i32) -> (i32, i32) {
    %c0_i32 = arith.constant 0 : i32
    %c0_i32_0 = arith.constant 0 : i32
    %c0_i32_1 = arith.constant 0 : i32
    return %c0_i32, %c0_i32_0 : i32, i32
  }
  func.func @transform_24(%arg0: i32) -> (i32, i32) {
    %c0_i32 = arith.constant 0 : i32
    %c0_i32_0 = arith.constant 0 : i32
    %c0_i32_1 = arith.constant 0 : i32
    return %c0_i32, %c0_i32_0 : i32, i32
  }
  func.func @transform_25(%arg0: i32) -> (i32, i32) {
    %c0_i32 = arith.constant 0 : i32
    %c0_i32_0 = arith.constant 0 : i32
    %c0_i32_1 = arith.constant 0 : i32
    return %c0_i32, %c0_i32_0 : i32, i32
  }
  func.func @transform_26(%arg0: i32) -> (i32, i32) {
    %c0_i32 = arith.constant 0 : i32
    %c0_i32_0 = arith.constant 0 : i32
    %c0_i32_1 = arith.constant 0 : i32
    return %c0_i32, %c0_i32_0 : i32, i32
  }
  func.func @transform_27(%arg0: i32) -> (i32, i32) {
    %c0_i32 = arith.constant 0 : i32
    %c0_i32_0 = arith.constant 0 : i32
    %c0_i32_1 = arith.constant 0 : i32
    return %c0_i32, %c0_i32_0 : i32, i32
  }
  func.func @transform_28(%arg0: i32) -> (i32, i32) {
    %c0_i32 = arith.constant 0 : i32
    %c0_i32_0 = arith.constant 0 : i32
    %c0_i32_1 = arith.constant 0 : i32
    return %c0_i32, %c0_i32_0 : i32, i32
  }
  func.func @transform_29(%arg0: i32) -> (i32, i32, i32) {
    %c0_i32 = arith.constant 0 : i32
    %c0_i32_0 = arith.constant 0 : i32
    %c0_i32_1 = arith.constant 0 : i32
    return %arg0, %c0_i32, %c0_i32_0 : i32, i32, i32
  }
}

</mosaic_0001>

<llo_original>
// kernel: branch12_forward.1
$region0: #{branch12_forward.1}
  #allocation0 [shape = 'u32[]', space=smem, size = 0x4, offset = 0x4, fixed_abs, tag = 'smem constant byte address 0x4 - core index']
  #allocation1 [shape = 'u32[72,128]{1,0:T(1,128)}', space=vmem, size = 0x9000, scoped, tag = 'internal scratch']
  %s0 = inlined_call_operand.smem [shape: u32[30], index: -1, kind: input, shape index: {}]
  %s1 = sld [smem:[%s0]]
  %s2 = scalar_lea.smem %s0, 1
  %s3 = sld [smem:[%s2]]
  %s4 = scalar_lea.smem %s0, 2
  %s5 = sld [smem:[%s4]]
  %s6 = scalar_lea.smem %s0, 3
  %s7 = sld [smem:[%s6]]
  %s8 = scalar_lea.smem %s0, 4
  %s9 = sld [smem:[%s8]]
  %s10 = scalar_lea.smem %s0, 5
  %s11 = sld [smem:[%s10]]
  %s12 = scalar_lea.smem %s0, 6
  %s13 = sld [smem:[%s12]]
  %s14 = scalar_lea.smem %s0, 7
  %s15 = sld [smem:[%s14]]
  %s16 = scalar_lea.smem %s0, 8
  %s17 = sld [smem:[%s16]]
  %s18 = scalar_lea.smem %s0, 9
  %s19 = sld [smem:[%s18]]
  %s20 = scalar_lea.smem %s0, 10
  %s21 = sld [smem:[%s20]]
  %s22 = scalar_lea.smem %s0, 11
  %s23 = sld [smem:[%s22]]
  %s24 = scalar_lea.smem %s0, 12
  %s25 = sld [smem:[%s24]]
  %s26 = scalar_lea.smem %s0, 13
  %s27 = sld [smem:[%s26]]
  %s28 = scalar_lea.smem %s0, 14
  %s29 = sld [smem:[%s28]]
  %s30 = scalar_lea.smem %s0, 15
  %s31 = sld [smem:[%s30]]
  %s32 = scalar_lea.smem %s0, 16
  %s33 = sld [smem:[%s32]]
  %s34 = scalar_lea.smem %s0, 17
  %s35 = sld [smem:[%s34]]
  %s36 = scalar_lea.smem %s0, 18
  %s37 = sld [smem:[%s36]]
  %s38 = scalar_lea.smem %s0, 19
  %s39 = sld [smem:[%s38]]
  %s40 = scalar_lea.smem %s0, 20
  %s41 = sld [smem:[%s40]]
  %s42 = scalar_lea.smem %s0, 21
  %s43 = sld [smem:[%s42]]
  %s44 = scalar_lea.smem %s0, 22
  %s45 = sld [smem:[%s44]]
  %s46 = scalar_lea.smem %s0, 23
  %s47 = sld [smem:[%s46]]
  %s48 = scalar_lea.smem %s0, 24
  %s49 = sld [smem:[%s48]]
  %s50 = scalar_lea.smem %s0, 25
  %s51 = sld [smem:[%s50]]
  %s52 = scalar_lea.smem %s0, 26
  %s53 = sld [smem:[%s52]]
  %s54 = scalar_lea.smem %s0, 27
  %s55 = sld [smem:[%s54]]
  %s56 = scalar_lea.smem %s0, 28
  %s57 = sld [smem:[%s56]]
  %s58 = scalar_lea.smem %s0, 29
  %s59 = sld [smem:[%s58]]
  %s60 = sld [smem:[#allocation0]]
  $region149: #{branch12_forward.1} parent=0
    _
  %s62 = ssub.s32 1, %s60
  %s63 = scalar_select 0, %s62, %s60
  loop: start=0, step=1, limit=4
  $region2: #{branch12_forward.1} parent=0 // loop_pre_header
    _
  $region3: #{branch12_forward.1} parent=0 // loop_header
    %s65 = sphi 0, %s69
    %p66 = scmp.ge.s32.totalorder %s65, 4
    %s75 = sphi 0, %s77
    %s78 = sphi 0, %s75
    %s79 = sphi 0, %s78
    %s95 = sphi 0, %s79
    %s99 = sphi 0, %s99
    %s101 = sphi 0, %s99
    %s102 = sphi 0, %s101
    %s116 = sphi 0, %s102
    %s120 = sphi 0, %s120
    %s122 = sphi 0, %s120
    %s123 = sphi 0, %s122
    %s137 = sphi 0, %s123
    %s141 = sphi 0, %s141
    %s143 = sphi 0, %s141
    %s144 = sphi 0, %s143
    %s158 = sphi 0, %s144
    %s162 = sphi 0, %s162
    %s164 = sphi 0, %s162
    %s165 = sphi 0, %s164
    %s179 = sphi 0, %s165
    %s183 = sphi 0, %s183
    %s185 = sphi 0, %s183
    %s186 = sphi 0, %s185
    %s200 = sphi 0, %s186
    %s204 = sphi 0, %s204
    %s206 = sphi 0, %s204
    %s207 = sphi 0, %s206
    %s221 = sphi 0, %s207
    %s225 = sphi 0, %s225
    %s227 = sphi 0, %s225
    %s228 = sphi 0, %s227
    %s242 = sphi 0, %s228
    %s246 = sphi 0, %s246
    %s248 = sphi 0, %s246
    %s249 = sphi 0, %s248
    %s263 = sphi 0, %s249
    %s267 = sphi 0, %s267
    %s269 = sphi 0, %s267
    %s270 = sphi 0, %s269
    %s284 = sphi 0, %s270
    %s288 = sphi 0, %s288
    %s290 = sphi 0, %s288
    %s291 = sphi 0, %s290
    %s305 = sphi 0, %s291
    %s309 = sphi 0, %s309
    %s311 = sphi 0, %s309
    %s312 = sphi 0, %s311
    %s326 = sphi 0, %s312
    %s330 = sphi 0, %s330
    %s332 = sphi 0, %s330
    %s333 = sphi 0, %s332
    %s347 = sphi 0, %s333
    %s351 = sphi 0, %s351
    %s353 = sphi 0, %s351
    %s354 = sphi 0, %s353
    %s368 = sphi 0, %s354
    %s372 = sphi 0, %s372
    %s374 = sphi 0, %s372
    %s375 = sphi 0, %s374
    %s389 = sphi 0, %s375
    %s393 = sphi 0, %s393
    %s395 = sphi 0, %s393
    %s396 = sphi 0, %s395
    %s410 = sphi 0, %s396
    %s414 = sphi 0, %s414
    %s416 = sphi 0, %s414
    %s417 = sphi 0, %s416
    %s431 = sphi 0, %s417
    %s435 = sphi 0, %s435
    %s437 = sphi 0, %s435
    %s438 = sphi 0, %s437
    %s452 = sphi 0, %s438
    %s456 = sphi 0, %s456
    %s458 = sphi 0, %s456
    %s459 = sphi 0, %s458
    %s473 = sphi 0, %s459
    %s477 = sphi 0, %s477
    %s479 = sphi 0, %s477
    %s480 = sphi 0, %s479
    %s494 = sphi 0, %s480
    %s498 = sphi 0, %s498
    %s500 = sphi 0, %s498
    %s501 = sphi 0, %s500
    %s515 = sphi 0, %s501
    %s519 = sphi 0, %s519
    %s521 = sphi 0, %s519
    %s522 = sphi 0, %s521
    %s536 = sphi 0, %s522
    %s540 = sphi 0, %s540
    %s542 = sphi 0, %s540
    %s543 = sphi 0, %s542
    %s557 = sphi 0, %s543
    %s561 = sphi 0, %s561
    %s563 = sphi 0, %s561
    %s564 = sphi 0, %s563
    %s578 = sphi 0, %s564
    %s582 = sphi 0, %s582
    %s584 = sphi 0, %s582
    %s585 = sphi 0, %s584
    %s599 = sphi 0, %s585
    %s603 = sphi 0, %s603
    %s605 = sphi 0, %s603
    %s606 = sphi 0, %s605
    %s620 = sphi 0, %s606
    %s624 = sphi 0, %s624
    %s626 = sphi 0, %s624
    %s627 = sphi 0, %s626
    %s641 = sphi 0, %s627
    %s645 = sphi 0, %s645
    %s647 = sphi 0, %s645
    %s648 = sphi 0, %s647
    %s662 = sphi 0, %s648
    %s666 = sphi 0, %s666
    %s668 = sphi 0, %s666
    %s669 = sphi 0, %s668
    %s683 = sphi 0, %s669
    %s689 = sphi 0, %s691
    %s692 = sphi 0, %s689
    %s693 = sphi 0, %s692
    %s709 = sphi 0, %s693
  $region4: #{branch12_forward.1} parent=0 // loop_header_branch
    %68 = sbr.rel (%p66) target = $region8
  $region5: #{branch12_forward.1} parent=0 // loop_body
    %s70 = ssub.s32 %s65, 1
    %s71 = ssub.s32 %s65, 2
    %s72 = sadd.s32 %s65, 1
    %s73 = ssub.s32 %s65, %s72
    %p74 = scmp.eq.s32.totalorder %s73, 0
    %s76 = sadd.s32 %s75, 1
    %s77 = scalar_select %p74, %s75, %s76
    %p80 = pneg %p74
    %p81 = scmp.eq.s32.totalorder %s65, 1
    %p82 = por %p80, %p81
    %p83 = scmp.ne.s32.totalorder %s75, %s78
    %p84 = scmp.eq.s32.totalorder %s65, 0
    %p85 = por %p83, %p84
    %p86 = scmp.ne.s32.totalorder %s75, %s78
    %p87 = scmp.eq.s32.totalorder %s70, 1
    %p88 = por %p86, %p87
    %p89 = scmp.ne.s32.totalorder %s78, %s79
    %p90 = scmp.eq.s32.totalorder %s70, 0
    %p91 = por %p89, %p90
    %p92 = scmp.ne.s32.totalorder %s78, %s79
    %p93 = scmp.eq.s32.totalorder %s71, 1
    %p94 = por %p92, %p93
    %p96 = scmp.ne.s32.totalorder %s79, %s95
    %p97 = scmp.eq.s32.totalorder %s71, 0
    %p98 = por %p96, %p97
    %s100 = sadd.s32 %s99, 1
    %p103 = scmp.eq.s32.totalorder %s65, 1
    %p104 = scmp.ne.s32.totalorder %s99, %s101
    %p105 = scmp.eq.s32.totalorder %s65, 0
    %p106 = por %p104, %p105
    %p107 = scmp.ne.s32.totalorder %s99, %s101
    %p108 = scmp.eq.s32.totalorder %s70, 1
    %p109 = por %p107, %p108
    %p110 = scmp.ne.s32.totalorder %s101, %s102
    %p111 = scmp.eq.s32.totalorder %s70, 0
    %p112 = por %p110, %p111
    %p113 = scmp.ne.s32.totalorder %s101, %s102
    %p114 = scmp.eq.s32.totalorder %s71, 1
    %p115 = por %p113, %p114
    %p117 = scmp.ne.s32.totalorder %s102, %s116
    %p118 = scmp.eq.s32.totalorder %s71, 0
    %p119 = por %p117, %p118
    %s121 = sadd.s32 %s120, 1
    %p124 = scmp.eq.s32.totalorder %s65, 1
    %p125 = scmp.ne.s32.totalorder %s120, %s122
    %p126 = scmp.eq.s32.totalorder %s65, 0
    %p127 = por %p125, %p126
    %p128 = scmp.ne.s32.totalorder %s120, %s122
    %p129 = scmp.eq.s32.totalorder %s70, 1
    %p130 = por %p128, %p129
    %p131 = scmp.ne.s32.totalorder %s122, %s123
    %p132 = scmp.eq.s32.totalorder %s70, 0
    %p133 = por %p131, %p132
    %p134 = scmp.ne.s32.totalorder %s122, %s123
    %p135 = scmp.eq.s32.totalorder %s71, 1
    %p136 = por %p134, %p135
    %p138 = scmp.ne.s32.totalorder %s123, %s137
    %p139 = scmp.eq.s32.totalorder %s71, 0
    %p140 = por %p138, %p139
    %s142 = sadd.s32 %s141, 1
    %p145 = scmp.eq.s32.totalorder %s65, 1
    %p146 = scmp.ne.s32.totalorder %s141, %s143
    %p147 = scmp.eq.s32.totalorder %s65, 0
    %p148 = por %p146, %p147
    %p149 = scmp.ne.s32.totalorder %s141, %s143
    %p150 = scmp.eq.s32.totalorder %s70, 1
    %p151 = por %p149, %p150
    %p152 = scmp.ne.s32.totalorder %s143, %s144
    %p153 = scmp.eq.s32.totalorder %s70, 0
    %p154 = por %p152, %p153
    %p155 = scmp.ne.s32.totalorder %s143, %s144
    %p156 = scmp.eq.s32.totalorder %s71, 1
    %p157 = por %p155, %p156
    %p159 = scmp.ne.s32.totalorder %s144, %s158
    %p160 = scmp.eq.s32.totalorder %s71, 0
    %p161 = por %p159, %p160
    %s163 = sadd.s32 %s162, 1
    %p166 = scmp.eq.s32.totalorder %s65, 1
    %p167 = scmp.ne.s32.totalorder %s162, %s164
    %p168 = scmp.eq.s32.totalorder %s65, 0
    %p169 = por %p167, %p168
    %p170 = scmp.ne.s32.totalorder %s162, %s164
    %p171 = scmp.eq.s32.totalorder %s70, 1
    %p172 = por %p170, %p171
    %p173 = scmp.ne.s32.totalorder %s164, %s165
    %p174 = scmp.eq.s32.totalorder %s70, 0
    %p175 = por %p173, %p174
    %p176 = scmp.ne.s32.totalorder %s164, %s165
    %p177 = scmp.eq.s32.totalorder %s71, 1
    %p178 = por %p176, %p177
    %p180 = scmp.ne.s32.totalorder %s165, %s179
    %p181 = scmp.eq.s32.totalorder %s71, 0
    %p182 = por %p180, %p181
    %s184 = sadd.s32 %s183, 1
    %p187 = scmp.eq.s32.totalorder %s65, 1
    %p188 = scmp.ne.s32.totalorder %s183, %s185
    %p189 = scmp.eq.s32.totalorder %s65, 0
    %p190 = por %p188, %p189
    %p191 = scmp.ne.s32.totalorder %s183, %s185
    %p192 = scmp.eq.s32.totalorder %s70, 1
    %p193 = por %p191, %p192
    %p194 = scmp.ne.s32.totalorder %s185, %s186
    %p195 = scmp.eq.s32.totalorder %s70, 0
    %p196 = por %p194, %p195
    %p197 = scmp.ne.s32.totalorder %s185, %s186
    %p198 = scmp.eq.s32.totalorder %s71, 1
    %p199 = por %p197, %p198
    %p201 = scmp.ne.s32.totalorder %s186, %s200
    %p202 = scmp.eq.s32.totalorder %s71, 0
    %p203 = por %p201, %p202
    %s205 = sadd.s32 %s204, 1
    %p208 = scmp.eq.s32.totalorder %s65, 1
    %p209 = scmp.ne.s32.totalorder %s204, %s206
    %p210 = scmp.eq.s32.totalorder %s65, 0
    %p211 = por %p209, %p210
    %p212 = scmp.ne.s32.totalorder %s204, %s206
    %p213 = scmp.eq.s32.totalorder %s70, 1
    %p214 = por %p212, %p213
    %p215 = scmp.ne.s32.totalorder %s206, %s207
    %p216 = scmp.eq.s32.totalorder %s70, 0
    %p217 = por %p215, %p216
    %p218 = scmp.ne.s32.totalorder %s206, %s207
    %p219 = scmp.eq.s32.totalorder %s71, 1
    %p220 = por %p218, %p219
    %p222 = scmp.ne.s32.totalorder %s207, %s221
    %p223 = scmp.eq.s32.totalorder %s71, 0
    %p224 = por %p222, %p223
    %s226 = sadd.s32 %s225, 1
    %p229 = scmp.eq.s32.totalorder %s65, 1
    %p230 = scmp.ne.s32.totalorder %s225, %s227
    %p231 = scmp.eq.s32.totalorder %s65, 0
    %p232 = por %p230, %p231
    %p233 = scmp.ne.s32.totalorder %s225, %s227
    %p234 = scmp.eq.s32.totalorder %s70, 1
    %p235 = por %p233, %p234
    %p236 = scmp.ne.s32.totalorder %s227, %s228
    %p237 = scmp.eq.s32.totalorder %s70, 0
    %p238 = por %p236, %p237
    %p239 = scmp.ne.s32.totalorder %s227, %s228
    %p240 = scmp.eq.s32.totalorder %s71, 1
    %p241 = por %p239, %p240
    %p243 = scmp.ne.s32.totalorder %s228, %s242
    %p244 = scmp.eq.s32.totalorder %s71, 0
    %p245 = por %p243, %p244
    %s247 = sadd.s32 %s246, 1
    %p250 = scmp.eq.s32.totalorder %s65, 1
    %p251 = scmp.ne.s32.totalorder %s246, %s248
    %p252 = scmp.eq.s32.totalorder %s65, 0
    %p253 = por %p251, %p252
    %p254 = scmp.ne.s32.totalorder %s246, %s248
    %p255 = scmp.eq.s32.totalorder %s70, 1
    %p256 = por %p254, %p255
    %p257 = scmp.ne.s32.totalorder %s248, %s249
    %p258 = scmp.eq.s32.totalorder %s70, 0
    %p259 = por %p257, %p258
    %p260 = scmp.ne.s32.totalorder %s248, %s249
    %p261 = scmp.eq.s32.totalorder %s71, 1
    %p262 = por %p260, %p261
    %p264 = scmp.ne.s32.totalorder %s249, %s263
    %p265 = scmp.eq.s32.totalorder %s71, 0
    %p266 = por %p264, %p265
    %s268 = sadd.s32 %s267, 1
    %p271 = scmp.eq.s32.totalorder %s65, 1
    %p272 = scmp.ne.s32.totalorder %s267, %s269
    %p273 = scmp.eq.s32.totalorder %s65, 0
    %p274 = por %p272, %p273
    %p275 = scmp.ne.s32.totalorder %s267, %s269
    %p276 = scmp.eq.s32.totalorder %s70, 1
    %p277 = por %p275, %p276
    %p278 = scmp.ne.s32.totalorder %s269, %s270
    %p279 = scmp.eq.s32.totalorder %s70, 0
    %p280 = por %p278, %p279
    %p281 = scmp.ne.s32.totalorder %s269, %s270
    %p282 = scmp.eq.s32.totalorder %s71, 1
    %p283 = por %p281, %p282
    %p285 = scmp.ne.s32.totalorder %s270, %s284
    %p286 = scmp.eq.s32.totalorder %s71, 0
    %p287 = por %p285, %p286
    %s289 = sadd.s32 %s288, 1
    %p292 = scmp.eq.s32.totalorder %s65, 1
    %p293 = scmp.ne.s32.totalorder %s288, %s290
    %p294 = scmp.eq.s32.totalorder %s65, 0
    %p295 = por %p293, %p294
    %p296 = scmp.ne.s32.totalorder %s288, %s290
    %p297 = scmp.eq.s32.totalorder %s70, 1
    %p298 = por %p296, %p297
    %p299 = scmp.ne.s32.totalorder %s290, %s291
    %p300 = scmp.eq.s32.totalorder %s70, 0
    %p301 = por %p299, %p300
    %p302 = scmp.ne.s32.totalorder %s290, %s291
    %p303 = scmp.eq.s32.totalorder %s71, 1
    %p304 = por %p302, %p303
    %p306 = scmp.ne.s32.totalorder %s291, %s305
    %p307 = scmp.eq.s32.totalorder %s71, 0
    %p308 = por %p306, %p307
    %s310 = sadd.s32 %s309, 1
    %p313 = scmp.eq.s32.totalorder %s65, 1
    %p314 = scmp.ne.s32.totalorder %s309, %s311
    %p315 = scmp.eq.s32.totalorder %s65, 0
    %p316 = por %p314, %p315
    %p317 = scmp.ne.s32.totalorder %s309, %s311
    %p318 = scmp.eq.s32.totalorder %s70, 1
    %p319 = por %p317, %p318
    %p320 = scmp.ne.s32.totalorder %s311, %s312
    %p321 = scmp.eq.s32.totalorder %s70, 0
    %p322 = por %p320, %p321
    %p323 = scmp.ne.s32.totalorder %s311, %s312
    %p324 = scmp.eq.s32.totalorder %s71, 1
    %p325 = por %p323, %p324
    %p327 = scmp.ne.s32.totalorder %s312, %s326
    %p328 = scmp.eq.s32.totalorder %s71, 0
    %p329 = por %p327, %p328
    %s331 = sadd.s32 %s330, 1
    %p334 = scmp.eq.s32.totalorder %s65, 1
    %p335 = scmp.ne.s32.totalorder %s330, %s332
    %p336 = scmp.eq.s32.totalorder %s65, 0
    %p337 = por %p335, %p336
    %p338 = scmp.ne.s32.totalorder %s330, %s332
    %p339 = scmp.eq.s32.totalorder %s70, 1
    %p340 = por %p338, %p339
    %p341 = scmp.ne.s32.totalorder %s332, %s333
    %p342 = scmp.eq.s32.totalorder %s70, 0
    %p343 = por %p341, %p342
    %p344 = scmp.ne.s32.totalorder %s332, %s333
    %p345 = scmp.eq.s32.totalorder %s71, 1
    %p346 = por %p344, %p345
    %p348 = scmp.ne.s32.totalorder %s333, %s347
    %p349 = scmp.eq.s32.totalorder %s71, 0
    %p350 = por %p348, %p349
    %s352 = sadd.s32 %s351, 1
    %p355 = scmp.eq.s32.totalorder %s65, 1
    %p356 = scmp.ne.s32.totalorder %s351, %s353
    %p357 = scmp.eq.s32.totalorder %s65, 0
    %p358 = por %p356, %p357
    %p359 = scmp.ne.s32.totalorder %s351, %s353
    %p360 = scmp.eq.s32.totalorder %s70, 1
    %p361 = por %p359, %p360
    %p362 = scmp.ne.s32.totalorder %s353, %s354
    %p363 = scmp.eq.s32.totalorder %s70, 0
    %p364 = por %p362, %p363
    %p365 = scmp.ne.s32.totalorder %s353, %s354
    %p366 = scmp.eq.s32.totalorder %s71, 1
    %p367 = por %p365, %p366
    %p369 = scmp.ne.s32.totalorder %s354, %s368
    %p370 = scmp.eq.s32.totalorder %s71, 0
    %p371 = por %p369, %p370
    %s373 = sadd.s32 %s372, 1
    %p376 = scmp.eq.s32.totalorder %s65, 1
    %p377 = scmp.ne.s32.totalorder %s372, %s374
    %p378 = scmp.eq.s32.totalorder %s65, 0
    %p379 = por %p377, %p378
    %p380 = scmp.ne.s32.totalorder %s372, %s374
    %p381 = scmp.eq.s32.totalorder %s70, 1
    %p382 = por %p380, %p381
    %p383 = scmp.ne.s32.totalorder %s374, %s375
    %p384 = scmp.eq.s32.totalorder %s70, 0
    %p385 = por %p383, %p384
    %p386 = scmp.ne.s32.totalorder %s374, %s375
    %p387 = scmp.eq.s32.totalorder %s71, 1
    %p388 = por %p386, %p387
    %p390 = scmp.ne.s32.totalorder %s375, %s389
    %p391 = scmp.eq.s32.totalorder %s71, 0
    %p392 = por %p390, %p391
    %s394 = sadd.s32 %s393, 1
    %p397 = scmp.eq.s32.totalorder %s65, 1
    %p398 = scmp.ne.s32.totalorder %s393, %s395
    %p399 = scmp.eq.s32.totalorder %s65, 0
    %p400 = por %p398, %p399
    %p401 = scmp.ne.s32.totalorder %s393, %s395
    %p402 = scmp.eq.s32.totalorder %s70, 1
    %p403 = por %p401, %p402
    %p404 = scmp.ne.s32.totalorder %s395, %s396
    %p405 = scmp.eq.s32.totalorder %s70, 0
    %p406 = por %p404, %p405
    %p407 = scmp.ne.s32.totalorder %s395, %s396
    %p408 = scmp.eq.s32.totalorder %s71, 1
    %p409 = por %p407, %p408
    %p411 = scmp.ne.s32.totalorder %s396, %s410
    %p412 = scmp.eq.s32.totalorder %s71, 0
    %p413 = por %p411, %p412
    %s415 = sadd.s32 %s414, 1
    %p418 = scmp.eq.s32.totalorder %s65, 1
    %p419 = scmp.ne.s32.totalorder %s414, %s416
    %p420 = scmp.eq.s32.totalorder %s65, 0
    %p421 = por %p419, %p420
    %p422 = scmp.ne.s32.totalorder %s414, %s416
    %p423 = scmp.eq.s32.totalorder %s70, 1
    %p424 = por %p422, %p423
    %p425 = scmp.ne.s32.totalorder %s416, %s417
    %p426 = scmp.eq.s32.totalorder %s70, 0
    %p427 = por %p425, %p426
    %p428 = scmp.ne.s32.totalorder %s416, %s417
    %p429 = scmp.eq.s32.totalorder %s71, 1
    %p430 = por %p428, %p429
    %p432 = scmp.ne.s32.totalorder %s417, %s431
    %p433 = scmp.eq.s32.totalorder %s71, 0
    %p434 = por %p432, %p433
    %s436 = sadd.s32 %s435, 1
    %p439 = scmp.eq.s32.totalorder %s65, 1
    %p440 = scmp.ne.s32.totalorder %s435, %s437
    %p441 = scmp.eq.s32.totalorder %s65, 0
    %p442 = por %p440, %p441
    %p443 = scmp.ne.s32.totalorder %s435, %s437
    %p444 = scmp.eq.s32.totalorder %s70, 1
    %p445 = por %p443, %p444
    %p446 = scmp.ne.s32.totalorder %s437, %s438
    %p447 = scmp.eq.s32.totalorder %s70, 0
    %p448 = por %p446, %p447
    %p449 = scmp.ne.s32.totalorder %s437, %s438
    %p450 = scmp.eq.s32.totalorder %s71, 1
    %p451 = por %p449, %p450
    %p453 = scmp.ne.s32.totalorder %s438, %s452
    %p454 = scmp.eq.s32.totalorder %s71, 0
    %p455 = por %p453, %p454
    %s457 = sadd.s32 %s456, 1
    %p460 = scmp.eq.s32.totalorder %s65, 1
    %p461 = scmp.ne.s32.totalorder %s456, %s458
    %p462 = scmp.eq.s32.totalorder %s65, 0
    %p463 = por %p461, %p462
    %p464 = scmp.ne.s32.totalorder %s456, %s458
    %p465 = scmp.eq.s32.totalorder %s70, 1
    %p466 = por %p464, %p465
    %p467 = scmp.ne.s32.totalorder %s458, %s459
    %p468 = scmp.eq.s32.totalorder %s70, 0
    %p469 = por %p467, %p468
    %p470 = scmp.ne.s32.totalorder %s458, %s459
    %p471 = scmp.eq.s32.totalorder %s71, 1
    %p472 = por %p470, %p471
    %p474 = scmp.ne.s32.totalorder %s459, %s473
    %p475 = scmp.eq.s32.totalorder %s71, 0
    %p476 = por %p474, %p475
    %s478 = sadd.s32 %s477, 1
    %p481 = scmp.eq.s32.totalorder %s65, 1
    %p482 = scmp.ne.s32.totalorder %s477, %s479
    %p483 = scmp.eq.s32.totalorder %s65, 0
    %p484 = por %p482, %p483
    %p485 = scmp.ne.s32.totalorder %s477, %s479
    %p486 = scmp.eq.s32.totalorder %s70, 1
    %p487 = por %p485, %p486
    %p488 = scmp.ne.s32.totalorder %s479, %s480
    %p489 = scmp.eq.s32.totalorder %s70, 0
    %p490 = por %p488, %p489
    %p491 = scmp.ne.s32.totalorder %s479, %s480
    %p492 = scmp.eq.s32.totalorder %s71, 1
    %p493 = por %p491, %p492
    %p495 = scmp.ne.s32.totalorder %s480, %s494
    %p496 = scmp.eq.s32.totalorder %s71, 0
    %p497 = por %p495, %p496
    %s499 = sadd.s32 %s498, 1
    %p502 = scmp.eq.s32.totalorder %s65, 1
    %p503 = scmp.ne.s32.totalorder %s498, %s500
    %p504 = scmp.eq.s32.totalorder %s65, 0
    %p505 = por %p503, %p504
    %p506 = scmp.ne.s32.totalorder %s498, %s500
    %p507 = scmp.eq.s32.totalorder %s70, 1
    %p508 = por %p506, %p507
    %p509 = scmp.ne.s32.totalorder %s500, %s501
    %p510 = scmp.eq.s32.totalorder %s70, 0
    %p511 = por %p509, %p510
    %p512 = scmp.ne.s32.totalorder %s500, %s501
    %p513 = scmp.eq.s32.totalorder %s71, 1
    %p514 = por %p512, %p513
    %p516 = scmp.ne.s32.totalorder %s501, %s515
    %p517 = scmp.eq.s32.totalorder %s71, 0
    %p518 = por %p516, %p517
    %s520 = sadd.s32 %s519, 1
    %p523 = scmp.eq.s32.totalorder %s65, 1
    %p524 = scmp.ne.s32.totalorder %s519, %s521
    %p525 = scmp.eq.s32.totalorder %s65, 0
    %p526 = por %p524, %p525
    %p527 = scmp.ne.s32.totalorder %s519, %s521
    %p528 = scmp.eq.s32.totalorder %s70, 1
    %p529 = por %p527, %p528
    %p530 = scmp.ne.s32.totalorder %s521, %s522
    %p531 = scmp.eq.s32.totalorder %s70, 0
    %p532 = por %p530, %p531
    %p533 = scmp.ne.s32.totalorder %s521, %s522
    %p534 = scmp.eq.s32.totalorder %s71, 1
    %p535 = por %p533, %p534
    %p537 = scmp.ne.s32.totalorder %s522, %s536
    %p538 = scmp.eq.s32.totalorder %s71, 0
    %p539 = por %p537, %p538
    %s541 = sadd.s32 %s540, 1
    %p544 = scmp.eq.s32.totalorder %s65, 1
    %p545 = scmp.ne.s32.totalorder %s540, %s542
    %p546 = scmp.eq.s32.totalorder %s65, 0
    %p547 = por %p545, %p546
    %p548 = scmp.ne.s32.totalorder %s540, %s542
    %p549 = scmp.eq.s32.totalorder %s70, 1
    %p550 = por %p548, %p549
    %p551 = scmp.ne.s32.totalorder %s542, %s543
    %p552 = scmp.eq.s32.totalorder %s70, 0
    %p553 = por %p551, %p552
    %p554 = scmp.ne.s32.totalorder %s542, %s543
    %p555 = scmp.eq.s32.totalorder %s71, 1
    %p556 = por %p554, %p555
    %p558 = scmp.ne.s32.totalorder %s543, %s557
    %p559 = scmp.eq.s32.totalorder %s71, 0
    %p560 = por %p558, %p559
    %s562 = sadd.s32 %s561, 1
    %p565 = scmp.eq.s32.totalorder %s65, 1
    %p566 = scmp.ne.s32.totalorder %s561, %s563
    %p567 = scmp.eq.s32.totalorder %s65, 0
    %p568 = por %p566, %p567
    %p569 = scmp.ne.s32.totalorder %s561, %s563
    %p570 = scmp.eq.s32.totalorder %s70, 1
    %p571 = por %p569, %p570
    %p572 = scmp.ne.s32.totalorder %s563, %s564
    %p573 = scmp.eq.s32.totalorder %s70, 0
    %p574 = por %p572, %p573
    %p575 = scmp.ne.s32.totalorder %s563, %s564
    %p576 = scmp.eq.s32.totalorder %s71, 1
    %p577 = por %p575, %p576
    %p579 = scmp.ne.s32.totalorder %s564, %s578
    %p580 = scmp.eq.s32.totalorder %s71, 0
    %p581 = por %p579, %p580
    %s583 = sadd.s32 %s582, 1
    %p586 = scmp.eq.s32.totalorder %s65, 1
    %p587 = scmp.ne.s32.totalorder %s582, %s584
    %p588 = scmp.eq.s32.totalorder %s65, 0
    %p589 = por %p587, %p588
    %p590 = scmp.ne.s32.totalorder %s582, %s584
    %p591 = scmp.eq.s32.totalorder %s70, 1
    %p592 = por %p590, %p591
    %p593 = scmp.ne.s32.totalorder %s584, %s585
    %p594 = scmp.eq.s32.totalorder %s70, 0
    %p595 = por %p593, %p594
    %p596 = scmp.ne.s32.totalorder %s584, %s585
    %p597 = scmp.eq.s32.totalorder %s71, 1
    %p598 = por %p596, %p597
    %p600 = scmp.ne.s32.totalorder %s585, %s599
    %p601 = scmp.eq.s32.totalorder %s71, 0
    %p602 = por %p600, %p601
    %s604 = sadd.s32 %s603, 1
    %p607 = scmp.eq.s32.totalorder %s65, 1
    %p608 = scmp.ne.s32.totalorder %s603, %s605
    %p609 = scmp.eq.s32.totalorder %s65, 0
    %p610 = por %p608, %p609
    %p611 = scmp.ne.s32.totalorder %s603, %s605
    %p612 = scmp.eq.s32.totalorder %s70, 1
    %p613 = por %p611, %p612
    %p614 = scmp.ne.s32.totalorder %s605, %s606
    %p615 = scmp.eq.s32.totalorder %s70, 0
    %p616 = por %p614, %p615
    %p617 = scmp.ne.s32.totalorder %s605, %s606
    %p618 = scmp.eq.s32.totalorder %s71, 1
    %p619 = por %p617, %p618
    %p621 = scmp.ne.s32.totalorder %s606, %s620
    %p622 = scmp.eq.s32.totalorder %s71, 0
    %p623 = por %p621, %p622
    %s625 = sadd.s32 %s624, 1
    %p628 = scmp.eq.s32.totalorder %s65, 1
    %p629 = scmp.ne.s32.totalorder %s624, %s626
    %p630 = scmp.eq.s32.totalorder %s65, 0
    %p631 = por %p629, %p630
    %p632 = scmp.ne.s32.totalorder %s624, %s626
    %p633 = scmp.eq.s32.totalorder %s70, 1
    %p634 = por %p632, %p633
    %p635 = scmp.ne.s32.totalorder %s626, %s627
    %p636 = scmp.eq.s32.totalorder %s70, 0
    %p637 = por %p635, %p636
    %p638 = scmp.ne.s32.totalorder %s626, %s627
    %p639 = scmp.eq.s32.totalorder %s71, 1
    %p640 = por %p638, %p639
    %p642 = scmp.ne.s32.totalorder %s627, %s641
    %p643 = scmp.eq.s32.totalorder %s71, 0
    %p644 = por %p642, %p643
    %s646 = sadd.s32 %s645, 1
    %p649 = scmp.eq.s32.totalorder %s65, 1
    %p650 = scmp.ne.s32.totalorder %s645, %s647
    %p651 = scmp.eq.s32.totalorder %s65, 0
    %p652 = por %p650, %p651
    %p653 = scmp.ne.s32.totalorder %s645, %s647
    %p654 = scmp.eq.s32.totalorder %s70, 1
    %p655 = por %p653, %p654
    %p656 = scmp.ne.s32.totalorder %s647, %s648
    %p657 = scmp.eq.s32.totalorder %s70, 0
    %p658 = por %p656, %p657
    %p659 = scmp.ne.s32.totalorder %s647, %s648
    %p660 = scmp.eq.s32.totalorder %s71, 1
    %p661 = por %p659, %p660
    %p663 = scmp.ne.s32.totalorder %s648, %s662
    %p664 = scmp.eq.s32.totalorder %s71, 0
    %p665 = por %p663, %p664
    %s667 = sadd.s32 %s666, 1
    %p670 = scmp.eq.s32.totalorder %s65, 1
    %p671 = scmp.ne.s32.totalorder %s666, %s668
    %p672 = scmp.eq.s32.totalorder %s65, 0
    %p673 = por %p671, %p672
    %p674 = scmp.ne.s32.totalorder %s666, %s668
    %p675 = scmp.eq.s32.totalorder %s70, 1
    %p676 = por %p674, %p675
    %p677 = scmp.ne.s32.totalorder %s668, %s669
    %p678 = scmp.eq.s32.totalorder %s70, 0
    %p679 = por %p677, %p678
    %p680 = scmp.ne.s32.totalorder %s668, %s669
    %p681 = scmp.eq.s32.totalorder %s71, 1
    %p682 = por %p680, %p681
    %p684 = scmp.ne.s32.totalorder %s669, %s683
    %p685 = scmp.eq.s32.totalorder %s71, 0
    %p686 = por %p684, %p685
    %s687 = ssub.s32 %s65, %s72
    %p688 = scmp.eq.s32.totalorder %s687, 0
    %s690 = sadd.s32 %s689, 1
    %s691 = scalar_select %p688, %s689, %s690
    %p694 = pneg %p688
    %p695 = scmp.eq.s32.totalorder %s65, 1
    %p696 = por %p694, %p695
    %p697 = scmp.ne.s32.totalorder %s689, %s692
    %p698 = scmp.eq.s32.totalorder %s65, 0
    %p699 = por %p697, %p698
    %p700 = scmp.ne.s32.totalorder %s689, %s692
    %p701 = scmp.eq.s32.totalorder %s70, 1
    %p702 = por %p700, %p701
    %p703 = scmp.ne.s32.totalorder %s692, %s693
    %p704 = scmp.eq.s32.totalorder %s70, 0
    %p705 = por %p703, %p704
    %p706 = scmp.ne.s32.totalorder %s692, %s693
    %p707 = scmp.eq.s32.totalorder %s71, 1
    %p708 = por %p706, %p707
    %p710 = scmp.ne.s32.totalorder %s693, %s709
    %p711 = scmp.eq.s32.totalorder %s71, 0
    %p712 = por %p710, %p711
    %p713 = scmp.le.s32.totalorder 1, %s65
    %p714 = scmp.lt.s32.totalorder %s65, 3
    %p715 = pnand %p713, %p714
    %p716 = pneg %p715
    // Predicated region
    $region9: #{branch12_forward.1} parent=5 // pred_check
      _
    $region10: #{branch12_forward.1} parent=5 // pred_check_branch
      %718 = sbr.rel (%p715) target = $region12
    $region11: #{branch12_forward.1} parent=5 // pred_region
      %s719 = ssub.s32 %s65, 1
      // Predicated region
      $region13: #{branch12_forward.1} parent=11 // pred_check
        %p720 = pneg %p112
      $region14: #{branch12_forward.1} parent=11 // pred_check_branch
        %722 = sbr.rel (%p720) target = $region16
      $region15: #{branch12_forward.1} parent=11 // pred_region
        _
      $region16: #{branch12_forward.1} parent=11 // pred_fallthru
        _
      // Predicated region
      $region17: #{branch12_forward.1} parent=11 // pred_check
        %p723 = pneg %p133
      $region18: #{branch12_forward.1} parent=11 // pred_check_branch
        %725 = sbr.rel (%p723) target = $region20
      $region19: #{branch12_forward.1} parent=11 // pred_region
        _
      $region20: #{branch12_forward.1} parent=11 // pred_fallthru
        _
      // Predicated region
      $region21: #{branch12_forward.1} parent=11 // pred_check
        %p726 = pneg %p154
      $region22: #{branch12_forward.1} parent=11 // pred_check_branch
        %728 = sbr.rel (%p726) target = $region24
      $region23: #{branch12_forward.1} parent=11 // pred_region
        _
      $region24: #{branch12_forward.1} parent=11 // pred_fallthru
        _
      // Predicated region
      $region25: #{branch12_forward.1} parent=11 // pred_check
        %p729 = pneg %p175
      $region26: #{branch12_forward.1} parent=11 // pred_check_branch
        %731 = sbr.rel (%p729) target = $region28
      $region27: #{branch12_forward.1} parent=11 // pred_region
        _
      $region28: #{branch12_forward.1} parent=11 // pred_fallthru
        _
      // Predicated region
      $region29: #{branch12_forward.1} parent=11 // pred_check
        %p732 = pneg %p196
      $region30: #{branch12_forward.1} parent=11 // pred_check_branch
        %734 = sbr.rel (%p732) target = $region32
      $region31: #{branch12_forward.1} parent=11 // pred_region
        _
      $region32: #{branch12_forward.1} parent=11 // pred_fallthru
        _
      // Predicated region
      $region33: #{branch12_forward.1} parent=11 // pred_check
        %p735 = pneg %p217
      $region34: #{branch12_forward.1} parent=11 // pred_check_branch
        %737 = sbr.rel (%p735) target = $region36
      $region35: #{branch12_forward.1} parent=11 // pred_region
        _
      $region36: #{branch12_forward.1} parent=11 // pred_fallthru
        _
      // Predicated region
      $region37: #{branch12_forward.1} parent=11 // pred_check
        %p738 = pneg %p238
      $region38: #{branch12_forward.1} parent=11 // pred_check_branch
        %740 = sbr.rel (%p738) target = $region40
      $region39: #{branch12_forward.1} parent=11 // pred_region
        _
      $region40: #{branch12_forward.1} parent=11 // pred_fallthru
        _
      // Predicated region
      $region41: #{branch12_forward.1} parent=11 // pred_check
        %p741 = pneg %p259
      $region42: #{branch12_forward.1} parent=11 // pred_check_branch
        %743 = sbr.rel (%p741) target = $region44
      $region43: #{branch12_forward.1} parent=11 // pred_region
        _
      $region44: #{branch12_forward.1} parent=11 // pred_fallthru
        _
      // Predicated region
      $region45: #{branch12_forward.1} parent=11 // pred_check
        %p744 = pneg %p280
      $region46: #{branch12_forward.1} parent=11 // pred_check_branch
        %746 = sbr.rel (%p744) target = $region48
      $region47: #{branch12_forward.1} parent=11 // pred_region
        _
      $region48: #{branch12_forward.1} parent=11 // pred_fallthru
        _
      // Predicated region
      $region49: #{branch12_forward.1} parent=11 // pred_check
        %p747 = pneg %p301
      $region50: #{branch12_forward.1} parent=11 // pred_check_branch
        %749 = sbr.rel (%p747) target = $region52
      $region51: #{branch12_forward.1} parent=11 // pred_region
        _
      $region52: #{branch12_forward.1} parent=11 // pred_fallthru
        _
      // Predicated region
      $region53: #{branch12_forward.1} parent=11 // pred_check
        %p750 = pneg %p322
      $region54: #{branch12_forward.1} parent=11 // pred_check_branch
        %752 = sbr.rel (%p750) target = $region56
      $region55: #{branch12_forward.1} parent=11 // pred_region
        _
      $region56: #{branch12_forward.1} parent=11 // pred_fallthru
        _
      // Predicated region
      $region57: #{branch12_forward.1} parent=11 // pred_check
        %p753 = pneg %p343
      $region58: #{branch12_forward.1} parent=11 // pred_check_branch
        %755 = sbr.rel (%p753) target = $region60
      $region59: #{branch12_forward.1} parent=11 // pred_region
        _
      $region60: #{branch12_forward.1} parent=11 // pred_fallthru
        _
      // Predicated region
      $region61: #{branch12_forward.1} parent=11 // pred_check
        %p756 = pneg %p364
      $region62: #{branch12_forward.1} parent=11 // pred_check_branch
        %758 = sbr.rel (%p756) target = $region64
      $region63: #{branch12_forward.1} parent=11 // pred_region
        _
      $region64: #{branch12_forward.1} parent=11 // pred_fallthru
        _
      // Predicated region
      $region65: #{branch12_forward.1} parent=11 // pred_check
        %p759 = pneg %p385
      $region66: #{branch12_forward.1} parent=11 // pred_check_branch
        %761 = sbr.rel (%p759) target = $region68
      $region67: #{branch12_forward.1} parent=11 // pred_region
        _
      $region68: #{branch12_forward.1} parent=11 // pred_fallthru
        _
      // Predicated region
      $region69: #{branch12_forward.1} parent=11 // pred_check
        %p762 = pneg %p406
      $region70: #{branch12_forward.1} parent=11 // pred_check_branch
        %764 = sbr.rel (%p762) target = $region72
      $region71: #{branch12_forward.1} parent=11 // pred_region
        _
      $region72: #{branch12_forward.1} parent=11 // pred_fallthru
        _
      // Predicated region
      $region73: #{branch12_forward.1} parent=11 // pred_check
        %p765 = pneg %p427
      $region74: #{branch12_forward.1} parent=11 // pred_check_branch
        %767 = sbr.rel (%p765) target = $region76
      $region75: #{branch12_forward.1} parent=11 // pred_region
        _
      $region76: #{branch12_forward.1} parent=11 // pred_fallthru
        _
      // Predicated region
      $region77: #{branch12_forward.1} parent=11 // pred_check
        %p768 = pneg %p448
      $region78: #{branch12_forward.1} parent=11 // pred_check_branch
        %770 = sbr.rel (%p768) target = $region80
      $region79: #{branch12_forward.1} parent=11 // pred_region
        _
      $region80: #{branch12_forward.1} parent=11 // pred_fallthru
        _
      // Predicated region
      $region81: #{branch12_forward.1} parent=11 // pred_check
        %p771 = pneg %p469
      $region82: #{branch12_forward.1} parent=11 // pred_check_branch
        %773 = sbr.rel (%p771) target = $region84
      $region83: #{branch12_forward.1} parent=11 // pred_region
        _
      $region84: #{branch12_forward.1} parent=11 // pred_fallthru
        _
      // Predicated region
      $region85: #{branch12_forward.1} parent=11 // pred_check
        %p774 = pneg %p490
      $region86: #{branch12_forward.1} parent=11 // pred_check_branch
        %776 = sbr.rel (%p774) target = $region88
      $region87: #{branch12_forward.1} parent=11 // pred_region
        _
      $region88: #{branch12_forward.1} parent=11 // pred_fallthru
        _
      // Predicated region
      $region89: #{branch12_forward.1} parent=11 // pred_check
        %p777 = pneg %p511
      $region90: #{branch12_forward.1} parent=11 // pred_check_branch
        %779 = sbr.rel (%p777) target = $region92
      $region91: #{branch12_forward.1} parent=11 // pred_region
        _
      $region92: #{branch12_forward.1} parent=11 // pred_fallthru
        _
      // Predicated region
      $region93: #{branch12_forward.1} parent=11 // pred_check
        %p780 = pneg %p532
      $region94: #{branch12_forward.1} parent=11 // pred_check_branch
        %782 = sbr.rel (%p780) target = $region96
      $region95: #{branch12_forward.1} parent=11 // pred_region
        _
      $region96: #{branch12_forward.1} parent=11 // pred_fallthru
        _
      // Predicated region
      $region97: #{branch12_forward.1} parent=11 // pred_check
        %p783 = pneg %p553
      $region98: #{branch12_forward.1} parent=11 // pred_check_branch
        %785 = sbr.rel (%p783) target = $region100
      $region99: #{branch12_forward.1} parent=11 // pred_region
        _
      $region100: #{branch12_forward.1} parent=11 // pred_fallthru
        _
      // Predicated region
      $region101: #{branch12_forward.1} parent=11 // pred_check
        %p786 = pneg %p574
      $region102: #{branch12_forward.1} parent=11 // pred_check_branch
        %788 = sbr.rel (%p786) target = $region104
      $region103: #{branch12_forward.1} parent=11 // pred_region
        _
      $region104: #{branch12_forward.1} parent=11 // pred_fallthru
        _
      // Predicated region
      $region105: #{branch12_forward.1} parent=11 // pred_check
        %p789 = pneg %p595
      $region106: #{branch12_forward.1} parent=11 // pred_check_branch
        %791 = sbr.rel (%p789) target = $region108
      $region107: #{branch12_forward.1} parent=11 // pred_region
        _
      $region108: #{branch12_forward.1} parent=11 // pred_fallthru
        _
      // Predicated region
      $region109: #{branch12_forward.1} parent=11 // pred_check
        %p792 = pneg %p616
      $region110: #{branch12_forward.1} parent=11 // pred_check_branch
        %794 = sbr.rel (%p792) target = $region112
      $region111: #{branch12_forward.1} parent=11 // pred_region
        _
      $region112: #{branch12_forward.1} parent=11 // pred_fallthru
        _
      // Predicated region
      $region113: #{branch12_forward.1} parent=11 // pred_check
        %p795 = pneg %p637
      $region114: #{branch12_forward.1} parent=11 // pred_check_branch
        %797 = sbr.rel (%p795) target = $region116
      $region115: #{branch12_forward.1} parent=11 // pred_region
        _
      $region116: #{branch12_forward.1} parent=11 // pred_fallthru
        _
      // Predicated region
      $region117: #{branch12_forward.1} parent=11 // pred_check
        %p798 = pneg %p658
      $region118: #{branch12_forward.1} parent=11 // pred_check_branch
        %800 = sbr.rel (%p798) target = $region120
      $region119: #{branch12_forward.1} parent=11 // pred_region
        _
      $region120: #{branch12_forward.1} parent=11 // pred_fallthru
        _
      // Predicated region
      $region121: #{branch12_forward.1} parent=11 // pred_check
        %p801 = pneg %p679
      $region122: #{branch12_forward.1} parent=11 // pred_check_branch
        %803 = sbr.rel (%p801) target = $region124
      $region123: #{branch12_forward.1} parent=11 // pred_region
        _
      $region124: #{branch12_forward.1} parent=11 // pred_fallthru
        _
    $region12: #{branch12_forward.1} parent=5 // pred_fallthru
      _
    %p804 = scmp.lt.s32.totalorder %s65, 2
    // Predicated region
    $region125: #{branch12_forward.1} parent=5 // pred_check
      %p805 = pneg %p804
    $region126: #{branch12_forward.1} parent=5 // pred_check_branch
      %807 = sbr.rel (%p805) target = $region128
    $region127: #{branch12_forward.1} parent=5 // pred_region
      // Predicated region
      $region129: #{branch12_forward.1} parent=127 // pred_check
        %p808 = pneg %p85
      $region130: #{branch12_forward.1} parent=127 // pred_check_branch
        %810 = sbr.rel (%p808) target = $region132
      $region131: #{branch12_forward.1} parent=127 // pred_region
        %p811 = scmp.lt.s32.totalorder %s65, 1
        %s812 = scalar_select %p811, %s65, 1
        %s813 = smul.addr %s812, 2
        %s814 = smul.addr %s813, 4
        %s815 = scalar_lea.vmem %s1, %s814
      $region132: #{branch12_forward.1} parent=127 // pred_fallthru
        _
    $region128: #{branch12_forward.1} parent=5 // pred_fallthru
      _
    %p816 = scmp.le.s32.totalorder 1, %s65
    %p817 = scmp.lt.s32.totalorder %s65, 3
    %p818 = pnand %p816, %p817
    %p819 = pneg %p818
    // Predicated region
    $region133: #{branch12_forward.1} parent=5 // pred_check
      _
    $region134: #{branch12_forward.1} parent=5 // pred_check_branch
      %821 = sbr.rel (%p818) target = $region136
    $region135: #{branch12_forward.1} parent=5 // pred_region
      %s822 = ssub.s32 %s65, 1
      %p823 = scmp.lt.s32.totalorder %s70, 1
      %s824 = scalar_select %p823, %s70, 1
      %s825 = smul.addr %s824, 2
      %s826 = smul.addr %s825, 4
      %s827 = scalar_lea.vmem %s1, %s826
      %p828 = pneg %p91
      %p829 = pneg %p88
      %p830 = pneg %p112
      %p831 = pneg %p109
      %p832 = pneg %p133
      %p833 = pneg %p130
      %p834 = pneg %p154
      %p835 = pneg %p151
      %p836 = pneg %p175
      %p837 = pneg %p172
      %p838 = pneg %p196
      %p839 = pneg %p193
      %p840 = pneg %p217
      %p841 = pneg %p214
      %p842 = pneg %p238
      %p843 = pneg %p235
      %p844 = pneg %p259
      %p845 = pneg %p256
      %p846 = pneg %p280
      %p847 = pneg %p277
      %p848 = pneg %p301
      %p849 = pneg %p298
      %p850 = pneg %p322
      %p851 = pneg %p319
      %p852 = pneg %p343
      %p853 = pneg %p340
      %p854 = pneg %p364
      %p855 = pneg %p361
      %p856 = pneg %p385
      %p857 = pneg %p382
      %p858 = pneg %p406
      %p859 = pneg %p403
      %p860 = pneg %p427
      %p861 = pneg %p424
      %p862 = pneg %p448
      %p863 = pneg %p445
      %p864 = pneg %p469
      %p865 = pneg %p466
      %p866 = pneg %p490
      %p867 = pneg %p487
      %p868 = pneg %p511
      %p869 = pneg %p508
      %p870 = pneg %p532
      %p871 = pneg %p529
      %p872 = pneg %p553
      %p873 = pneg %p550
      %p874 = pneg %p574
      %p875 = pneg %p571
      %p876 = pneg %p595
      %p877 = pneg %p592
      %p878 = pneg %p616
      %p879 = pneg %p613
      %p880 = pneg %p637
      %p881 = pneg %p634
      %p882 = pneg %p658
      %p883 = pneg %p655
      %p884 = pneg %p679
      %p885 = pneg %p676
      %p886 = pneg %p705
      %p887 = pneg %p702
      %p888 = scmp.lt.s32.totalorder %s70, 1
      %s889 = scalar_select %p888, %s70, 1
      %s890 = smul.addr %s889, 2
      %s891 = smul.addr %s890, 4
      %s892 = scalar_lea.vmem %s59, %s891
      %p893 = scmp.lt.s32.totalorder %s70, 1
      %s894 = scalar_select %p893, %s70, 1
      %s895 = smul.addr %s894, 2
      %s896 = smul.addr %s895, 4
      %s897 = scalar_lea.vmem %s1, %s896
      %p898 = scmp.lt.s32.totalorder %s70, 1
      %s899 = scalar_select %p898, %s70, 1
      %s900 = smul.addr %s899, 2
      %s901 = smul.addr %s900, 4
      %s902 = scalar_lea.vmem %s59, %s901
      %v903 = vld [vmem:[%s897] sm:$0xff]
      %v904 = vld [vmem:[%s3] sm:$0xf]
      %v905 = vld [vmem:[%s5] sm:$0xf]
      %907 = vset.pattern.permute.xlu0 0
      %908 = vperm.xlu0 %907, %v905
      %v909 = vpop.permute.xlu0 %908
      %912 = vst [vmem:[#allocation1] ss:$2 sm:$0xff] %v903
      %v913 = vld.sshfl [vmem:[#allocation1] sm:$0xff pattern:$0x75316420]
      %v914 = vld.sshfl [vmem:[#allocation1 + $0x8] sm:$0xff pattern:$0x75316420]
      %vm915 = vcmask 31744
      %v917 = vsel %vm915, %v904, 0
      %vm919 = vcmask 1043456
      %v920 = vsel %vm919, %v913, 0
      %v922 = vsel %vm919, %v914, 0
      %924 = vmatpush.msra.mxu0 0.0
      %925 = vmatpush.msra.mxu0 0.0
      %926 = vmatpush.msra.mxu0 0.0
      %927 = vmatpush.msra.mxu0 0.0
      %928 = vmatpush.msra.mxu0 0.0
      %929 = vmatpush.msra.mxu0 0.0
      %930 = vmatpush.msra.mxu0 0.0
      %931 = vmatpush.msra.mxu0 0.0
      %932 = vmatpush.msra.mxu0 0.0
      %933 = vmatpush.msra.mxu0 0.0
      %934 = vmatpush.msra.mxu0 0.0
      %935 = vmatpush.msra.mxu0 0.0
      %936 = vmatpush.msra.mxu0 0.0
      %937 = vmatpush.msra.mxu0 0.0
      %938 = vmatpush.msra.mxu0 0.0
      %939 = vmatpush.msra.mxu0 %v920
      %940 = vmatmul.f32.gmra.mxu0 %v917
      %v941 = vpop.f32.mrf.mxu0
      %v942 = vadd.f32 %v909, %v941
      %943 = vdwg.mxu0
      %944 = vmatpush.msra.mxu0 0.0
      %945 = vmatpush.msra.mxu0 0.0
      %946 = vmatpush.msra.mxu0 0.0
      %947 = vmatpush.msra.mxu0 0.0
      %948 = vmatpush.msra.mxu0 0.0
      %949 = vmatpush.msra.mxu0 0.0
      %950 = vmatpush.msra.mxu0 0.0
      %951 = vmatpush.msra.mxu0 0.0
      %952 = vmatpush.msra.mxu0 0.0
      %953 = vmatpush.msra.mxu0 0.0
      %954 = vmatpush.msra.mxu0 0.0
      %955 = vmatpush.msra.mxu0 0.0
      %956 = vmatpush.msra.mxu0 0.0
      %957 = vmatpush.msra.mxu0 0.0
      %958 = vmatpush.msra.mxu0 0.0
      %959 = vmatpush.msra.mxu0 %v922
      %960 = vmatmul.f32.gmra.mxu0 %v917
      %v961 = vpop.f32.mrf.mxu0
      %v962 = vadd.f32 %v909, %v961
      %963 = vdwg.mxu0
      %v964 = vld [vmem:[%s7] sm:$0xf]
      %v965 = vld [vmem:[%s9] sm:$0xf]
      %v966 = vld [vmem:[%s11] sm:$0xf]
      %v967 = vld [vmem:[%s13] sm:$0xf]
      %v968 = vld [vmem:[%s15] sm:$0x1]
      %v969 = vld [vmem:[%s17] sm:$0x3]
      %v970 = vld [vmem:[%s19] sm:$0x3]
      %v971 = vld [vmem:[%s21] sm:$0xf]
      %v972 = vld [vmem:[%s23] sm:$0xf]
      %v973 = vld [vmem:[%s25] sm:$0xf]
      %v974 = vld [vmem:[%s27] sm:$0xf]
      %v975 = vld [vmem:[%s29] sm:$0xf]
      %v976 = vlaneseq
      %v977 = vand.u32 %v976, 127
      %v978 = vadd.s32 %v977, 128
      %979 = vst [vmem:[#allocation1] ss:$2 sm:$0xff] %v903
      %v980 = vld.sshfl [vmem:[#allocation1] sm:$0xff pattern:$0x75316420]
      %v981 = vld.sshfl [vmem:[#allocation1 + $0x8] sm:$0xff pattern:$0x75316420]
      %v983 = vsel %vm915, %v964, 0
      %v985 = vsel %vm919, %v980, 0
      %v987 = vsel %vm919, %v981, 0
      %989 = vmatpush.msra.mxu0 0.0
      %990 = vmatpush.msra.mxu0 0.0
      %991 = vmatpush.msra.mxu0 0.0
      %992 = vmatpush.msra.mxu0 0.0
      %993 = vmatpush.msra.mxu0 0.0
      %994 = vmatpush.msra.mxu0 0.0
      %995 = vmatpush.msra.mxu0 0.0
      %996 = vmatpush.msra.mxu0 0.0
      %997 = vmatpush.msra.mxu0 0.0
      %998 = vmatpush.msra.mxu0 0.0
      %999 = vmatpush.msra.mxu0 0.0
      %1000 = vmatpush.msra.mxu0 0.0
      %1001 = vmatpush.msra.mxu0 0.0
      %1002 = vmatpush.msra.mxu0 0.0
      %1003 = vmatpush.msra.mxu0 0.0
      %1004 = vmatpush.msra.mxu0 %v985
      %1005 = vmatmul.f32.gmra.mxu0 %v983
      %v1006 = vpop.f32.mrf.mxu0
      %v1007 = vadd.f32 0.0, %v1006
      %1008 = vdwg.mxu0
      %1009 = vmatpush.msra.mxu0 0.0
      %1010 = vmatpush.msra.mxu0 0.0
      %1011 = vmatpush.msra.mxu0 0.0
      %1012 = vmatpush.msra.mxu0 0.0
      %1013 = vmatpush.msra.mxu0 0.0
      %1014 = vmatpush.msra.mxu0 0.0
      %1015 = vmatpush.msra.mxu0 0.0
      %1016 = vmatpush.msra.mxu0 0.0
      %1017 = vmatpush.msra.mxu0 0.0
      %1018 = vmatpush.msra.mxu0 0.0
      %1019 = vmatpush.msra.mxu0 0.0
      %1020 = vmatpush.msra.mxu0 0.0
      %1021 = vmatpush.msra.mxu0 0.0
      %1022 = vmatpush.msra.mxu0 0.0
      %1023 = vmatpush.msra.mxu0 0.0
      %1024 = vmatpush.msra.mxu0 %v987
      %1025 = vmatmul.f32.gmra.mxu0 %v983
      %v1026 = vpop.f32.mrf.mxu0
      %v1027 = vadd.f32 0.0, %v1026
      %1028 = vdwg.mxu0
      %1029 = vst [vmem:[#allocation1] ss:$2 sm:$0xff] %v903
      %v1030 = vld.sshfl [vmem:[#allocation1] sm:$0xff pattern:$0x75316420]
      %v1031 = vld.sshfl [vmem:[#allocation1 + $0x8] sm:$0xff pattern:$0x75316420]
      %v1033 = vsel %vm915, %v965, 0
      %v1035 = vsel %vm919, %v1030, 0
      %v1037 = vsel %vm919, %v1031, 0
      %1039 = vmatpush.msra.mxu0 0.0
      %1040 = vmatpush.msra.mxu0 0.0
      %1041 = vmatpush.msra.mxu0 0.0
      %1042 = vmatpush.msra.mxu0 0.0
      %1043 = vmatpush.msra.mxu0 0.0
      %1044 = vmatpush.msra.mxu0 0.0
      %1045 = vmatpush.msra.mxu0 0.0
      %1046 = vmatpush.msra.mxu0 0.0
      %1047 = vmatpush.msra.mxu0 0.0
      %1048 = vmatpush.msra.mxu0 0.0
      %1049 = vmatpush.msra.mxu0 0.0
      %1050 = vmatpush.msra.mxu0 0.0
      %1051 = vmatpush.msra.mxu0 0.0
      %1052 = vmatpush.msra.mxu0 0.0
      %1053 = vmatpush.msra.mxu0 0.0
      %1054 = vmatpush.msra.mxu0 %v1035
      %1055 = vmatmul.f32.gmra.mxu0 %v1033
      %v1056 = vpop.f32.mrf.mxu0
      %v1057 = vadd.f32 0.0, %v1056
      %1058 = vdwg.mxu0
      %1059 = vmatpush.msra.mxu0 0.0
      %1060 = vmatpush.msra.mxu0 0.0
      %1061 = vmatpush.msra.mxu0 0.0
      %1062 = vmatpush.msra.mxu0 0.0
      %1063 = vmatpush.msra.mxu0 0.0
      %1064 = vmatpush.msra.mxu0 0.0
      %1065 = vmatpush.msra.mxu0 0.0
      %1066 = vmatpush.msra.mxu0 0.0
      %1067 = vmatpush.msra.mxu0 0.0
      %1068 = vmatpush.msra.mxu0 0.0
      %1069 = vmatpush.msra.mxu0 0.0
      %1070 = vmatpush.msra.mxu0 0.0
      %1071 = vmatpush.msra.mxu0 0.0
      %1072 = vmatpush.msra.mxu0 0.0
      %1073 = vmatpush.msra.mxu0 0.0
      %1074 = vmatpush.msra.mxu0 %v1037
      %1075 = vmatmul.f32.gmra.mxu0 %v1033
      %v1076 = vpop.f32.mrf.mxu0
      %v1077 = vadd.f32 0.0, %v1076
      %1078 = vdwg.mxu0
      %1080 = vset.pattern.permute.xlu0 3
      %1081 = vperm.xlu0 %1080, %v966
      %v1082 = vpop.permute.xlu0 %1081
      %v1084 = vmul.f32 %v1082, %v1007
      %v1085 = vmul.f32 %v1082, %v1027
      %1087 = vset.pattern.permute.xlu0 0
      %1088 = vperm.xlu0 %1087, %v967
      %v1089 = vpop.permute.xlu0 %1088
      %v1091 = vadd.f32 %v1089, %v1084
      %v1092 = vadd.f32 %v1089, %v1085
      %1093 = vrot.lane.b32.xlu0 %v1007, 3
      %v1094 = vpop.permute.xlu0 %1093
      %1095 = vrot.lane.b32.xlu0 %v1027, 3
      %v1096 = vpop.permute.xlu0 %1095
      %vm1097 = vcmp.lt.s32.totalorder %v977, 3
      %v1098 = vsel %vm1097, %v1094, %v1096
      %v1099 = vsel %vm1097, %v1096, %v1094
      %vm1100 = vcmp.ge.s32.totalorder %v977, 3
      %vm1101 = vcmp.ge.s32.totalorder %v978, 3
      %v1102 = vsel %vm1100, %v1099, 0.0
      %v1103 = vsel %vm1101, %v1098, 0.0
      %1104 = vset.pattern.permute.xlu0 0
      %1105 = vperm.xlu0 %1104, %v966
      %v1106 = vpop.permute.xlu0 %1105
      %v1108 = vmul.f32 %v1106, %v1102
      %v1109 = vmul.f32 %v1106, %v1103
      %v1110 = vadd.f32 %v1091, %v1108
      %v1111 = vadd.f32 %v1092, %v1109
      %1112 = vrot.lane.b32.xlu0 %v1007, 2
      %v1113 = vpop.permute.xlu0 %1112
      %1114 = vrot.lane.b32.xlu0 %v1027, 2
      %v1115 = vpop.permute.xlu0 %1114
      %vm1116 = vcmp.lt.s32.totalorder %v977, 2
      %v1117 = vsel %vm1116, %v1113, %v1115
      %v1118 = vsel %vm1116, %v1115, %v1113
      %vm1119 = vcmp.ge.s32.totalorder %v977, 2
      %vm1120 = vcmp.ge.s32.totalorder %v978, 2
      %v1121 = vsel %vm1119, %v1118, 0.0
      %v1122 = vsel %vm1120, %v1117, 0.0
      %1123 = vset.pattern.permute.xlu0 1
      %1124 = vperm.xlu0 %1123, %v966
      %v1125 = vpop.permute.xlu0 %1124
      %v1127 = vmul.f32 %v1125, %v1121
      %v1128 = vmul.f32 %v1125, %v1122
      %v1129 = vadd.f32 %v1110, %v1127
      %v1130 = vadd.f32 %v1111, %v1128
      %1131 = vrot.lane.b32.xlu0 %v1007, 1
      %v1132 = vpop.permute.xlu0 %1131
      %1133 = vrot.lane.b32.xlu0 %v1027, 1
      %v1134 = vpop.permute.xlu0 %1133
      %vm1135 = vcmp.lt.s32.totalorder %v977, 1
      %v1136 = vsel %vm1135, %v1132, %v1134
      %v1137 = vsel %vm1135, %v1134, %v1132
      %vm1138 = vcmp.ge.s32.totalorder %v977, 1
      %vm1139 = vcmp.ge.s32.totalorder %v978, 1
      %v1140 = vsel %vm1138, %v1137, 0.0
      %v1141 = vsel %vm1139, %v1136, 0.0
      %1142 = vset.pattern.permute.xlu0 2
      %1143 = vperm.xlu0 %1142, %v966
      %v1144 = vpop.permute.xlu0 %1143
      %v1146 = vmul.f32 %v1144, %v1140
      %v1147 = vmul.f32 %v1144, %v1141
      %v1148 = vadd.f32 %v1129, %v1146
      %v1149 = vadd.f32 %v1130, %v1147
      %v1150 = vsub.f32 0.0, %v1148
      %v1151 = vsub.f32 0.0, %v1149
      %v1152 = vmul.f32 %v1150, 1.442695
      %v1153 = vpow.pop %v1152
      %v1154 = vmul.f32 %v1151, 1.442695
      %v1155 = vpow.pop %v1154
      %v1156 = vadd.f32 %v1153, 1.0
      %v1157 = vadd.f32 %v1155, 1.0
      %v1158 = vrcp.pop %v1156
      %v1159 = vmul.f32 %v1156, %v1158
      %v1160 = vsub.f32 1.0, %v1159
      %v1161 = vmul.f32 %v1158, %v1160
      %v1162 = vadd.f32 %v1158, %v1161
      %vm1163 = vweird.f32 %v1156
      %vm1164 = vweird.f32 %v1158
      %vm1165 = vmor %vm1163, %vm1164
      %v1166 = vsel %vm1165, %v1158, %v1162
      %v1167 = vand.u32 2147483647, %v1156
      %vm1168 = vcmp.eq.f32.partialorder %v1167, 8.507059e+37
      %v1169 = vand.u32 %v1156, 2147483648
      %v1170 = vor.u32 1.1754944e-38, %v1169
      %v1171 = vsel %vm1168, %v1170, %v1166
      %v1172 = vmul.f32 %v1148, %v1171
      %v1173 = vrcp.pop %v1157
      %v1174 = vmul.f32 %v1157, %v1173
      %v1175 = vsub.f32 1.0, %v1174
      %v1176 = vmul.f32 %v1173, %v1175
      %v1177 = vadd.f32 %v1173, %v1176
      %vm1178 = vweird.f32 %v1157
      %vm1179 = vweird.f32 %v1173
      %vm1180 = vmor %vm1178, %vm1179
      %v1181 = vsel %vm1180, %v1173, %v1177
      %v1182 = vand.u32 2147483647, %v1157
      %vm1183 = vcmp.eq.f32.partialorder %v1182, 8.507059e+37
      %v1184 = vand.u32 %v1157, 2147483648
      %v1185 = vor.u32 1.1754944e-38, %v1184
      %v1186 = vsel %vm1183, %v1185, %v1181
      %v1187 = vmul.f32 %v1149, %v1186
      %v1189 = vsel %vm915, %v968, 0
      %v1192 = vsel %vm919, %v1172, 0
      %v1195 = vsel %vm919, %v1187, 0
      %1197 = vmatpush.msra.mxu0 0.0
      %1198 = vmatpush.msra.mxu0 0.0
      %1199 = vmatpush.msra.mxu0 0.0
      %1200 = vmatpush.msra.mxu0 0.0
      %1201 = vmatpush.msra.mxu0 0.0
      %1202 = vmatpush.msra.mxu0 0.0
      %1203 = vmatpush.msra.mxu0 0.0
      %1204 = vmatpush.msra.mxu0 0.0
      %1205 = vmatpush.msra.mxu0 0.0
      %1206 = vmatpush.msra.mxu0 0.0
      %1207 = vmatpush.msra.mxu0 0.0
      %1208 = vmatpush.msra.mxu0 0.0
      %1209 = vmatpush.msra.mxu0 0.0
      %1210 = vmatpush.msra.mxu0 0.0
      %1211 = vmatpush.msra.mxu0 0.0
      %1212 = vmatpush.msra.mxu0 %v1192
      %1213 = vmatmul.f32.gmra.mxu0 %v1189
      %v1214 = vpop.f32.mrf.mxu0
      %v1215 = vadd.f32 0.0, %v1214
      %1216 = vdwg.mxu0
      %1217 = vmatpush.msra.mxu0 0.0
      %1218 = vmatpush.msra.mxu0 0.0
      %1219 = vmatpush.msra.mxu0 0.0
      %1220 = vmatpush.msra.mxu0 0.0
      %1221 = vmatpush.msra.mxu0 0.0
      %1222 = vmatpush.msra.mxu0 0.0
      %1223 = vmatpush.msra.mxu0 0.0
      %1224 = vmatpush.msra.mxu0 0.0
      %1225 = vmatpush.msra.mxu0 0.0
      %1226 = vmatpush.msra.mxu0 0.0
      %1227 = vmatpush.msra.mxu0 0.0
      %1228 = vmatpush.msra.mxu0 0.0
      %1229 = vmatpush.msra.mxu0 0.0
      %1230 = vmatpush.msra.mxu0 0.0
      %1231 = vmatpush.msra.mxu0 0.0
      %1232 = vmatpush.msra.mxu0 %v1195
      %1233 = vmatmul.f32.gmra.mxu0 %v1189
      %v1234 = vpop.f32.mrf.mxu0
      %v1235 = vadd.f32 0.0, %v1234
      %1236 = vdwg.mxu0
      %v1238 = vsel %vm915, %v969, 0
      %1240 = vmatpush.msra.mxu0 0.0
      %1241 = vmatpush.msra.mxu0 0.0
      %1242 = vmatpush.msra.mxu0 0.0
      %1243 = vmatpush.msra.mxu0 0.0
      %1244 = vmatpush.msra.mxu0 0.0
      %1245 = vmatpush.msra.mxu0 0.0
      %1246 = vmatpush.msra.mxu0 0.0
      %1247 = vmatpush.msra.mxu0 0.0
      %1248 = vmatpush.msra.mxu0 0.0
      %1249 = vmatpush.msra.mxu0 0.0
      %1250 = vmatpush.msra.mxu0 0.0
      %1251 = vmatpush.msra.mxu0 0.0
      %1252 = vmatpush.msra.mxu0 0.0
      %1253 = vmatpush.msra.mxu0 0.0
      %1254 = vmatpush.msra.mxu0 0.0
      %1255 = vmatpush.msra.mxu0 %v1192
      %1256 = vmatmul.f32.gmra.mxu0 %v1238
      %v1257 = vpop.f32.mrf.mxu0
      %v1258 = vadd.f32 0.0, %v1257
      %1259 = vdwg.mxu0
      %1260 = vmatpush.msra.mxu0 0.0
      %1261 = vmatpush.msra.mxu0 0.0
      %1262 = vmatpush.msra.mxu0 0.0
      %1263 = vmatpush.msra.mxu0 0.0
      %1264 = vmatpush.msra.mxu0 0.0
      %1265 = vmatpush.msra.mxu0 0.0
      %1266 = vmatpush.msra.mxu0 0.0
      %1267 = vmatpush.msra.mxu0 0.0
      %1268 = vmatpush.msra.mxu0 0.0
      %1269 = vmatpush.msra.mxu0 0.0
      %1270 = vmatpush.msra.mxu0 0.0
      %1271 = vmatpush.msra.mxu0 0.0
      %1272 = vmatpush.msra.mxu0 0.0
      %1273 = vmatpush.msra.mxu0 0.0
      %1274 = vmatpush.msra.mxu0 0.0
      %1275 = vmatpush.msra.mxu0 %v1195
      %1276 = vmatmul.f32.gmra.mxu0 %v1238
      %v1277 = vpop.f32.mrf.mxu0
      %v1278 = vadd.f32 0.0, %v1277
      %1279 = vdwg.mxu0
      %v1281 = vsel %vm915, %v970, 0
      %1283 = vmatpush.msra.mxu0 0.0
      %1284 = vmatpush.msra.mxu0 0.0
      %1285 = vmatpush.msra.mxu0 0.0
      %1286 = vmatpush.msra.mxu0 0.0
      %1287 = vmatpush.msra.mxu0 0.0
      %1288 = vmatpush.msra.mxu0 0.0
      %1289 = vmatpush.msra.mxu0 0.0
      %1290 = vmatpush.msra.mxu0 0.0
      %1291 = vmatpush.msra.mxu0 0.0
      %1292 = vmatpush.msra.mxu0 0.0
      %1293 = vmatpush.msra.mxu0 0.0
      %1294 = vmatpush.msra.mxu0 0.0
      %1295 = vmatpush.msra.mxu0 0.0
      %1296 = vmatpush.msra.mxu0 0.0
      %1297 = vmatpush.msra.mxu0 0.0
      %1298 = vmatpush.msra.mxu0 %v1192
      %1299 = vmatmul.f32.gmra.mxu0 %v1281
      %v1300 = vpop.f32.mrf.mxu0
      %v1301 = vadd.f32 0.0, %v1300
      %1302 = vdwg.mxu0
      %1303 = vmatpush.msra.mxu0 0.0
      %1304 = vmatpush.msra.mxu0 0.0
      %1305 = vmatpush.msra.mxu0 0.0
      %1306 = vmatpush.msra.mxu0 0.0
      %1307 = vmatpush.msra.mxu0 0.0
      %1308 = vmatpush.msra.mxu0 0.0
      %1309 = vmatpush.msra.mxu0 0.0
      %1310 = vmatpush.msra.mxu0 0.0
      %1311 = vmatpush.msra.mxu0 0.0
      %1312 = vmatpush.msra.mxu0 0.0
      %1313 = vmatpush.msra.mxu0 0.0
      %1314 = vmatpush.msra.mxu0 0.0
      %1315 = vmatpush.msra.mxu0 0.0
      %1316 = vmatpush.msra.mxu0 0.0
      %1317 = vmatpush.msra.mxu0 0.0
      %1318 = vmatpush.msra.mxu0 %v1195
      %1319 = vmatmul.f32.gmra.mxu0 %v1281
      %v1320 = vpop.f32.mrf.mxu0
      %v1321 = vadd.f32 0.0, %v1320
      %1322 = vdwg.mxu0
      %1324 = vset.pattern.permute.xlu0 0
      %1325 = vperm.xlu0 %1324, %v972
      %v1326 = vpop.permute.xlu0 %1325
      %vm1328 = vcmask 7168
      %v1330 = vsel %vm1328, %v971, 0
      %vm1332 = vcmask 1040384
      %v1334 = vsel %vm1332, %v1215, 0
      %v1337 = vsel %vm1332, %v1235, 0
      %1339 = vmatpush.msra.mxu0 0.0
      %1340 = vmatpush.msra.mxu0 0.0
      %1341 = vmatpush.msra.mxu0 0.0
      %1342 = vmatpush.msra.mxu0 0.0
      %1343 = vmatpush.msra.mxu0 0.0
      %1344 = vmatpush.msra.mxu0 0.0
      %1345 = vmatpush.msra.mxu0 0.0
      %1346 = vmatpush.msra.mxu0 0.0
      %1347 = vmatpush.msra.mxu0 0.0
      %1348 = vmatpush.msra.mxu0 0.0
      %1349 = vmatpush.msra.mxu0 0.0
      %1350 = vmatpush.msra.mxu0 0.0
      %1351 = vmatpush.msra.mxu0 0.0
      %1352 = vmatpush.msra.mxu0 0.0
      %1353 = vmatpush.msra.mxu0 0.0
      %1354 = vmatpush.msra.mxu0 %v1334
      %1355 = vmatmul.f32.gmra.mxu0 %v1330
      %v1356 = vpop.f32.mrf.mxu0
      %v1357 = vadd.f32 %v1326, %v1356
      %1358 = vdwg.mxu0
      %1359 = vmatpush.msra.mxu0 0.0
      %1360 = vmatpush.msra.mxu0 0.0
      %1361 = vmatpush.msra.mxu0 0.0
      %1362 = vmatpush.msra.mxu0 0.0
      %1363 = vmatpush.msra.mxu0 0.0
      %1364 = vmatpush.msra.mxu0 0.0
      %1365 = vmatpush.msra.mxu0 0.0
      %1366 = vmatpush.msra.mxu0 0.0
      %1367 = vmatpush.msra.mxu0 0.0
      %1368 = vmatpush.msra.mxu0 0.0
      %1369 = vmatpush.msra.mxu0 0.0
      %1370 = vmatpush.msra.mxu0 0.0
      %1371 = vmatpush.msra.mxu0 0.0
      %1372 = vmatpush.msra.mxu0 0.0
      %1373 = vmatpush.msra.mxu0 0.0
      %1374 = vmatpush.msra.mxu0 %v1337
      %1375 = vmatmul.f32.gmra.mxu0 %v1330
      %v1376 = vpop.f32.mrf.mxu0
      %v1377 = vadd.f32 %v1326, %v1376
      %1378 = vdwg.mxu0
      %vm1379 = vcmp.gt.f32.partialorder %v1357, 20.0
      %vm1380 = vcmp.gt.f32.partialorder %v1377, 20.0
      %v1381 = vmin.f32 %v1357, 20.0
      %v1382 = vmin.f32 %v1377, 20.0
      %v1383 = vmul.f32 %v1381, 1.442695
      %v1384 = vpow.pop %v1383
      %v1385 = vmul.f32 %v1382, 1.442695
      %v1386 = vpow.pop %v1385
      %v1387 = vadd.f32 %v1384, 1.0
      %v1388 = vlog2.pop %v1387
      %v1389 = vmul.f32 %v1388, 0.6931472
      %v1390 = vmul.f32 -0.5, %v1384
      %v1391 = vadd.f32 %v1390, 1.0
      %v1392 = vmul.f32 %v1391, %v1384
      %v1393 = vand.u32 2147483647, %v1384
      %vm1394 = vcmp.lt.f32.partialorder %v1393, 0.0004427343
      %v1395 = vsel %vm1394, %v1392, %v1389
      %v1396 = vadd.f32 %v1386, 1.0
      %v1397 = vlog2.pop %v1396
      %v1398 = vmul.f32 %v1397, 0.6931472
      %v1399 = vmul.f32 -0.5, %v1386
      %v1400 = vadd.f32 %v1399, 1.0
      %v1401 = vmul.f32 %v1400, %v1386
      %v1402 = vand.u32 2147483647, %v1386
      %vm1403 = vcmp.lt.f32.partialorder %v1402, 0.0004427343
      %v1404 = vsel %vm1403, %v1401, %v1398
      %v1405 = vsel %vm1379, %v1357, %v1395
      %v1406 = vsel %vm1380, %v1377, %v1404
      %v1407 = vmul.f32 %v1405, %v1172
      %v1408 = vmul.f32 %v1406, %v1187
      %1410 = vset.pattern.permute.xlu0 0
      %1411 = vperm.xlu0 %1410, %v974
      %v1412 = vpop.permute.xlu0 %1411
      %v1414 = vmul.f32 %v1412, %v1172
      %v1415 = vmul.f32 %v1412, %v1187
      %1417 = vset.pattern.permute.xlu0 0
      %1418 = vperm.xlu0 %1417, %v973
      %v1419 = vpop.permute.xlu0 %1418
      %v1421 = vmul.f32 %v1405, %v1419
      %v1422 = vmul.f32 %v1406, %v1419
      %v1423 = vmul.f32 %v1421, 1.442695
      %v1424 = vpow.pop %v1423
      %v1425 = vmul.f32 %v1422, 1.442695
      %v1426 = vpow.pop %v1425
      %v1427 = vperm.slane %v1258, 0
      %v1428 = vperm.slane %v1278, 0
      %v1429 = vmul.f32 %v1407, %v1427
      %v1430 = vmul.f32 %v1408, %v1428
      %1431 = vrot.lane.b32.xlu0 %v1424, 1
      %v1432 = vpop.permute.xlu0 %1431
      %1433 = vrot.lane.b32.xlu0 %v1426, 1
      %v1434 = vpop.permute.xlu0 %1433
      %v1435 = vsel %vm1135, %v1432, %v1434
      %v1436 = vsel %vm1135, %v1434, %v1432
      %v1437 = vsel %vm1138, %v1436, 1.0
      %v1438 = vsel %vm1139, %v1435, 1.0
      %1439 = vrot.lane.b32.xlu0 %v1429, 1
      %v1440 = vpop.permute.xlu0 %1439
      %1441 = vrot.lane.b32.xlu0 %v1430, 1
      %v1442 = vpop.permute.xlu0 %1441
      %v1443 = vsel %vm1135, %v1440, %v1442
      %v1444 = vsel %vm1135, %v1442, %v1440
      %v1445 = vsel %vm1138, %v1444, 0.0
      %v1446 = vsel %vm1139, %v1443, 0.0
      %v1447 = vmul.f32 %v1424, %v1445
      %v1448 = vmul.f32 %v1426, %v1446
      %v1449 = vadd.f32 %v1447, %v1429
      %v1450 = vadd.f32 %v1448, %v1430
      %v1451 = vmul.f32 %v1424, %v1437
      %v1452 = vmul.f32 %v1426, %v1438
      %1453 = vrot.lane.b32.xlu0 %v1451, 2
      %v1454 = vpop.permute.xlu0 %1453
      %1455 = vrot.lane.b32.xlu0 %v1452, 2
      %v1456 = vpop.permute.xlu0 %1455
      %v1457 = vsel %vm1116, %v1454, %v1456
      %v1458 = vsel %vm1116, %v1456, %v1454
      %v1459 = vsel %vm1119, %v1458, 1.0
      %v1460 = vsel %vm1120, %v1457, 1.0
      %1461 = vrot.lane.b32.xlu0 %v1449, 2
      %v1462 = vpop.permute.xlu0 %1461
      %1463 = vrot.lane.b32.xlu0 %v1450, 2
      %v1464 = vpop.permute.xlu0 %1463
      %v1465 = vsel %vm1116, %v1462, %v1464
      %v1466 = vsel %vm1116, %v1464, %v1462
      %v1467 = vsel %vm1119, %v1466, 0.0
      %v1468 = vsel %vm1120, %v1465, 0.0
      %v1469 = vmul.f32 %v1451, %v1467
      %v1470 = vmul.f32 %v1452, %v1468
      %v1471 = vadd.f32 %v1469, %v1449
      %v1472 = vadd.f32 %v1470, %v1450
      %v1473 = vmul.f32 %v1451, %v1459
      %v1474 = vmul.f32 %v1452, %v1460
      %vm1475 = vcmp.ge.s32.totalorder %v977, 4
      %vm1476 = vcmp.ge.s32.totalorder %v978, 4
      %1477 = vrot.lane.b32.xlu0 %v1473, 4
      %v1478 = vpop.permute.xlu0 %1477
      %1479 = vrot.lane.b32.xlu0 %v1474, 4
      %v1480 = vpop.permute.xlu0 %1479
      %vm1481 = vcmp.lt.s32.totalorder %v977, 4
      %v1482 = vsel %vm1481, %v1478, %v1480
      %v1483 = vsel %vm1481, %v1480, %v1478
      %v1484 = vsel %vm1475, %v1483, 1.0
      %v1485 = vsel %vm1476, %v1482, 1.0
      %1486 = vrot.lane.b32.xlu0 %v1471, 4
      %v1487 = vpop.permute.xlu0 %1486
      %1488 = vrot.lane.b32.xlu0 %v1472, 4
      %v1489 = vpop.permute.xlu0 %1488
      %v1490 = vsel %vm1481, %v1487, %v1489
      %v1491 = vsel %vm1481, %v1489, %v1487
      %v1492 = vsel %vm1475, %v1491, 0.0
      %v1493 = vsel %vm1476, %v1490, 0.0
      %v1494 = vmul.f32 %v1473, %v1492
      %v1495 = vmul.f32 %v1474, %v1493
      %v1496 = vadd.f32 %v1494, %v1471
      %v1497 = vadd.f32 %v1495, %v1472
      %v1498 = vmul.f32 %v1473, %v1484
      %v1499 = vmul.f32 %v1474, %v1485
      %vm1500 = vcmp.ge.s32.totalorder %v977, 8
      %vm1501 = vcmp.ge.s32.totalorder %v978, 8
      %1502 = vrot.lane.b32.xlu0 %v1498, 8
      %v1503 = vpop.permute.xlu0 %1502
      %1504 = vrot.lane.b32.xlu0 %v1499, 8
      %v1505 = vpop.permute.xlu0 %1504
      %vm1506 = vcmp.lt.s32.totalorder %v977, 8
      %v1507 = vsel %vm1506, %v1503, %v1505
      %v1508 = vsel %vm1506, %v1505, %v1503
      %v1509 = vsel %vm1500, %v1508, 1.0
      %v1510 = vsel %vm1501, %v1507, 1.0
      %1511 = vrot.lane.b32.xlu0 %v1496, 8
      %v1512 = vpop.permute.xlu0 %1511
      %1513 = vrot.lane.b32.xlu0 %v1497, 8
      %v1514 = vpop.permute.xlu0 %1513
      %v1515 = vsel %vm1506, %v1512, %v1514
      %v1516 = vsel %vm1506, %v1514, %v1512
      %v1517 = vsel %vm1500, %v1516, 0.0
      %v1518 = vsel %vm1501, %v1515, 0.0
      %v1519 = vmul.f32 %v1498, %v1517
      %v1520 = vmul.f32 %v1499, %v1518
      %v1521 = vadd.f32 %v1519, %v1496
      %v1522 = vadd.f32 %v1520, %v1497
      %v1523 = vmul.f32 %v1498, %v1509
      %v1524 = vmul.f32 %v1499, %v1510
      %vm1525 = vcmp.ge.s32.totalorder %v977, 16
      %vm1526 = vcmp.ge.s32.totalorder %v978, 16
      %1527 = vrot.lane.b32.xlu0 %v1523, 16
      %v1528 = vpop.permute.xlu0 %1527
      %1529 = vrot.lane.b32.xlu0 %v1524, 16
      %v1530 = vpop.permute.xlu0 %1529
      %vm1531 = vcmp.lt.s32.totalorder %v977, 16
      %v1532 = vsel %vm1531, %v1528, %v1530
      %v1533 = vsel %vm1531, %v1530, %v1528
      %v1534 = vsel %vm1525, %v1533, 1.0
      %v1535 = vsel %vm1526, %v1532, 1.0
      %1536 = vrot.lane.b32.xlu0 %v1521, 16
      %v1537 = vpop.permute.xlu0 %1536
      %1538 = vrot.lane.b32.xlu0 %v1522, 16
      %v1539 = vpop.permute.xlu0 %1538
      %v1540 = vsel %vm1531, %v1537, %v1539
      %v1541 = vsel %vm1531, %v1539, %v1537
      %v1542 = vsel %vm1525, %v1541, 0.0
      %v1543 = vsel %vm1526, %v1540, 0.0
      %v1544 = vmul.f32 %v1523, %v1542
      %v1545 = vmul.f32 %v1524, %v1543
      %v1546 = vadd.f32 %v1544, %v1521
      %v1547 = vadd.f32 %v1545, %v1522
      %v1548 = vmul.f32 %v1523, %v1534
      %v1549 = vmul.f32 %v1524, %v1535
      %vm1550 = vcmp.ge.s32.totalorder %v977, 32
      %vm1551 = vcmp.ge.s32.totalorder %v978, 32
      %1552 = vrot.lane.b32.xlu0 %v1548, 32
      %v1553 = vpop.permute.xlu0 %1552
      %1554 = vrot.lane.b32.xlu0 %v1549, 32
      %v1555 = vpop.permute.xlu0 %1554
      %vm1556 = vcmp.lt.s32.totalorder %v977, 32
      %v1557 = vsel %vm1556, %v1553, %v1555
      %v1558 = vsel %vm1556, %v1555, %v1553
      %v1559 = vsel %vm1550, %v1558, 1.0
      %v1560 = vsel %vm1551, %v1557, 1.0
      %1561 = vrot.lane.b32.xlu0 %v1546, 32
      %v1562 = vpop.permute.xlu0 %1561
      %1563 = vrot.lane.b32.xlu0 %v1547, 32
      %v1564 = vpop.permute.xlu0 %1563
      %v1565 = vsel %vm1556, %v1562, %v1564
      %v1566 = vsel %vm1556, %v1564, %v1562
      %v1567 = vsel %vm1550, %v1566, 0.0
      %v1568 = vsel %vm1551, %v1565, 0.0
      %v1569 = vmul.f32 %v1548, %v1567
      %v1570 = vmul.f32 %v1549, %v1568
      %v1571 = vadd.f32 %v1569, %v1546
      %v1572 = vadd.f32 %v1570, %v1547
      %v1573 = vmul.f32 %v1548, %v1559
      %v1574 = vmul.f32 %v1549, %v1560
      %vm1575 = vcmp.ge.s32.totalorder %v977, 64
      %vm1576 = vcmp.ge.s32.totalorder %v978, 64
      %1577 = vrot.lane.b32.xlu0 %v1573, 64
      %v1578 = vpop.permute.xlu0 %1577
      %1579 = vrot.lane.b32.xlu0 %v1574, 64
      %v1580 = vpop.permute.xlu0 %1579
      %vm1581 = vcmp.lt.s32.totalorder %v977, 64
      %v1582 = vsel %vm1581, %v1578, %v1580
      %v1583 = vsel %vm1581, %v1580, %v1578
      %v1584 = vsel %vm1575, %v1583, 1.0
      %v1585 = vsel %vm1576, %v1582, 1.0
      %1586 = vrot.lane.b32.xlu0 %v1571, 64
      %v1587 = vpop.permute.xlu0 %1586
      %1588 = vrot.lane.b32.xlu0 %v1572, 64
      %v1589 = vpop.permute.xlu0 %1588
      %v1590 = vsel %vm1581, %v1587, %v1589
      %v1591 = vsel %vm1581, %v1589, %v1587
      %v1592 = vsel %vm1575, %v1591, 0.0
      %v1593 = vsel %vm1576, %v1590, 0.0
      %v1594 = vmul.f32 %v1573, %v1592
      %v1595 = vmul.f32 %v1574, %v1593
      %v1596 = vadd.f32 %v1594, %v1571
      %v1597 = vadd.f32 %v1595, %v1572
      %v1598 = vmul.f32 %v1573, %v1584
      %v1599 = vmul.f32 %v1574, %v1585
      %vm1600 = vcmp.ge.s32.totalorder %v977, 128
      %vm1601 = vcmp.ge.s32.totalorder %v978, 128
      %v1602 = vsel %vm1600, %v1597, 0.0
      %v1603 = vsel %vm1601, %v1596, 0.0
      %v1604 = vmul.f32 %v1598, %v1602
      %v1605 = vmul.f32 %v1599, %v1603
      %v1606 = vadd.f32 %v1604, %v1596
      %v1607 = vadd.f32 %v1605, %v1597
      %v1608 = vperm.slane %v1301, 0
      %v1609 = vperm.slane %v1321, 0
      %v1610 = vmul.f32 %v1608, %v1606
      %v1611 = vmul.f32 %v1609, %v1607
      %v1612 = vadd.f32 %v1414, %v1610
      %v1613 = vadd.f32 %v1415, %v1611
      %1614 = vset.pattern.permute.xlu0 1
      %1615 = vperm.xlu0 %1614, %v973
      %v1616 = vpop.permute.xlu0 %1615
      %v1618 = vmul.f32 %v1405, %v1616
      %v1619 = vmul.f32 %v1406, %v1616
      %v1620 = vmul.f32 %v1618, 1.442695
      %v1621 = vpow.pop %v1620
      %v1622 = vmul.f32 %v1619, 1.442695
      %v1623 = vpow.pop %v1622
      %v1624 = vperm.slane %v1258, 1
      %v1625 = vperm.slane %v1278, 1
      %v1626 = vmul.f32 %v1407, %v1624
      %v1627 = vmul.f32 %v1408, %v1625
      %1628 = vrot.lane.b32.xlu0 %v1621, 1
      %v1629 = vpop.permute.xlu0 %1628
      %1630 = vrot.lane.b32.xlu0 %v1623, 1
      %v1631 = vpop.permute.xlu0 %1630
      %v1632 = vsel %vm1135, %v1629, %v1631
      %v1633 = vsel %vm1135, %v1631, %v1629
      %v1634 = vsel %vm1138, %v1633, 1.0
      %v1635 = vsel %vm1139, %v1632, 1.0
      %1636 = vrot.lane.b32.xlu0 %v1626, 1
      %v1637 = vpop.permute.xlu0 %1636
      %1638 = vrot.lane.b32.xlu0 %v1627, 1
      %v1639 = vpop.permute.xlu0 %1638
      %v1640 = vsel %vm1135, %v1637, %v1639
      %v1641 = vsel %vm1135, %v1639, %v1637
      %v1642 = vsel %vm1138, %v1641, 0.0
      %v1643 = vsel %vm1139, %v1640, 0.0
      %v1644 = vmul.f32 %v1621, %v1642
      %v1645 = vmul.f32 %v1623, %v1643
      %v1646 = vadd.f32 %v1644, %v1626
      %v1647 = vadd.f32 %v1645, %v1627
      %v1648 = vmul.f32 %v1621, %v1634
      %v1649 = vmul.f32 %v1623, %v1635
      %1650 = vrot.lane.b32.xlu0 %v1648, 2
      %v1651 = vpop.permute.xlu0 %1650
      %1652 = vrot.lane.b32.xlu0 %v1649, 2
      %v1653 = vpop.permute.xlu0 %1652
      %v1654 = vsel %vm1116, %v1651, %v1653
      %v1655 = vsel %vm1116, %v1653, %v1651
      %v1656 = vsel %vm1119, %v1655, 1.0
      %v1657 = vsel %vm1120, %v1654, 1.0
      %1658 = vrot.lane.b32.xlu0 %v1646, 2
      %v1659 = vpop.permute.xlu0 %1658
      %1660 = vrot.lane.b32.xlu0 %v1647, 2
      %v1661 = vpop.permute.xlu0 %1660
      %v1662 = vsel %vm1116, %v1659, %v1661
      %v1663 = vsel %vm1116, %v1661, %v1659
      %v1664 = vsel %vm1119, %v1663, 0.0
      %v1665 = vsel %vm1120, %v1662, 0.0
      %v1666 = vmul.f32 %v1648, %v1664
      %v1667 = vmul.f32 %v1649, %v1665
      %v1668 = vadd.f32 %v1666, %v1646
      %v1669 = vadd.f32 %v1667, %v1647
      %v1670 = vmul.f32 %v1648, %v1656
      %v1671 = vmul.f32 %v1649, %v1657
      %1672 = vrot.lane.b32.xlu0 %v1670, 4
      %v1673 = vpop.permute.xlu0 %1672
      %1674 = vrot.lane.b32.xlu0 %v1671, 4
      %v1675 = vpop.permute.xlu0 %1674
      %v1676 = vsel %vm1481, %v1673, %v1675
      %v1677 = vsel %vm1481, %v1675, %v1673
      %v1678 = vsel %vm1475, %v1677, 1.0
      %v1679 = vsel %vm1476, %v1676, 1.0
      %1680 = vrot.lane.b32.xlu0 %v1668, 4
      %v1681 = vpop.permute.xlu0 %1680
      %1682 = vrot.lane.b32.xlu0 %v1669, 4
      %v1683 = vpop.permute.xlu0 %1682
      %v1684 = vsel %vm1481, %v1681, %v1683
      %v1685 = vsel %vm1481, %v1683, %v1681
      %v1686 = vsel %vm1475, %v1685, 0.0
      %v1687 = vsel %vm1476, %v1684, 0.0
      %v1688 = vmul.f32 %v1670, %v1686
      %v1689 = vmul.f32 %v1671, %v1687
      %v1690 = vadd.f32 %v1688, %v1668
      %v1691 = vadd.f32 %v1689, %v1669
      %v1692 = vmul.f32 %v1670, %v1678
      %v1693 = vmul.f32 %v1671, %v1679
      %1694 = vrot.lane.b32.xlu0 %v1692, 8
      %v1695 = vpop.permute.xlu0 %1694
      %1696 = vrot.lane.b32.xlu0 %v1693, 8
      %v1697 = vpop.permute.xlu0 %1696
      %v1698 = vsel %vm1506, %v1695, %v1697
      %v1699 = vsel %vm1506, %v1697, %v1695
      %v1700 = vsel %vm1500, %v1699, 1.0
      %v1701 = vsel %vm1501, %v1698, 1.0
      %1702 = vrot.lane.b32.xlu0 %v1690, 8
      %v1703 = vpop.permute.xlu0 %1702
      %1704 = vrot.lane.b32.xlu0 %v1691, 8
      %v1705 = vpop.permute.xlu0 %1704
      %v1706 = vsel %vm1506, %v1703, %v1705
      %v1707 = vsel %vm1506, %v1705, %v1703
      %v1708 = vsel %vm1500, %v1707, 0.0
      %v1709 = vsel %vm1501, %v1706, 0.0
      %v1710 = vmul.f32 %v1692, %v1708
      %v1711 = vmul.f32 %v1693, %v1709
      %v1712 = vadd.f32 %v1710, %v1690
      %v1713 = vadd.f32 %v1711, %v1691
      %v1714 = vmul.f32 %v1692, %v1700
      %v1715 = vmul.f32 %v1693, %v1701
      %1716 = vrot.lane.b32.xlu0 %v1714, 16
      %v1717 = vpop.permute.xlu0 %1716
      %1718 = vrot.lane.b32.xlu0 %v1715, 16
      %v1719 = vpop.permute.xlu0 %1718
      %v1720 = vsel %vm1531, %v1717, %v1719
      %v1721 = vsel %vm1531, %v1719, %v1717
      %v1722 = vsel %vm1525, %v1721, 1.0
      %v1723 = vsel %vm1526, %v1720, 1.0
      %1724 = vrot.lane.b32.xlu0 %v1712, 16
      %v1725 = vpop.permute.xlu0 %1724
      %1726 = vrot.lane.b32.xlu0 %v1713, 16
      %v1727 = vpop.permute.xlu0 %1726
      %v1728 = vsel %vm1531, %v1725, %v1727
      %v1729 = vsel %vm1531, %v1727, %v1725
      %v1730 = vsel %vm1525, %v1729, 0.0
      %v1731 = vsel %vm1526, %v1728, 0.0
      %v1732 = vmul.f32 %v1714, %v1730
      %v1733 = vmul.f32 %v1715, %v1731
      %v1734 = vadd.f32 %v1732, %v1712
      %v1735 = vadd.f32 %v1733, %v1713
      %v1736 = vmul.f32 %v1714, %v1722
      %v1737 = vmul.f32 %v1715, %v1723
      %1738 = vrot.lane.b32.xlu0 %v1736, 32
      %v1739 = vpop.permute.xlu0 %1738
      %1740 = vrot.lane.b32.xlu0 %v1737, 32
      %v1741 = vpop.permute.xlu0 %1740
      %v1742 = vsel %vm1556, %v1739, %v1741
      %v1743 = vsel %vm1556, %v1741, %v1739
      %v1744 = vsel %vm1550, %v1743, 1.0
      %v1745 = vsel %vm1551, %v1742, 1.0
      %1746 = vrot.lane.b32.xlu0 %v1734, 32
      %v1747 = vpop.permute.xlu0 %1746
      %1748 = vrot.lane.b32.xlu0 %v1735, 32
      %v1749 = vpop.permute.xlu0 %1748
      %v1750 = vsel %vm1556, %v1747, %v1749
      %v1751 = vsel %vm1556, %v1749, %v1747
      %v1752 = vsel %vm1550, %v1751, 0.0
      %v1753 = vsel %vm1551, %v1750, 0.0
      %v1754 = vmul.f32 %v1736, %v1752
      %v1755 = vmul.f32 %v1737, %v1753
      %v1756 = vadd.f32 %v1754, %v1734
      %v1757 = vadd.f32 %v1755, %v1735
      %v1758 = vmul.f32 %v1736, %v1744
      %v1759 = vmul.f32 %v1737, %v1745
      %1760 = vrot.lane.b32.xlu0 %v1758, 64
      %v1761 = vpop.permute.xlu0 %1760
      %1762 = vrot.lane.b32.xlu0 %v1759, 64
      %v1763 = vpop.permute.xlu0 %1762
      %v1764 = vsel %vm1581, %v1761, %v1763
      %v1765 = vsel %vm1581, %v1763, %v1761
      %v1766 = vsel %vm1575, %v1765, 1.0
      %v1767 = vsel %vm1576, %v1764, 1.0
      %1768 = vrot.lane.b32.xlu0 %v1756, 64
      %v1769 = vpop.permute.xlu0 %1768
      %1770 = vrot.lane.b32.xlu0 %v1757, 64
      %v1771 = vpop.permute.xlu0 %1770
      %v1772 = vsel %vm1581, %v1769, %v1771
      %v1773 = vsel %vm1581, %v1771, %v1769
      %v1774 = vsel %vm1575, %v1773, 0.0
      %v1775 = vsel %vm1576, %v1772, 0.0
      %v1776 = vmul.f32 %v1758, %v1774
      %v1777 = vmul.f32 %v1759, %v1775
      %v1778 = vadd.f32 %v1776, %v1756
      %v1779 = vadd.f32 %v1777, %v1757
      %v1780 = vmul.f32 %v1758, %v1766
      %v1781 = vmul.f32 %v1759, %v1767
      %v1782 = vsel %vm1600, %v1779, 0.0
      %v1783 = vsel %vm1601, %v1778, 0.0
      %v1784 = vmul.f32 %v1780, %v1782
      %v1785 = vmul.f32 %v1781, %v1783
      %v1786 = vadd.f32 %v1784, %v1778
      %v1787 = vadd.f32 %v1785, %v1779
      %v1788 = vperm.slane %v1301, 1
      %v1789 = vperm.slane %v1321, 1
      %v1790 = vmul.f32 %v1788, %v1786
      %v1791 = vmul.f32 %v1789, %v1787
      %v1792 = vadd.f32 %v1612, %v1790
      %v1793 = vadd.f32 %v1613, %v1791
      %v1794 = vsub.f32 0.0, %v1057
      %v1795 = vsub.f32 0.0, %v1077
      %v1796 = vmul.f32 %v1794, 1.442695
      %v1797 = vpow.pop %v1796
      %v1798 = vmul.f32 %v1795, 1.442695
      %v1799 = vpow.pop %v1798
      %v1800 = vadd.f32 %v1797, 1.0
      %v1801 = vadd.f32 %v1799, 1.0
      %v1802 = vrcp.pop %v1800
      %v1803 = vmul.f32 %v1800, %v1802
      %v1804 = vsub.f32 1.0, %v1803
      %v1805 = vmul.f32 %v1802, %v1804
      %v1806 = vadd.f32 %v1802, %v1805
      %vm1807 = vweird.f32 %v1800
      %vm1808 = vweird.f32 %v1802
      %vm1809 = vmor %vm1807, %vm1808
      %v1810 = vsel %vm1809, %v1802, %v1806
      %v1811 = vand.u32 2147483647, %v1800
      %vm1812 = vcmp.eq.f32.partialorder %v1811, 8.507059e+37
      %v1813 = vand.u32 %v1800, 2147483648
      %v1814 = vor.u32 1.1754944e-38, %v1813
      %v1815 = vsel %vm1812, %v1814, %v1810
      %v1816 = vmul.f32 %v1057, %v1815
      %v1817 = vrcp.pop %v1801
      %v1818 = vmul.f32 %v1801, %v1817
      %v1819 = vsub.f32 1.0, %v1818
      %v1820 = vmul.f32 %v1817, %v1819
      %v1821 = vadd.f32 %v1817, %v1820
      %vm1822 = vweird.f32 %v1801
      %vm1823 = vweird.f32 %v1817
      %vm1824 = vmor %vm1822, %vm1823
      %v1825 = vsel %vm1824, %v1817, %v1821
      %v1826 = vand.u32 2147483647, %v1801
      %vm1827 = vcmp.eq.f32.partialorder %v1826, 8.507059e+37
      %v1828 = vand.u32 %v1801, 2147483648
      %v1829 = vor.u32 1.1754944e-38, %v1828
      %v1830 = vsel %vm1827, %v1829, %v1825
      %v1831 = vmul.f32 %v1077, %v1830
      %v1832 = vmul.f32 %v1792, %v1816
      %v1833 = vmul.f32 %v1793, %v1831
      %v1835 = vsel %vm915, %v975, 0
      %v1838 = vsel %vm919, %v1832, 0
      %v1841 = vsel %vm919, %v1833, 0
      %1843 = vmatpush.msra.mxu0 0.0
      %1844 = vmatpush.msra.mxu0 0.0
      %1845 = vmatpush.msra.mxu0 0.0
      %1846 = vmatpush.msra.mxu0 0.0
      %1847 = vmatpush.msra.mxu0 0.0
      %1848 = vmatpush.msra.mxu0 0.0
      %1849 = vmatpush.msra.mxu0 0.0
      %1850 = vmatpush.msra.mxu0 0.0
      %1851 = vmatpush.msra.mxu0 0.0
      %1852 = vmatpush.msra.mxu0 0.0
      %1853 = vmatpush.msra.mxu0 0.0
      %1854 = vmatpush.msra.mxu0 0.0
      %1855 = vmatpush.msra.mxu0 0.0
      %1856 = vmatpush.msra.mxu0 0.0
      %1857 = vmatpush.msra.mxu0 0.0
      %1858 = vmatpush.msra.mxu0 %v1838
      %1859 = vmatmul.f32.gmra.mxu0 %v1835
      %v1860 = vpop.f32.mrf.mxu0
      %v1861 = vadd.f32 0.0, %v1860
      %1862 = vdwg.mxu0
      %1863 = vmatpush.msra.mxu0 0.0
      %1864 = vmatpush.msra.mxu0 0.0
      %1865 = vmatpush.msra.mxu0 0.0
      %1866 = vmatpush.msra.mxu0 0.0
      %1867 = vmatpush.msra.mxu0 0.0
      %1868 = vmatpush.msra.mxu0 0.0
      %1869 = vmatpush.msra.mxu0 0.0
      %1870 = vmatpush.msra.mxu0 0.0
      %1871 = vmatpush.msra.mxu0 0.0
      %1872 = vmatpush.msra.mxu0 0.0
      %1873 = vmatpush.msra.mxu0 0.0
      %1874 = vmatpush.msra.mxu0 0.0
      %1875 = vmatpush.msra.mxu0 0.0
      %1876 = vmatpush.msra.mxu0 0.0
      %1877 = vmatpush.msra.mxu0 0.0
      %1878 = vmatpush.msra.mxu0 %v1841
      %1879 = vmatmul.f32.gmra.mxu0 %v1835
      %v1880 = vpop.f32.mrf.mxu0
      %v1881 = vadd.f32 0.0, %v1880
      %1882 = vdwg.mxu0
      %v1883 = vld [vmem:[%s31] sm:$0xf]
      %v1884 = vld [vmem:[%s33] sm:$0xf]
      %1886 = vset.pattern.permute.xlu0 0
      %1887 = vperm.xlu0 %1886, %v1884
      %v1888 = vpop.permute.xlu0 %1887
      %v1891 = vsel %vm915, %v1883, 0
      %v1894 = vsel %vm919, %v1861, 0
      %v1897 = vsel %vm919, %v1881, 0
      %1899 = vmatpush.msra.mxu0 0.0
      %1900 = vmatpush.msra.mxu0 0.0
      %1901 = vmatpush.msra.mxu0 0.0
      %1902 = vmatpush.msra.mxu0 0.0
      %1903 = vmatpush.msra.mxu0 0.0
      %1904 = vmatpush.msra.mxu0 0.0
      %1905 = vmatpush.msra.mxu0 0.0
      %1906 = vmatpush.msra.mxu0 0.0
      %1907 = vmatpush.msra.mxu0 0.0
      %1908 = vmatpush.msra.mxu0 0.0
      %1909 = vmatpush.msra.mxu0 0.0
      %1910 = vmatpush.msra.mxu0 0.0
      %1911 = vmatpush.msra.mxu0 0.0
      %1912 = vmatpush.msra.mxu0 0.0
      %1913 = vmatpush.msra.mxu0 0.0
      %1914 = vmatpush.msra.mxu0 %v1894
      %1915 = vmatmul.f32.gmra.mxu0 %v1891
      %v1916 = vpop.f32.mrf.mxu0
      %v1917 = vadd.f32 %v1888, %v1916
      %1918 = vdwg.mxu0
      %1919 = vmatpush.msra.mxu0 0.0
      %1920 = vmatpush.msra.mxu0 0.0
      %1921 = vmatpush.msra.mxu0 0.0
      %1922 = vmatpush.msra.mxu0 0.0
      %1923 = vmatpush.msra.mxu0 0.0
      %1924 = vmatpush.msra.mxu0 0.0
      %1925 = vmatpush.msra.mxu0 0.0
      %1926 = vmatpush.msra.mxu0 0.0
      %1927 = vmatpush.msra.mxu0 0.0
      %1928 = vmatpush.msra.mxu0 0.0
      %1929 = vmatpush.msra.mxu0 0.0
      %1930 = vmatpush.msra.mxu0 0.0
      %1931 = vmatpush.msra.mxu0 0.0
      %1932 = vmatpush.msra.mxu0 0.0
      %1933 = vmatpush.msra.mxu0 0.0
      %1934 = vmatpush.msra.mxu0 %v1897
      %1935 = vmatmul.f32.gmra.mxu0 %v1891
      %v1936 = vpop.f32.mrf.mxu0
      %v1937 = vadd.f32 %v1888, %v1936
      %1938 = vdwg.mxu0
      %v1939 = vld [vmem:[%s35] sm:$0xf]
      %v1940 = vld [vmem:[%s37] sm:$0xf]
      %v1941 = vld [vmem:[%s39] sm:$0xf]
      %v1942 = vld [vmem:[%s41] sm:$0xf]
      %v1943 = vld [vmem:[%s43] sm:$0x1]
      %v1944 = vld [vmem:[%s45] sm:$0x3]
      %v1945 = vld [vmem:[%s47] sm:$0x3]
      %v1946 = vld [vmem:[%s49] sm:$0xf]
      %v1947 = vld [vmem:[%s51] sm:$0xf]
      %v1948 = vld [vmem:[%s53] sm:$0xf]
      %v1949 = vld [vmem:[%s55] sm:$0xf]
      %v1950 = vld [vmem:[%s57] sm:$0xf]
      %v1952 = vsel %vm915, %v1939, 0
      %v1955 = vsel %vm919, %v1917, 0
      %v1958 = vsel %vm919, %v1937, 0
      %1960 = vmatpush.msra.mxu0 0.0
      %1961 = vmatpush.msra.mxu0 0.0
      %1962 = vmatpush.msra.mxu0 0.0
      %1963 = vmatpush.msra.mxu0 0.0
      %1964 = vmatpush.msra.mxu0 0.0
      %1965 = vmatpush.msra.mxu0 0.0
      %1966 = vmatpush.msra.mxu0 0.0
      %1967 = vmatpush.msra.mxu0 0.0
      %1968 = vmatpush.msra.mxu0 0.0
      %1969 = vmatpush.msra.mxu0 0.0
      %1970 = vmatpush.msra.mxu0 0.0
      %1971 = vmatpush.msra.mxu0 0.0
      %1972 = vmatpush.msra.mxu0 0.0
      %1973 = vmatpush.msra.mxu0 0.0
      %1974 = vmatpush.msra.mxu0 0.0
      %1975 = vmatpush.msra.mxu0 %v1955
      %1976 = vmatmul.f32.gmra.mxu0 %v1952
      %v1977 = vpop.f32.mrf.mxu0
      %v1978 = vadd.f32 0.0, %v1977
      %1979 = vdwg.mxu0
      %1980 = vmatpush.msra.mxu0 0.0
      %1981 = vmatpush.msra.mxu0 0.0
      %1982 = vmatpush.msra.mxu0 0.0
      %1983 = vmatpush.msra.mxu0 0.0
      %1984 = vmatpush.msra.mxu0 0.0
      %1985 = vmatpush.msra.mxu0 0.0
      %1986 = vmatpush.msra.mxu0 0.0
      %1987 = vmatpush.msra.mxu0 0.0
      %1988 = vmatpush.msra.mxu0 0.0
      %1989 = vmatpush.msra.mxu0 0.0
      %1990 = vmatpush.msra.mxu0 0.0
      %1991 = vmatpush.msra.mxu0 0.0
      %1992 = vmatpush.msra.mxu0 0.0
      %1993 = vmatpush.msra.mxu0 0.0
      %1994 = vmatpush.msra.mxu0 0.0
      %1995 = vmatpush.msra.mxu0 %v1958
      %1996 = vmatmul.f32.gmra.mxu0 %v1952
      %v1997 = vpop.f32.mrf.mxu0
      %v1998 = vadd.f32 0.0, %v1997
      %1999 = vdwg.mxu0
      %v2001 = vsel %vm915, %v1940, 0
      %2003 = vmatpush.msra.mxu0 0.0
      %2004 = vmatpush.msra.mxu0 0.0
      %2005 = vmatpush.msra.mxu0 0.0
      %2006 = vmatpush.msra.mxu0 0.0
      %2007 = vmatpush.msra.mxu0 0.0
      %2008 = vmatpush.msra.mxu0 0.0
      %2009 = vmatpush.msra.mxu0 0.0
      %2010 = vmatpush.msra.mxu0 0.0
      %2011 = vmatpush.msra.mxu0 0.0
      %2012 = vmatpush.msra.mxu0 0.0
      %2013 = vmatpush.msra.mxu0 0.0
      %2014 = vmatpush.msra.mxu0 0.0
      %2015 = vmatpush.msra.mxu0 0.0
      %2016 = vmatpush.msra.mxu0 0.0
      %2017 = vmatpush.msra.mxu0 0.0
      %2018 = vmatpush.msra.mxu0 %v1955
      %2019 = vmatmul.f32.gmra.mxu0 %v2001
      %v2020 = vpop.f32.mrf.mxu0
      %v2021 = vadd.f32 0.0, %v2020
      %2022 = vdwg.mxu0
      %2023 = vmatpush.msra.mxu0 0.0
      %2024 = vmatpush.msra.mxu0 0.0
      %2025 = vmatpush.msra.mxu0 0.0
      %2026 = vmatpush.msra.mxu0 0.0
      %2027 = vmatpush.msra.mxu0 0.0
      %2028 = vmatpush.msra.mxu0 0.0
      %2029 = vmatpush.msra.mxu0 0.0
      %2030 = vmatpush.msra.mxu0 0.0
      %2031 = vmatpush.msra.mxu0 0.0
      %2032 = vmatpush.msra.mxu0 0.0
      %2033 = vmatpush.msra.mxu0 0.0
      %2034 = vmatpush.msra.mxu0 0.0
      %2035 = vmatpush.msra.mxu0 0.0
      %2036 = vmatpush.msra.mxu0 0.0
      %2037 = vmatpush.msra.mxu0 0.0
      %2038 = vmatpush.msra.mxu0 %v1958
      %2039 = vmatmul.f32.gmra.mxu0 %v2001
      %v2040 = vpop.f32.mrf.mxu0
      %v2041 = vadd.f32 0.0, %v2040
      %2042 = vdwg.mxu0
      %2044 = vset.pattern.permute.xlu0 3
      %2045 = vperm.xlu0 %2044, %v1941
      %v2046 = vpop.permute.xlu0 %2045
      %v2048 = vmul.f32 %v2046, %v1978
      %v2049 = vmul.f32 %v2046, %v1998
      %2051 = vset.pattern.permute.xlu0 0
      %2052 = vperm.xlu0 %2051, %v1942
      %v2053 = vpop.permute.xlu0 %2052
      %v2055 = vadd.f32 %v2053, %v2048
      %v2056 = vadd.f32 %v2053, %v2049
      %2057 = vrot.lane.b32.xlu0 %v1978, 3
      %v2058 = vpop.permute.xlu0 %2057
      %2059 = vrot.lane.b32.xlu0 %v1998, 3
      %v2060 = vpop.permute.xlu0 %2059
      %v2061 = vsel %vm1097, %v2058, %v2060
      %v2062 = vsel %vm1097, %v2060, %v2058
      %v2063 = vsel %vm1100, %v2062, 0.0
      %v2064 = vsel %vm1101, %v2061, 0.0
      %2065 = vset.pattern.permute.xlu0 0
      %2066 = vperm.xlu0 %2065, %v1941
      %v2067 = vpop.permute.xlu0 %2066
      %v2069 = vmul.f32 %v2067, %v2063
      %v2070 = vmul.f32 %v2067, %v2064
      %v2071 = vadd.f32 %v2055, %v2069
      %v2072 = vadd.f32 %v2056, %v2070
      %2073 = vrot.lane.b32.xlu0 %v1978, 2
      %v2074 = vpop.permute.xlu0 %2073
      %2075 = vrot.lane.b32.xlu0 %v1998, 2
      %v2076 = vpop.permute.xlu0 %2075
      %v2077 = vsel %vm1116, %v2074, %v2076
      %v2078 = vsel %vm1116, %v2076, %v2074
      %v2079 = vsel %vm1119, %v2078, 0.0
      %v2080 = vsel %vm1120, %v2077, 0.0
      %2081 = vset.pattern.permute.xlu0 1
      %2082 = vperm.xlu0 %2081, %v1941
      %v2083 = vpop.permute.xlu0 %2082
      %v2085 = vmul.f32 %v2083, %v2079
      %v2086 = vmul.f32 %v2083, %v2080
      %v2087 = vadd.f32 %v2071, %v2085
      %v2088 = vadd.f32 %v2072, %v2086
      %2089 = vrot.lane.b32.xlu0 %v1978, 1
      %v2090 = vpop.permute.xlu0 %2089
      %2091 = vrot.lane.b32.xlu0 %v1998, 1
      %v2092 = vpop.permute.xlu0 %2091
      %v2093 = vsel %vm1135, %v2090, %v2092
      %v2094 = vsel %vm1135, %v2092, %v2090
      %v2095 = vsel %vm1138, %v2094, 0.0
      %v2096 = vsel %vm1139, %v2093, 0.0
      %2097 = vset.pattern.permute.xlu0 2
      %2098 = vperm.xlu0 %2097, %v1941
      %v2099 = vpop.permute.xlu0 %2098
      %v2101 = vmul.f32 %v2099, %v2095
      %v2102 = vmul.f32 %v2099, %v2096
      %v2103 = vadd.f32 %v2087, %v2101
      %v2104 = vadd.f32 %v2088, %v2102
      %v2105 = vsub.f32 0.0, %v2103
      %v2106 = vsub.f32 0.0, %v2104
      %v2107 = vmul.f32 %v2105, 1.442695
      %v2108 = vpow.pop %v2107
      %v2109 = vmul.f32 %v2106, 1.442695
      %v2110 = vpow.pop %v2109
      %v2111 = vadd.f32 %v2108, 1.0
      %v2112 = vadd.f32 %v2110, 1.0
      %v2113 = vrcp.pop %v2111
      %v2114 = vmul.f32 %v2111, %v2113
      %v2115 = vsub.f32 1.0, %v2114
      %v2116 = vmul.f32 %v2113, %v2115
      %v2117 = vadd.f32 %v2113, %v2116
      %vm2118 = vweird.f32 %v2111
      %vm2119 = vweird.f32 %v2113
      %vm2120 = vmor %vm2118, %vm2119
      %v2121 = vsel %vm2120, %v2113, %v2117
      %v2122 = vand.u32 2147483647, %v2111
      %vm2123 = vcmp.eq.f32.partialorder %v2122, 8.507059e+37
      %v2124 = vand.u32 %v2111, 2147483648
      %v2125 = vor.u32 1.1754944e-38, %v2124
      %v2126 = vsel %vm2123, %v2125, %v2121
      %v2127 = vmul.f32 %v2103, %v2126
      %v2128 = vrcp.pop %v2112
      %v2129 = vmul.f32 %v2112, %v2128
      %v2130 = vsub.f32 1.0, %v2129
      %v2131 = vmul.f32 %v2128, %v2130
      %v2132 = vadd.f32 %v2128, %v2131
      %vm2133 = vweird.f32 %v2112
      %vm2134 = vweird.f32 %v2128
      %vm2135 = vmor %vm2133, %vm2134
      %v2136 = vsel %vm2135, %v2128, %v2132
      %v2137 = vand.u32 2147483647, %v2112
      %vm2138 = vcmp.eq.f32.partialorder %v2137, 8.507059e+37
      %v2139 = vand.u32 %v2112, 2147483648
      %v2140 = vor.u32 1.1754944e-38, %v2139
      %v2141 = vsel %vm2138, %v2140, %v2136
      %v2142 = vmul.f32 %v2104, %v2141
      %v2144 = vsel %vm915, %v1943, 0
      %v2147 = vsel %vm919, %v2127, 0
      %v2150 = vsel %vm919, %v2142, 0
      %2152 = vmatpush.msra.mxu0 0.0
      %2153 = vmatpush.msra.mxu0 0.0
      %2154 = vmatpush.msra.mxu0 0.0
      %2155 = vmatpush.msra.mxu0 0.0
      %2156 = vmatpush.msra.mxu0 0.0
      %2157 = vmatpush.msra.mxu0 0.0
      %2158 = vmatpush.msra.mxu0 0.0
      %2159 = vmatpush.msra.mxu0 0.0
      %2160 = vmatpush.msra.mxu0 0.0
      %2161 = vmatpush.msra.mxu0 0.0
      %2162 = vmatpush.msra.mxu0 0.0
      %2163 = vmatpush.msra.mxu0 0.0
      %2164 = vmatpush.msra.mxu0 0.0
      %2165 = vmatpush.msra.mxu0 0.0
      %2166 = vmatpush.msra.mxu0 0.0
      %2167 = vmatpush.msra.mxu0 %v2147
      %2168 = vmatmul.f32.gmra.mxu0 %v2144
      %v2169 = vpop.f32.mrf.mxu0
      %v2170 = vadd.f32 0.0, %v2169
      %2171 = vdwg.mxu0
      %2172 = vmatpush.msra.mxu0 0.0
      %2173 = vmatpush.msra.mxu0 0.0
      %2174 = vmatpush.msra.mxu0 0.0
      %2175 = vmatpush.msra.mxu0 0.0
      %2176 = vmatpush.msra.mxu0 0.0
      %2177 = vmatpush.msra.mxu0 0.0
      %2178 = vmatpush.msra.mxu0 0.0
      %2179 = vmatpush.msra.mxu0 0.0
      %2180 = vmatpush.msra.mxu0 0.0
      %2181 = vmatpush.msra.mxu0 0.0
      %2182 = vmatpush.msra.mxu0 0.0
      %2183 = vmatpush.msra.mxu0 0.0
      %2184 = vmatpush.msra.mxu0 0.0
      %2185 = vmatpush.msra.mxu0 0.0
      %2186 = vmatpush.msra.mxu0 0.0
      %2187 = vmatpush.msra.mxu0 %v2150
      %2188 = vmatmul.f32.gmra.mxu0 %v2144
      %v2189 = vpop.f32.mrf.mxu0
      %v2190 = vadd.f32 0.0, %v2189
      %2191 = vdwg.mxu0
      %v2193 = vsel %vm915, %v1944, 0
      %2195 = vmatpush.msra.mxu0 0.0
      %2196 = vmatpush.msra.mxu0 0.0
      %2197 = vmatpush.msra.mxu0 0.0
      %2198 = vmatpush.msra.mxu0 0.0
      %2199 = vmatpush.msra.mxu0 0.0
      %2200 = vmatpush.msra.mxu0 0.0
      %2201 = vmatpush.msra.mxu0 0.0
      %2202 = vmatpush.msra.mxu0 0.0
      %2203 = vmatpush.msra.mxu0 0.0
      %2204 = vmatpush.msra.mxu0 0.0
      %2205 = vmatpush.msra.mxu0 0.0
      %2206 = vmatpush.msra.mxu0 0.0
      %2207 = vmatpush.msra.mxu0 0.0
      %2208 = vmatpush.msra.mxu0 0.0
      %2209 = vmatpush.msra.mxu0 0.0
      %2210 = vmatpush.msra.mxu0 %v2147
      %2211 = vmatmul.f32.gmra.mxu0 %v2193
      %v2212 = vpop.f32.mrf.mxu0
      %v2213 = vadd.f32 0.0, %v2212
      %2214 = vdwg.mxu0
      %2215 = vmatpush.msra.mxu0 0.0
      %2216 = vmatpush.msra.mxu0 0.0
      %2217 = vmatpush.msra.mxu0 0.0
      %2218 = vmatpush.msra.mxu0 0.0
      %2219 = vmatpush.msra.mxu0 0.0
      %2220 = vmatpush.msra.mxu0 0.0
      %2221 = vmatpush.msra.mxu0 0.0
      %2222 = vmatpush.msra.mxu0 0.0
      %2223 = vmatpush.msra.mxu0 0.0
      %2224 = vmatpush.msra.mxu0 0.0
      %2225 = vmatpush.msra.mxu0 0.0
      %2226 = vmatpush.msra.mxu0 0.0
      %2227 = vmatpush.msra.mxu0 0.0
      %2228 = vmatpush.msra.mxu0 0.0
      %2229 = vmatpush.msra.mxu0 0.0
      %2230 = vmatpush.msra.mxu0 %v2150
      %2231 = vmatmul.f32.gmra.mxu0 %v2193
      %v2232 = vpop.f32.mrf.mxu0
      %v2233 = vadd.f32 0.0, %v2232
      %2234 = vdwg.mxu0
      %v2236 = vsel %vm915, %v1945, 0
      %2238 = vmatpush.msra.mxu0 0.0
      %2239 = vmatpush.msra.mxu0 0.0
      %2240 = vmatpush.msra.mxu0 0.0
      %2241 = vmatpush.msra.mxu0 0.0
      %2242 = vmatpush.msra.mxu0 0.0
      %2243 = vmatpush.msra.mxu0 0.0
      %2244 = vmatpush.msra.mxu0 0.0
      %2245 = vmatpush.msra.mxu0 0.0
      %2246 = vmatpush.msra.mxu0 0.0
      %2247 = vmatpush.msra.mxu0 0.0
      %2248 = vmatpush.msra.mxu0 0.0
      %2249 = vmatpush.msra.mxu0 0.0
      %2250 = vmatpush.msra.mxu0 0.0
      %2251 = vmatpush.msra.mxu0 0.0
      %2252 = vmatpush.msra.mxu0 0.0
      %2253 = vmatpush.msra.mxu0 %v2147
      %2254 = vmatmul.f32.gmra.mxu0 %v2236
      %v2255 = vpop.f32.mrf.mxu0
      %v2256 = vadd.f32 0.0, %v2255
      %2257 = vdwg.mxu0
      %2258 = vmatpush.msra.mxu0 0.0
      %2259 = vmatpush.msra.mxu0 0.0
      %2260 = vmatpush.msra.mxu0 0.0
      %2261 = vmatpush.msra.mxu0 0.0
      %2262 = vmatpush.msra.mxu0 0.0
      %2263 = vmatpush.msra.mxu0 0.0
      %2264 = vmatpush.msra.mxu0 0.0
      %2265 = vmatpush.msra.mxu0 0.0
      %2266 = vmatpush.msra.mxu0 0.0
      %2267 = vmatpush.msra.mxu0 0.0
      %2268 = vmatpush.msra.mxu0 0.0
      %2269 = vmatpush.msra.mxu0 0.0
      %2270 = vmatpush.msra.mxu0 0.0
      %2271 = vmatpush.msra.mxu0 0.0
      %2272 = vmatpush.msra.mxu0 0.0
      %2273 = vmatpush.msra.mxu0 %v2150
      %2274 = vmatmul.f32.gmra.mxu0 %v2236
      %v2275 = vpop.f32.mrf.mxu0
      %v2276 = vadd.f32 0.0, %v2275
      %2277 = vdwg.mxu0
      %2279 = vset.pattern.permute.xlu0 0
      %2280 = vperm.xlu0 %2279, %v1947
      %v2281 = vpop.permute.xlu0 %2280
      %v2284 = vsel %vm1328, %v1946, 0
      %v2287 = vsel %vm1332, %v2170, 0
      %v2290 = vsel %vm1332, %v2190, 0
      %2292 = vmatpush.msra.mxu0 0.0
      %2293 = vmatpush.msra.mxu0 0.0
      %2294 = vmatpush.msra.mxu0 0.0
      %2295 = vmatpush.msra.mxu0 0.0
      %2296 = vmatpush.msra.mxu0 0.0
      %2297 = vmatpush.msra.mxu0 0.0
      %2298 = vmatpush.msra.mxu0 0.0
      %2299 = vmatpush.msra.mxu0 0.0
      %2300 = vmatpush.msra.mxu0 0.0
      %2301 = vmatpush.msra.mxu0 0.0
      %2302 = vmatpush.msra.mxu0 0.0
      %2303 = vmatpush.msra.mxu0 0.0
      %2304 = vmatpush.msra.mxu0 0.0
      %2305 = vmatpush.msra.mxu0 0.0
      %2306 = vmatpush.msra.mxu0 0.0
      %2307 = vmatpush.msra.mxu0 %v2287
      %2308 = vmatmul.f32.gmra.mxu0 %v2284
      %v2309 = vpop.f32.mrf.mxu0
      %v2310 = vadd.f32 %v2281, %v2309
      %2311 = vdwg.mxu0
      %2312 = vmatpush.msra.mxu0 0.0
      %2313 = vmatpush.msra.mxu0 0.0
      %2314 = vmatpush.msra.mxu0 0.0
      %2315 = vmatpush.msra.mxu0 0.0
      %2316 = vmatpush.msra.mxu0 0.0
      %2317 = vmatpush.msra.mxu0 0.0
      %2318 = vmatpush.msra.mxu0 0.0
      %2319 = vmatpush.msra.mxu0 0.0
      %2320 = vmatpush.msra.mxu0 0.0
      %2321 = vmatpush.msra.mxu0 0.0
      %2322 = vmatpush.msra.mxu0 0.0
      %2323 = vmatpush.msra.mxu0 0.0
      %2324 = vmatpush.msra.mxu0 0.0
      %2325 = vmatpush.msra.mxu0 0.0
      %2326 = vmatpush.msra.mxu0 0.0
      %2327 = vmatpush.msra.mxu0 %v2290
      %2328 = vmatmul.f32.gmra.mxu0 %v2284
      %v2329 = vpop.f32.mrf.mxu0
      %v2330 = vadd.f32 %v2281, %v2329
      %2331 = vdwg.mxu0
      %vm2332 = vcmp.gt.f32.partialorder %v2310, 20.0
      %vm2333 = vcmp.gt.f32.partialorder %v2330, 20.0
      %v2334 = vmin.f32 %v2310, 20.0
      %v2335 = vmin.f32 %v2330, 20.0
      %v2336 = vmul.f32 %v2334, 1.442695
      %v2337 = vpow.pop %v2336
      %v2338 = vmul.f32 %v2335, 1.442695
      %v2339 = vpow.pop %v2338
      %v2340 = vadd.f32 %v2337, 1.0
      %v2341 = vlog2.pop %v2340
      %v2342 = vmul.f32 %v2341, 0.6931472
      %v2343 = vmul.f32 -0.5, %v2337
      %v2344 = vadd.f32 %v2343, 1.0
      %v2345 = vmul.f32 %v2344, %v2337
      %v2346 = vand.u32 2147483647, %v2337
      %vm2347 = vcmp.lt.f32.partialorder %v2346, 0.0004427343
      %v2348 = vsel %vm2347, %v2345, %v2342
      %v2349 = vadd.f32 %v2339, 1.0
      %v2350 = vlog2.pop %v2349
      %v2351 = vmul.f32 %v2350, 0.6931472
      %v2352 = vmul.f32 -0.5, %v2339
      %v2353 = vadd.f32 %v2352, 1.0
      %v2354 = vmul.f32 %v2353, %v2339
      %v2355 = vand.u32 2147483647, %v2339
      %vm2356 = vcmp.lt.f32.partialorder %v2355, 0.0004427343
      %v2357 = vsel %vm2356, %v2354, %v2351
      %v2358 = vsel %vm2332, %v2310, %v2348
      %v2359 = vsel %vm2333, %v2330, %v2357
      %v2360 = vmul.f32 %v2358, %v2127
      %v2361 = vmul.f32 %v2359, %v2142
      %2363 = vset.pattern.permute.xlu0 0
      %2364 = vperm.xlu0 %2363, %v1949
      %v2365 = vpop.permute.xlu0 %2364
      %v2367 = vmul.f32 %v2365, %v2127
      %v2368 = vmul.f32 %v2365, %v2142
      %2370 = vset.pattern.permute.xlu0 0
      %2371 = vperm.xlu0 %2370, %v1948
      %v2372 = vpop.permute.xlu0 %2371
      %v2374 = vmul.f32 %v2358, %v2372
      %v2375 = vmul.f32 %v2359, %v2372
      %v2376 = vmul.f32 %v2374, 1.442695
      %v2377 = vpow.pop %v2376
      %v2378 = vmul.f32 %v2375, 1.442695
      %v2379 = vpow.pop %v2378
      %v2380 = vperm.slane %v2213, 0
      %v2381 = vperm.slane %v2233, 0
      %v2382 = vmul.f32 %v2360, %v2380
      %v2383 = vmul.f32 %v2361, %v2381
      %2384 = vrot.lane.b32.xlu0 %v2377, 1
      %v2385 = vpop.permute.xlu0 %2384
      %2386 = vrot.lane.b32.xlu0 %v2379, 1
      %v2387 = vpop.permute.xlu0 %2386
      %v2388 = vsel %vm1135, %v2385, %v2387
      %v2389 = vsel %vm1135, %v2387, %v2385
      %v2390 = vsel %vm1138, %v2389, 1.0
      %v2391 = vsel %vm1139, %v2388, 1.0
      %2392 = vrot.lane.b32.xlu0 %v2382, 1
      %v2393 = vpop.permute.xlu0 %2392
      %2394 = vrot.lane.b32.xlu0 %v2383, 1
      %v2395 = vpop.permute.xlu0 %2394
      %v2396 = vsel %vm1135, %v2393, %v2395
      %v2397 = vsel %vm1135, %v2395, %v2393
      %v2398 = vsel %vm1138, %v2397, 0.0
      %v2399 = vsel %vm1139, %v2396, 0.0
      %v2400 = vmul.f32 %v2377, %v2398
      %v2401 = vmul.f32 %v2379, %v2399
      %v2402 = vadd.f32 %v2400, %v2382
      %v2403 = vadd.f32 %v2401, %v2383
      %v2404 = vmul.f32 %v2377, %v2390
      %v2405 = vmul.f32 %v2379, %v2391
      %2406 = vrot.lane.b32.xlu0 %v2404, 2
      %v2407 = vpop.permute.xlu0 %2406
      %2408 = vrot.lane.b32.xlu0 %v2405, 2
      %v2409 = vpop.permute.xlu0 %2408
      %v2410 = vsel %vm1116, %v2407, %v2409
      %v2411 = vsel %vm1116, %v2409, %v2407
      %v2412 = vsel %vm1119, %v2411, 1.0
      %v2413 = vsel %vm1120, %v2410, 1.0
      %2414 = vrot.lane.b32.xlu0 %v2402, 2
      %v2415 = vpop.permute.xlu0 %2414
      %2416 = vrot.lane.b32.xlu0 %v2403, 2
      %v2417 = vpop.permute.xlu0 %2416
      %v2418 = vsel %vm1116, %v2415, %v2417
      %v2419 = vsel %vm1116, %v2417, %v2415
      %v2420 = vsel %vm1119, %v2419, 0.0
      %v2421 = vsel %vm1120, %v2418, 0.0
      %v2422 = vmul.f32 %v2404, %v2420
      %v2423 = vmul.f32 %v2405, %v2421
      %v2424 = vadd.f32 %v2422, %v2402
      %v2425 = vadd.f32 %v2423, %v2403
      %v2426 = vmul.f32 %v2404, %v2412
      %v2427 = vmul.f32 %v2405, %v2413
      %2428 = vrot.lane.b32.xlu0 %v2426, 4
      %v2429 = vpop.permute.xlu0 %2428
      %2430 = vrot.lane.b32.xlu0 %v2427, 4
      %v2431 = vpop.permute.xlu0 %2430
      %v2432 = vsel %vm1481, %v2429, %v2431
      %v2433 = vsel %vm1481, %v2431, %v2429
      %v2434 = vsel %vm1475, %v2433, 1.0
      %v2435 = vsel %vm1476, %v2432, 1.0
      %2436 = vrot.lane.b32.xlu0 %v2424, 4
      %v2437 = vpop.permute.xlu0 %2436
      %2438 = vrot.lane.b32.xlu0 %v2425, 4
      %v2439 = vpop.permute.xlu0 %2438
      %v2440 = vsel %vm1481, %v2437, %v2439
      %v2441 = vsel %vm1481, %v2439, %v2437
      %v2442 = vsel %vm1475, %v2441, 0.0
      %v2443 = vsel %vm1476, %v2440, 0.0
      %v2444 = vmul.f32 %v2426, %v2442
      %v2445 = vmul.f32 %v2427, %v2443
      %v2446 = vadd.f32 %v2444, %v2424
      %v2447 = vadd.f32 %v2445, %v2425
      %v2448 = vmul.f32 %v2426, %v2434
      %v2449 = vmul.f32 %v2427, %v2435
      %2450 = vrot.lane.b32.xlu0 %v2448, 8
      %v2451 = vpop.permute.xlu0 %2450
      %2452 = vrot.lane.b32.xlu0 %v2449, 8
      %v2453 = vpop.permute.xlu0 %2452
      %v2454 = vsel %vm1506, %v2451, %v2453
      %v2455 = vsel %vm1506, %v2453, %v2451
      %v2456 = vsel %vm1500, %v2455, 1.0
      %v2457 = vsel %vm1501, %v2454, 1.0
      %2458 = vrot.lane.b32.xlu0 %v2446, 8
      %v2459 = vpop.permute.xlu0 %2458
      %2460 = vrot.lane.b32.xlu0 %v2447, 8
      %v2461 = vpop.permute.xlu0 %2460
      %v2462 = vsel %vm1506, %v2459, %v2461
      %v2463 = vsel %vm1506, %v2461, %v2459
      %v2464 = vsel %vm1500, %v2463, 0.0
      %v2465 = vsel %vm1501, %v2462, 0.0
      %v2466 = vmul.f32 %v2448, %v2464
      %v2467 = vmul.f32 %v2449, %v2465
      %v2468 = vadd.f32 %v2466, %v2446
      %v2469 = vadd.f32 %v2467, %v2447
      %v2470 = vmul.f32 %v2448, %v2456
      %v2471 = vmul.f32 %v2449, %v2457
      %2472 = vrot.lane.b32.xlu0 %v2470, 16
      %v2473 = vpop.permute.xlu0 %2472
      %2474 = vrot.lane.b32.xlu0 %v2471, 16
      %v2475 = vpop.permute.xlu0 %2474
      %v2476 = vsel %vm1531, %v2473, %v2475
      %v2477 = vsel %vm1531, %v2475, %v2473
      %v2478 = vsel %vm1525, %v2477, 1.0
      %v2479 = vsel %vm1526, %v2476, 1.0
      %2480 = vrot.lane.b32.xlu0 %v2468, 16
      %v2481 = vpop.permute.xlu0 %2480
      %2482 = vrot.lane.b32.xlu0 %v2469, 16
      %v2483 = vpop.permute.xlu0 %2482
      %v2484 = vsel %vm1531, %v2481, %v2483
      %v2485 = vsel %vm1531, %v2483, %v2481
      %v2486 = vsel %vm1525, %v2485, 0.0
      %v2487 = vsel %vm1526, %v2484, 0.0
      %v2488 = vmul.f32 %v2470, %v2486
      %v2489 = vmul.f32 %v2471, %v2487
      %v2490 = vadd.f32 %v2488, %v2468
      %v2491 = vadd.f32 %v2489, %v2469
      %v2492 = vmul.f32 %v2470, %v2478
      %v2493 = vmul.f32 %v2471, %v2479
      %2494 = vrot.lane.b32.xlu0 %v2492, 32
      %v2495 = vpop.permute.xlu0 %2494
      %2496 = vrot.lane.b32.xlu0 %v2493, 32
      %v2497 = vpop.permute.xlu0 %2496
      %v2498 = vsel %vm1556, %v2495, %v2497
      %v2499 = vsel %vm1556, %v2497, %v2495
      %v2500 = vsel %vm1550, %v2499, 1.0
      %v2501 = vsel %vm1551, %v2498, 1.0
      %2502 = vrot.lane.b32.xlu0 %v2490, 32
      %v2503 = vpop.permute.xlu0 %2502
      %2504 = vrot.lane.b32.xlu0 %v2491, 32
      %v2505 = vpop.permute.xlu0 %2504
      %v2506 = vsel %vm1556, %v2503, %v2505
      %v2507 = vsel %vm1556, %v2505, %v2503
      %v2508 = vsel %vm1550, %v2507, 0.0
      %v2509 = vsel %vm1551, %v2506, 0.0
      %v2510 = vmul.f32 %v2492, %v2508
      %v2511 = vmul.f32 %v2493, %v2509
      %v2512 = vadd.f32 %v2510, %v2490
      %v2513 = vadd.f32 %v2511, %v2491
      %v2514 = vmul.f32 %v2492, %v2500
      %v2515 = vmul.f32 %v2493, %v2501
      %2516 = vrot.lane.b32.xlu0 %v2514, 64
      %v2517 = vpop.permute.xlu0 %2516
      %2518 = vrot.lane.b32.xlu0 %v2515, 64
      %v2519 = vpop.permute.xlu0 %2518
      %v2520 = vsel %vm1581, %v2517, %v2519
      %v2521 = vsel %vm1581, %v2519, %v2517
      %v2522 = vsel %vm1575, %v2521, 1.0
      %v2523 = vsel %vm1576, %v2520, 1.0
      %2524 = vrot.lane.b32.xlu0 %v2512, 64
      %v2525 = vpop.permute.xlu0 %2524
      %2526 = vrot.lane.b32.xlu0 %v2513, 64
      %v2527 = vpop.permute.xlu0 %2526
      %v2528 = vsel %vm1581, %v2525, %v2527
      %v2529 = vsel %vm1581, %v2527, %v2525
      %v2530 = vsel %vm1575, %v2529, 0.0
      %v2531 = vsel %vm1576, %v2528, 0.0
      %v2532 = vmul.f32 %v2514, %v2530
      %v2533 = vmul.f32 %v2515, %v2531
      %v2534 = vadd.f32 %v2532, %v2512
      %v2535 = vadd.f32 %v2533, %v2513
      %v2536 = vmul.f32 %v2514, %v2522
      %v2537 = vmul.f32 %v2515, %v2523
      %v2538 = vsel %vm1600, %v2535, 0.0
      %v2539 = vsel %vm1601, %v2534, 0.0
      %v2540 = vmul.f32 %v2536, %v2538
      %v2541 = vmul.f32 %v2537, %v2539
      %v2542 = vadd.f32 %v2540, %v2534
      %v2543 = vadd.f32 %v2541, %v2535
      %v2544 = vperm.slane %v2256, 0
      %v2545 = vperm.slane %v2276, 0
      %v2546 = vmul.f32 %v2544, %v2542
      %v2547 = vmul.f32 %v2545, %v2543
      %v2548 = vadd.f32 %v2367, %v2546
      %v2549 = vadd.f32 %v2368, %v2547
      %2550 = vset.pattern.permute.xlu0 1
      %2551 = vperm.xlu0 %2550, %v1948
      %v2552 = vpop.permute.xlu0 %2551
      %v2554 = vmul.f32 %v2358, %v2552
      %v2555 = vmul.f32 %v2359, %v2552
      %v2556 = vmul.f32 %v2554, 1.442695
      %v2557 = vpow.pop %v2556
      %v2558 = vmul.f32 %v2555, 1.442695
      %v2559 = vpow.pop %v2558
      %v2560 = vperm.slane %v2213, 1
      %v2561 = vperm.slane %v2233, 1
      %v2562 = vmul.f32 %v2360, %v2560
      %v2563 = vmul.f32 %v2361, %v2561
      %2564 = vrot.lane.b32.xlu0 %v2557, 1
      %v2565 = vpop.permute.xlu0 %2564
      %2566 = vrot.lane.b32.xlu0 %v2559, 1
      %v2567 = vpop.permute.xlu0 %2566
      %v2568 = vsel %vm1135, %v2565, %v2567
      %v2569 = vsel %vm1135, %v2567, %v2565
      %v2570 = vsel %vm1138, %v2569, 1.0
      %v2571 = vsel %vm1139, %v2568, 1.0
      %2572 = vrot.lane.b32.xlu0 %v2562, 1
      %v2573 = vpop.permute.xlu0 %2572
      %2574 = vrot.lane.b32.xlu0 %v2563, 1
      %v2575 = vpop.permute.xlu0 %2574
      %v2576 = vsel %vm1135, %v2573, %v2575
      %v2577 = vsel %vm1135, %v2575, %v2573
      %v2578 = vsel %vm1138, %v2577, 0.0
      %v2579 = vsel %vm1139, %v2576, 0.0
      %v2580 = vmul.f32 %v2557, %v2578
      %v2581 = vmul.f32 %v2559, %v2579
      %v2582 = vadd.f32 %v2580, %v2562
      %v2583 = vadd.f32 %v2581, %v2563
      %v2584 = vmul.f32 %v2557, %v2570
      %v2585 = vmul.f32 %v2559, %v2571
      %2586 = vrot.lane.b32.xlu0 %v2584, 2
      %v2587 = vpop.permute.xlu0 %2586
      %2588 = vrot.lane.b32.xlu0 %v2585, 2
      %v2589 = vpop.permute.xlu0 %2588
      %v2590 = vsel %vm1116, %v2587, %v2589
      %v2591 = vsel %vm1116, %v2589, %v2587
      %v2592 = vsel %vm1119, %v2591, 1.0
      %v2593 = vsel %vm1120, %v2590, 1.0
      %2594 = vrot.lane.b32.xlu0 %v2582, 2
      %v2595 = vpop.permute.xlu0 %2594
      %2596 = vrot.lane.b32.xlu0 %v2583, 2
      %v2597 = vpop.permute.xlu0 %2596
      %v2598 = vsel %vm1116, %v2595, %v2597
      %v2599 = vsel %vm1116, %v2597, %v2595
      %v2600 = vsel %vm1119, %v2599, 0.0
      %v2601 = vsel %vm1120, %v2598, 0.0
      %v2602 = vmul.f32 %v2584, %v2600
      %v2603 = vmul.f32 %v2585, %v2601
      %v2604 = vadd.f32 %v2602, %v2582
      %v2605 = vadd.f32 %v2603, %v2583
      %v2606 = vmul.f32 %v2584, %v2592
      %v2607 = vmul.f32 %v2585, %v2593
      %2608 = vrot.lane.b32.xlu0 %v2606, 4
      %v2609 = vpop.permute.xlu0 %2608
      %2610 = vrot.lane.b32.xlu0 %v2607, 4
      %v2611 = vpop.permute.xlu0 %2610
      %v2612 = vsel %vm1481, %v2609, %v2611
      %v2613 = vsel %vm1481, %v2611, %v2609
      %v2614 = vsel %vm1475, %v2613, 1.0
      %v2615 = vsel %vm1476, %v2612, 1.0
      %2616 = vrot.lane.b32.xlu0 %v2604, 4
      %v2617 = vpop.permute.xlu0 %2616
      %2618 = vrot.lane.b32.xlu0 %v2605, 4
      %v2619 = vpop.permute.xlu0 %2618
      %v2620 = vsel %vm1481, %v2617, %v2619
      %v2621 = vsel %vm1481, %v2619, %v2617
      %v2622 = vsel %vm1475, %v2621, 0.0
      %v2623 = vsel %vm1476, %v2620, 0.0
      %v2624 = vmul.f32 %v2606, %v2622
      %v2625 = vmul.f32 %v2607, %v2623
      %v2626 = vadd.f32 %v2624, %v2604
      %v2627 = vadd.f32 %v2625, %v2605
      %v2628 = vmul.f32 %v2606, %v2614
      %v2629 = vmul.f32 %v2607, %v2615
      %2630 = vrot.lane.b32.xlu0 %v2628, 8
      %v2631 = vpop.permute.xlu0 %2630
      %2632 = vrot.lane.b32.xlu0 %v2629, 8
      %v2633 = vpop.permute.xlu0 %2632
      %v2634 = vsel %vm1506, %v2631, %v2633
      %v2635 = vsel %vm1506, %v2633, %v2631
      %v2636 = vsel %vm1500, %v2635, 1.0
      %v2637 = vsel %vm1501, %v2634, 1.0
      %2638 = vrot.lane.b32.xlu0 %v2626, 8
      %v2639 = vpop.permute.xlu0 %2638
      %2640 = vrot.lane.b32.xlu0 %v2627, 8
      %v2641 = vpop.permute.xlu0 %2640
      %v2642 = vsel %vm1506, %v2639, %v2641
      %v2643 = vsel %vm1506, %v2641, %v2639
      %v2644 = vsel %vm1500, %v2643, 0.0
      %v2645 = vsel %vm1501, %v2642, 0.0
      %v2646 = vmul.f32 %v2628, %v2644
      %v2647 = vmul.f32 %v2629, %v2645
      %v2648 = vadd.f32 %v2646, %v2626
      %v2649 = vadd.f32 %v2647, %v2627
      %v2650 = vmul.f32 %v2628, %v2636
      %v2651 = vmul.f32 %v2629, %v2637
      %2652 = vrot.lane.b32.xlu0 %v2650, 16
      %v2653 = vpop.permute.xlu0 %2652
      %2654 = vrot.lane.b32.xlu0 %v2651, 16
      %v2655 = vpop.permute.xlu0 %2654
      %v2656 = vsel %vm1531, %v2653, %v2655
      %v2657 = vsel %vm1531, %v2655, %v2653
      %v2658 = vsel %vm1525, %v2657, 1.0
      %v2659 = vsel %vm1526, %v2656, 1.0
      %2660 = vrot.lane.b32.xlu0 %v2648, 16
      %v2661 = vpop.permute.xlu0 %2660
      %2662 = vrot.lane.b32.xlu0 %v2649, 16
      %v2663 = vpop.permute.xlu0 %2662
      %v2664 = vsel %vm1531, %v2661, %v2663
      %v2665 = vsel %vm1531, %v2663, %v2661
      %v2666 = vsel %vm1525, %v2665, 0.0
      %v2667 = vsel %vm1526, %v2664, 0.0
      %v2668 = vmul.f32 %v2650, %v2666
      %v2669 = vmul.f32 %v2651, %v2667
      %v2670 = vadd.f32 %v2668, %v2648
      %v2671 = vadd.f32 %v2669, %v2649
      %v2672 = vmul.f32 %v2650, %v2658
      %v2673 = vmul.f32 %v2651, %v2659
      %2674 = vrot.lane.b32.xlu0 %v2672, 32
      %v2675 = vpop.permute.xlu0 %2674
      %2676 = vrot.lane.b32.xlu0 %v2673, 32
      %v2677 = vpop.permute.xlu0 %2676
      %v2678 = vsel %vm1556, %v2675, %v2677
      %v2679 = vsel %vm1556, %v2677, %v2675
      %v2680 = vsel %vm1550, %v2679, 1.0
      %v2681 = vsel %vm1551, %v2678, 1.0
      %2682 = vrot.lane.b32.xlu0 %v2670, 32
      %v2683 = vpop.permute.xlu0 %2682
      %2684 = vrot.lane.b32.xlu0 %v2671, 32
      %v2685 = vpop.permute.xlu0 %2684
      %v2686 = vsel %vm1556, %v2683, %v2685
      %v2687 = vsel %vm1556, %v2685, %v2683
      %v2688 = vsel %vm1550, %v2687, 0.0
      %v2689 = vsel %vm1551, %v2686, 0.0
      %v2690 = vmul.f32 %v2672, %v2688
      %v2691 = vmul.f32 %v2673, %v2689
      %v2692 = vadd.f32 %v2690, %v2670
      %v2693 = vadd.f32 %v2691, %v2671
      %v2694 = vmul.f32 %v2672, %v2680
      %v2695 = vmul.f32 %v2673, %v2681
      %2696 = vrot.lane.b32.xlu0 %v2694, 64
      %v2697 = vpop.permute.xlu0 %2696
      %2698 = vrot.lane.b32.xlu0 %v2695, 64
      %v2699 = vpop.permute.xlu0 %2698
      %v2700 = vsel %vm1581, %v2697, %v2699
      %v2701 = vsel %vm1581, %v2699, %v2697
      %v2702 = vsel %vm1575, %v2701, 1.0
      %v2703 = vsel %vm1576, %v2700, 1.0
      %2704 = vrot.lane.b32.xlu0 %v2692, 64
      %v2705 = vpop.permute.xlu0 %2704
      %2706 = vrot.lane.b32.xlu0 %v2693, 64
      %v2707 = vpop.permute.xlu0 %2706
      %v2708 = vsel %vm1581, %v2705, %v2707
      %v2709 = vsel %vm1581, %v2707, %v2705
      %v2710 = vsel %vm1575, %v2709, 0.0
      %v2711 = vsel %vm1576, %v2708, 0.0
      %v2712 = vmul.f32 %v2694, %v2710
      %v2713 = vmul.f32 %v2695, %v2711
      %v2714 = vadd.f32 %v2712, %v2692
      %v2715 = vadd.f32 %v2713, %v2693
      %v2716 = vmul.f32 %v2694, %v2702
      %v2717 = vmul.f32 %v2695, %v2703
      %v2718 = vsel %vm1600, %v2715, 0.0
      %v2719 = vsel %vm1601, %v2714, 0.0
      %v2720 = vmul.f32 %v2716, %v2718
      %v2721 = vmul.f32 %v2717, %v2719
      %v2722 = vadd.f32 %v2720, %v2714
      %v2723 = vadd.f32 %v2721, %v2715
      %v2724 = vperm.slane %v2256, 1
      %v2725 = vperm.slane %v2276, 1
      %v2726 = vmul.f32 %v2724, %v2722
      %v2727 = vmul.f32 %v2725, %v2723
      %v2728 = vadd.f32 %v2548, %v2726
      %v2729 = vadd.f32 %v2549, %v2727
      %v2730 = vsub.f32 0.0, %v2021
      %v2731 = vsub.f32 0.0, %v2041
      %v2732 = vmul.f32 %v2730, 1.442695
      %v2733 = vpow.pop %v2732
      %v2734 = vmul.f32 %v2731, 1.442695
      %v2735 = vpow.pop %v2734
      %v2736 = vadd.f32 %v2733, 1.0
      %v2737 = vadd.f32 %v2735, 1.0
      %v2738 = vrcp.pop %v2736
      %v2739 = vmul.f32 %v2736, %v2738
      %v2740 = vsub.f32 1.0, %v2739
      %v2741 = vmul.f32 %v2738, %v2740
      %v2742 = vadd.f32 %v2738, %v2741
      %vm2743 = vweird.f32 %v2736
      %vm2744 = vweird.f32 %v2738
      %vm2745 = vmor %vm2743, %vm2744
      %v2746 = vsel %vm2745, %v2738, %v2742
      %v2747 = vand.u32 2147483647, %v2736
      %vm2748 = vcmp.eq.f32.partialorder %v2747, 8.507059e+37
      %v2749 = vand.u32 %v2736, 2147483648
      %v2750 = vor.u32 1.1754944e-38, %v2749
      %v2751 = vsel %vm2748, %v2750, %v2746
      %v2752 = vmul.f32 %v2021, %v2751
      %v2753 = vrcp.pop %v2737
      %v2754 = vmul.f32 %v2737, %v2753
      %v2755 = vsub.f32 1.0, %v2754
      %v2756 = vmul.f32 %v2753, %v2755
      %v2757 = vadd.f32 %v2753, %v2756
      %vm2758 = vweird.f32 %v2737
      %vm2759 = vweird.f32 %v2753
      %vm2760 = vmor %vm2758, %vm2759
      %v2761 = vsel %vm2760, %v2753, %v2757
      %v2762 = vand.u32 2147483647, %v2737
      %vm2763 = vcmp.eq.f32.partialorder %v2762, 8.507059e+37
      %v2764 = vand.u32 %v2737, 2147483648
      %v2765 = vor.u32 1.1754944e-38, %v2764
      %v2766 = vsel %vm2763, %v2765, %v2761
      %v2767 = vmul.f32 %v2041, %v2766
      %v2768 = vmul.f32 %v2728, %v2752
      %v2769 = vmul.f32 %v2729, %v2767
      %v2771 = vsel %vm915, %v1950, 0
      %v2774 = vsel %vm919, %v2768, 0
      %v2777 = vsel %vm919, %v2769, 0
      %2779 = vmatpush.msra.mxu0 0.0
      %2780 = vmatpush.msra.mxu0 0.0
      %2781 = vmatpush.msra.mxu0 0.0
      %2782 = vmatpush.msra.mxu0 0.0
      %2783 = vmatpush.msra.mxu0 0.0
      %2784 = vmatpush.msra.mxu0 0.0
      %2785 = vmatpush.msra.mxu0 0.0
      %2786 = vmatpush.msra.mxu0 0.0
      %2787 = vmatpush.msra.mxu0 0.0
      %2788 = vmatpush.msra.mxu0 0.0
      %2789 = vmatpush.msra.mxu0 0.0
      %2790 = vmatpush.msra.mxu0 0.0
      %2791 = vmatpush.msra.mxu0 0.0
      %2792 = vmatpush.msra.mxu0 0.0
      %2793 = vmatpush.msra.mxu0 0.0
      %2794 = vmatpush.msra.mxu0 %v2774
      %2795 = vmatmul.f32.gmra.mxu0 %v2771
      %v2796 = vpop.f32.mrf.mxu0
      %v2797 = vadd.f32 0.0, %v2796
      %2798 = vdwg.mxu0
      %2799 = vmatpush.msra.mxu0 0.0
      %2800 = vmatpush.msra.mxu0 0.0
      %2801 = vmatpush.msra.mxu0 0.0
      %2802 = vmatpush.msra.mxu0 0.0
      %2803 = vmatpush.msra.mxu0 0.0
      %2804 = vmatpush.msra.mxu0 0.0
      %2805 = vmatpush.msra.mxu0 0.0
      %2806 = vmatpush.msra.mxu0 0.0
      %2807 = vmatpush.msra.mxu0 0.0
      %2808 = vmatpush.msra.mxu0 0.0
      %2809 = vmatpush.msra.mxu0 0.0
      %2810 = vmatpush.msra.mxu0 0.0
      %2811 = vmatpush.msra.mxu0 0.0
      %2812 = vmatpush.msra.mxu0 0.0
      %2813 = vmatpush.msra.mxu0 0.0
      %2814 = vmatpush.msra.mxu0 %v2777
      %2815 = vmatmul.f32.gmra.mxu0 %v2771
      %v2816 = vpop.f32.mrf.mxu0
      %v2817 = vadd.f32 0.0, %v2816
      %2818 = vdwg.mxu0
      %v2819 = vadd.f32 %v942, %v2797
      %v2820 = vadd.f32 %v962, %v2817
      %v2823 = vrot.slane %v2820, 4
      %v2824 = vsel %vm919, %v2819, %v2823
      %2826 = vst [vmem:[%s902] sm:$0xff] %v2824
      %p2827 = scmp.lt.s32.totalorder %s70, 1
      %s2828 = scalar_select %p2827, %s70, 1
      %s2829 = smul.addr %s2828, 2
      %s2830 = smul.addr %s2829, 4
      %s2831 = scalar_lea.vmem %s59, %s2830
      // Predicated region
      $region137: #{branch12_forward.1} parent=135 // pred_check
        %p2832 = pneg %p702
      $region138: #{branch12_forward.1} parent=135 // pred_check_branch
        %2834 = sbr.rel (%p2832) target = $region140
      $region139: #{branch12_forward.1} parent=135 // pred_region
        _
      $region140: #{branch12_forward.1} parent=135 // pred_fallthru
        _
    $region136: #{branch12_forward.1} parent=5 // pred_fallthru
      _
    %p2835 = scmp.le.s32.totalorder 2, %s65
    // Predicated region
    $region141: #{branch12_forward.1} parent=5 // pred_check
      %p2836 = pneg %p2835
    $region142: #{branch12_forward.1} parent=5 // pred_check_branch
      %2838 = sbr.rel (%p2836) target = $region144
    $region143: #{branch12_forward.1} parent=5 // pred_region
      %s2839 = ssub.s32 %s65, 2
      // Predicated region
      $region145: #{branch12_forward.1} parent=143 // pred_check
        %p2840 = pneg %p708
      $region146: #{branch12_forward.1} parent=143 // pred_check_branch
        %2842 = sbr.rel (%p2840) target = $region148
      $region147: #{branch12_forward.1} parent=143 // pred_region
        %p2843 = scmp.lt.s32.totalorder %s71, 1
        %s2844 = scalar_select %p2843, %s71, 1
        %s2845 = smul.addr %s2844, 2
        %s2846 = smul.addr %s2845, 4
        %s2847 = scalar_lea.vmem %s59, %s2846
      $region148: #{branch12_forward.1} parent=143 // pred_fallthru
        _
    $region144: #{branch12_forward.1} parent=5 // pred_fallthru
      _
  $region6: #{branch12_forward.1} parent=0 // loop_footer
    %s69 = sadd.s32 1, %s65
  $region7: #{branch12_forward.1} parent=0 // loop_footer_branch
    %64 = sbr.rel target = $region3
  $region8: #{branch12_forward.1} parent=0 // loop_exit
    _

</llo_original>
